<compile_context>
chip_gen: v7x
topology: tpu7x:2x2x1
jax: 0.10.0
libtpu: 0.0.40
codegen_flags: <defaults>
</compile_context>

<pallas_src>
import functools
import math

import jax
import jax.numpy as jnp
from jax.experimental import pallas as pl
from jax.experimental.pallas import tpu as pltpu


# -----------------------------------------------------------------------------
# Model config
# -----------------------------------------------------------------------------
VOCAB = 100
MAX_POS = 34
PAD_IDX = 1          # RoBERTa padding_idx
HIDDEN = 32
N_HEADS = 4
HEAD_DIM = HIDDEN // N_HEADS
INTERMEDIATE = 64
N_LAYERS = 2
NUM_LABELS = 2
LN_EPS = 1e-5


# -----------------------------------------------------------------------------
# Fused forward kernel
# -----------------------------------------------------------------------------
def _fused_forward_kernel(
    x_ref, mask_ref,
    qkvw_ref, qkvb_ref, ow_ref,
    f1w_ref, f1b_ref, f2w_ref, v32_ref,
    cdw_ref, opw_ref, misc_ref,
    logits_ref, emb_ref,
    *, batch, seq, hidden, n_heads, head_dim, n_layers, num_labels, eps):

    def layer_norm(x, g, b):
        mean = jnp.mean(x, axis=-1, keepdims=True)
        var = jnp.mean((x - mean) ** 2, axis=-1, keepdims=True)
        return (x - mean) * jax.lax.rsqrt(var + eps) * g + b

    misc = misc_ref[...]                                       # [4, H]  (emb_g, emb_b, cls_b, opb)

    # --- embeddings LayerNorm ---
    h = layer_norm(x_ref[...].astype(jnp.float32), misc[0:1, :], misc[1:2, :])      # [B*S, H]

    # Hoist the additive-mask broadcast out of the per-layer / per-head loops
    # (JAX does not CSE broadcast_in_dim).
    mask_b = jnp.broadcast_to(mask_ref[...].astype(jnp.float32), (batch, seq, seq))

    for l in range(n_layers):
        vecs = v32_ref[l]                                       # [6, H]
        o_b, ln1_g, ln1_b = vecs[0:1, :], vecs[1:2, :], vecs[2:3, :]
        fc2_b, ln2_g, ln2_b = vecs[3:4, :], vecs[4:5, :], vecs[5:6, :]

        # ---- fused Q/K/V projection: a single MXU push per layer ----
        # (softmax scale already folded into the Q columns/bias host-side)
        qkv = jnp.dot(h, qkvw_ref[l],
                      preferred_element_type=jnp.float32) + qkvb_ref[l]             # [B*S, 3H]

        # ---- multi-head attention (batch dim batched via einsum, heads unrolled) ----
        ctx_heads = []
        for hh in range(n_heads):
            q3 = qkv[:, hh * head_dim:(hh + 1) * head_dim].reshape(batch, seq, head_dim)
            k3 = qkv[:, hidden + hh * head_dim:
                        hidden + (hh + 1) * head_dim].reshape(batch, seq, head_dim)
            v3 = qkv[:, 2 * hidden + hh * head_dim:
                        2 * hidden + (hh + 1) * head_dim].reshape(batch, seq, head_dim)

            s = jnp.einsum("bqd,bkd->bqk", q3, k3,
                           preferred_element_type=jnp.float32) + mask_b
            s = s - jnp.max(s, axis=-1, keepdims=True)
            p = jnp.exp(s)
            p = p * pl.reciprocal(jnp.sum(p, axis=-1, keepdims=True), approx=True)
            ctx = jnp.einsum("bqk,bkd->bqd", p, v3,
                             preferred_element_type=jnp.float32)
            ctx_heads.append(ctx.reshape(batch * seq, head_dim))

        # concat heads (lane dim) -> single output-projection dot per layer
        ctx_all = jnp.concatenate(ctx_heads, axis=-1)                               # [B*S, H]
        attn_out = jnp.dot(ctx_all, ow_ref[l],
                           preferred_element_type=jnp.float32) + o_b

        h1 = layer_norm(attn_out + h, ln1_g, ln1_b)

        # ---- feed-forward ----
        ff = jnp.dot(h1, f1w_ref[l], preferred_element_type=jnp.float32) + f1b_ref[l]
        # TODO(synk): HF RoBERTa uses exact erf-GELU; tanh-approx used for Mosaic-safe lowering.
        ff = jax.nn.gelu(ff, approximate=True)
        ff = jnp.dot(ff, f2w_ref[l], preferred_element_type=jnp.float32) + fc2_b
        h = layer_norm(ff + h1, ln2_g, ln2_b)

    # ---- classification head on the CLS rows only (gathered before the head) ----
    cls = h.reshape(batch, seq, hidden)[:, 0:1, :].reshape(batch, hidden)            # [B, H]
    emb = jnp.tanh(jnp.dot(cls, cdw_ref[...],
                           preferred_element_type=jnp.float32) + misc[2:3, :])       # [B, H]
    logits = jnp.dot(emb, opw_ref[...],
                     preferred_element_type=jnp.float32) + misc[3:4, 0:num_labels]   # [B, L]

    emb_ref[...] = emb.astype(emb_ref.dtype)            # full-block stores (no per-row loop)
    logits_ref[...] = logits.astype(logits_ref.dtype)


def _full_spec(shape):
    ndim = len(shape)
    return pl.BlockSpec(tuple(shape), lambda i, _n=ndim: (0,) * _n)


def fused_forward(x2d, add_mask, params):
    """Run the full encoder + classification head in one pallas_call.

    x2d: [B*S, H] summed embeddings (pre-LayerNorm), f32.
    add_mask: [B, 1, S] additive attention mask (0 attended / -1e9 padded).
    Returns (logits [B, NUM_LABELS], embedding [B, H]).
    """
    B = add_mask.shape[0]
    S = add_mask.shape[2]
    inputs = [
        x2d, add_mask,
        params["qkv_w"], params["qkv_b"], params["o_w"],
        params["fc1_w"], params["fc1_b"], params["fc2_w"], params["vec32"],
        params["cls_dense_w"], params["out_proj_w"], params["misc"],
    ]
    kernel = functools.partial(
        _fused_forward_kernel,
        batch=B, seq=S, hidden=HIDDEN, n_heads=N_HEADS, head_dim=HEAD_DIM,
        n_layers=N_LAYERS, num_labels=NUM_LABELS, eps=LN_EPS)
    logits, embedding = pl.pallas_call(
        kernel,
        out_shape=(jax.ShapeDtypeStruct((B, NUM_LABELS), jnp.float32),
                   jax.ShapeDtypeStruct((B, HIDDEN), jnp.float32)),
        grid=(1,),
        in_specs=[_full_spec(a.shape) for a in inputs],
        out_specs=(_full_spec((B, NUM_LABELS)), _full_spec((B, HIDDEN))),
        compiler_params=pltpu.CompilerParams(dimension_semantics=("arbitrary",)),
    )(*inputs)
    return logits, embedding


# -----------------------------------------------------------------------------
# Parameter init (deterministic) + host-side packing into the kernel layout
# -----------------------------------------------------------------------------
def _pack_params(raw):
    """Pack per-layer weights into stacked arrays, fuse Q|K|V columns, fold the softmax
    scale into Q, and gather all tiny vectors into two stacked operands."""
    scale = 1.0 / math.sqrt(HEAD_DIM)
    qkv_w, qkv_b, o_w, fc1_w, fc1_b, fc2_w, vec32 = [], [], [], [], [], [], []
    for p in raw["layers"]:
        qkv_w.append(jnp.concatenate([p["q_w"] * scale, p["k_w"], p["v_w"]], axis=1))   # [H, 3H]
        qkv_b.append(jnp.concatenate([p["q_b"] * scale, p["k_b"], p["v_b"]]
                                     ).reshape(1, 3 * HIDDEN))                           # [1, 3H]
        o_w.append(p["o_w"])                                                             # [H, H]
        fc1_w.append(p["fc1_w"])                                                         # [H, I]
        fc1_b.append(p["fc1_b"].reshape(1, INTERMEDIATE))                                # [1, I]
        fc2_w.append(p["fc2_w"])                                                         # [I, H]
        vec32.append(jnp.stack([p["o_b"], p["ln1_g"], p["ln1_b"],
                                p["fc2_b"], p["ln2_g"], p["ln2_b"]]))                    # [6, H]

    misc = jnp.stack([
        raw["emb_ln_g"], raw["emb_ln_b"], raw["cls_dense_b"],
        jnp.pad(raw["out_proj_b"], (0, HIDDEN - NUM_LABELS)),
    ])                                                                                   # [4, H]

    packed = {
        "word_emb": raw["word_emb"], "pos_emb": raw["pos_emb"], "tok_emb": raw["tok_emb"],
        "qkv_w": jnp.stack(qkv_w), "qkv_b": jnp.stack(qkv_b), "o_w": jnp.stack(o_w),
        "fc1_w": jnp.stack(fc1_w), "fc1_b": jnp.stack(fc1_b), "fc2_w": jnp.stack(fc2_w),
        "vec32": jnp.stack(vec32),
        "cls_dense_w": raw["cls_dense_w"], "out_proj_w": raw["out_proj_w"],
        "misc": misc,
    }
    return packed


def init_params(key):
    std = 0.02
    keys = iter(jax.random.split(key, 64))

    def nrm(shape):
        return (std * jax.random.normal(next(keys), shape)).astype(jnp.float32)

    layers = []
    for _ in range(N_LAYERS):
        layers.append({
            "q_w": nrm((HIDDEN, HIDDEN)), "q_b": jnp.zeros((HIDDEN,), jnp.float32),
            "k_w": nrm((HIDDEN, HIDDEN)), "k_b": jnp.zeros((HIDDEN,), jnp.float32),
            "v_w": nrm((HIDDEN, HIDDEN)), "v_b": jnp.zeros((HIDDEN,), jnp.float32),
            "o_w": nrm((HIDDEN, HIDDEN)), "o_b": jnp.zeros((HIDDEN,), jnp.float32),
            "ln1_g": jnp.ones((HIDDEN,), jnp.float32),
            "ln1_b": jnp.zeros((HIDDEN,), jnp.float32),
            "fc1_w": nrm((HIDDEN, INTERMEDIATE)),
            "fc1_b": jnp.zeros((INTERMEDIATE,), jnp.float32),
            "fc2_w": nrm((INTERMEDIATE, HIDDEN)),
            "fc2_b": jnp.zeros((HIDDEN,), jnp.float32),
            "ln2_g": jnp.ones((HIDDEN,), jnp.float32),
            "ln2_b": jnp.zeros((HIDDEN,), jnp.float32),
        })

    raw = {
        "layers": layers,
        "word_emb": nrm((VOCAB, HIDDEN)),
        "pos_emb": nrm((MAX_POS, HIDDEN)),
        "tok_emb": nrm((2, HIDDEN)),
        "emb_ln_g": jnp.ones((HIDDEN,), jnp.float32),
        "emb_ln_b": jnp.zeros((HIDDEN,), jnp.float32),
        # RobertaClassificationHead
        "cls_dense_w": nrm((HIDDEN, HIDDEN)),
        "cls_dense_b": jnp.zeros((HIDDEN,), jnp.float32),
        "out_proj_w": nrm((HIDDEN, NUM_LABELS)),
        "out_proj_b": jnp.zeros((NUM_LABELS,), jnp.float32),
    }
    return _pack_params(raw)


# -----------------------------------------------------------------------------
# Forward pass (matches BaseModel.forward -> RobertaForClassification.forward)
# -----------------------------------------------------------------------------
def base_model_forward(params, input_ids, attention_mask,
                       output_hidden_states=True, output_attentions=False):
    B, S = input_ids.shape

    # --- RobertaEmbeddings (gathers / position-id cumsum are plain-JAX glue) ---
    not_pad = (input_ids != PAD_IDX).astype(jnp.int32)
    position_ids = jnp.cumsum(not_pad, axis=1) * not_pad + PAD_IDX
    x = (params["word_emb"][input_ids]
         + params["pos_emb"][position_ids]
         + params["tok_emb"][jnp.zeros_like(input_ids)])
    x2d = x.reshape(B * S, HIDDEN).astype(jnp.float32)

    # additive attention mask: 0 where attended, -1e9 where padded
    add_mask = ((1.0 - attention_mask.astype(jnp.float32)) * -1e9).reshape(B, 1, S)

    # --- fused encoder (emb LN + all layers) + classification head ---
    logits, embedding = fused_forward(x2d, add_mask, params)

    output = {"logits": logits}
    if output_attentions:
        pass  # TODO(synk): per-layer attention probabilities are not materialized by the fused kernel
    if output_hidden_states:
        output["hidden_state"] = embedding
    return output


# -----------------------------------------------------------------------------
if __name__ == "__main__":
    params = init_params(jax.random.PRNGKey(42))

    B, S = 2, 8
    k_ids, _ = jax.random.split(jax.random.PRNGKey(0))
    input_ids = jax.random.randint(k_ids, (B, S), 3, VOCAB, dtype=jnp.int32)
    # add some padding to batch element 1 to exercise the attention mask
    input_ids = input_ids.at[1, -2:].set(PAD_IDX)
    attention_mask = (input_ids != PAD_IDX).astype(jnp.int32)

    fwd = jax.jit(base_model_forward)
    out = fwd(params, input_ids, attention_mask)
    logits = jax.block_until_ready(out["logits"])
    hidden = jax.block_until_ready(out["hidden_state"])

    assert logits.shape == (B, NUM_LABELS)
    assert hidden.shape == (B, HIDDEN)
    assert bool(jnp.all(jnp.isfinite(logits))) and bool(jnp.all(jnp.isfinite(hidden)))
    print("KERNEL_OK")
</pallas_src>

<mosaic_0001>
module attributes {stable_mosaic.version = 11 : i64} {
  func.func @_fused_forward_kernel(%arg0: i32, %arg1: memref<16x32xf32, #tpu.memory_space<vmem>>, %arg2: memref<2x1x8xf32, #tpu.memory_space<vmem>>, %arg3: memref<2x32x96xf32, #tpu.memory_space<vmem>>, %arg4: memref<2x1x96xf32, #tpu.memory_space<vmem>>, %arg5: memref<2x32x32xf32, #tpu.memory_space<vmem>>, %arg6: memref<2x32x64xf32, #tpu.memory_space<vmem>>, %arg7: memref<2x1x64xf32, #tpu.memory_space<vmem>>, %arg8: memref<2x64x32xf32, #tpu.memory_space<vmem>>, %arg9: memref<2x6x32xf32, #tpu.memory_space<vmem>>, %arg10: memref<32x32xf32, #tpu.memory_space<vmem>>, %arg11: memref<32x2xf32, #tpu.memory_space<vmem>>, %arg12: memref<4x32xf32, #tpu.memory_space<vmem>>, %arg13: memref<2x2xf32, #tpu.memory_space<vmem>>, %arg14: memref<2x32xf32, #tpu.memory_space<vmem>>) attributes {dimension_semantics = [#tpu.dimension_semantics<arbitrary>], iteration_bounds = array<i64: 1>, scalar_prefetch = 0 : i64, scratch_operands = 0 : i64, tpu.core_type = #tpu.core_type<tc>, window_params = [{pipeline_mode = #tpu.pipeline_mode<synchronous>, transform_indices = @transform_0, window_bounds = array<i64: 16, 32>}, {pipeline_mode = #tpu.pipeline_mode<synchronous>, transform_indices = @transform_1, window_bounds = array<i64: 2, 1, 8>}, {pipeline_mode = #tpu.pipeline_mode<synchronous>, transform_indices = @transform_2, window_bounds = array<i64: 2, 32, 96>}, {pipeline_mode = #tpu.pipeline_mode<synchronous>, transform_indices = @transform_3, window_bounds = array<i64: 2, 1, 96>}, {pipeline_mode = #tpu.pipeline_mode<synchronous>, transform_indices = @transform_4, window_bounds = array<i64: 2, 32, 32>}, {pipeline_mode = #tpu.pipeline_mode<synchronous>, transform_indices = @transform_5, window_bounds = array<i64: 2, 32, 64>}, {pipeline_mode = #tpu.pipeline_mode<synchronous>, transform_indices = @transform_6, window_bounds = array<i64: 2, 1, 64>}, {pipeline_mode = #tpu.pipeline_mode<synchronous>, transform_indices = @transform_7, window_bounds = array<i64: 2, 64, 32>}, {pipeline_mode = #tpu.pipeline_mode<synchronous>, transform_indices = @transform_8, window_bounds = array<i64: 2, 6, 32>}, {pipeline_mode = #tpu.pipeline_mode<synchronous>, transform_indices = @transform_9, window_bounds = array<i64: 32, 32>}, {pipeline_mode = #tpu.pipeline_mode<synchronous>, transform_indices = @transform_10, window_bounds = array<i64: 32, 2>}, {pipeline_mode = #tpu.pipeline_mode<synchronous>, transform_indices = @transform_11, window_bounds = array<i64: 4, 32>}, {pipeline_mode = #tpu.pipeline_mode<synchronous>, transform_indices = @transform_12, window_bounds = array<i64: 2, 2>}, {pipeline_mode = #tpu.pipeline_mode<synchronous>, transform_indices = @transform_13, window_bounds = array<i64: 2, 32>}]} {
    %c0 = arith.constant 0 : index
    %c0_0 = arith.constant 0 : index
    %0 = vector.load %arg12[%c0, %c0_0] : memref<4x32xf32, #tpu.memory_space<vmem>>, vector<4x32xf32>
    %c0_1 = arith.constant 0 : index
    %c0_2 = arith.constant 0 : index
    %1 = vector.load %arg1[%c0_1, %c0_2] : memref<16x32xf32, #tpu.memory_space<vmem>>, vector<16x32xf32>
    %2 = vector.extract_strided_slice %0 {offsets = [0, 0], sizes = [1, 32], strides = [1, 1]} : vector<4x32xf32> to vector<1x32xf32>
    %3 = vector.extract_strided_slice %0 {offsets = [1, 0], sizes = [1, 32], strides = [1, 1]} : vector<4x32xf32> to vector<1x32xf32>
    %cst = arith.constant dense<0.000000e+00> : vector<16xf32>
    %4 = vector.multi_reduction <add>, %1, %cst [1] : vector<16x32xf32> to vector<16xf32>
    %5 = vector.shape_cast %4 : vector<16xf32> to vector<16x1xf32>
    %cst_3 = arith.constant 3.200000e+01 : f32
    %6 = vector.broadcast %cst_3 : f32 to vector<16x1xf32>
    %7 = arith.divf %5, %6 : vector<16x1xf32>
    %8 = vector.broadcast %7 : vector<16x1xf32> to vector<16x32xf32>
    %9 = arith.subf %1, %8 : vector<16x32xf32>
    %10 = arith.mulf %9, %9 : vector<16x32xf32>
    %cst_4 = arith.constant dense<0.000000e+00> : vector<16xf32>
    %11 = vector.multi_reduction <add>, %10, %cst_4 [1] : vector<16x32xf32> to vector<16xf32>
    %12 = vector.shape_cast %11 : vector<16xf32> to vector<16x1xf32>
    %cst_5 = arith.constant 3.200000e+01 : f32
    %13 = vector.broadcast %cst_5 : f32 to vector<16x1xf32>
    %14 = arith.divf %12, %13 : vector<16x1xf32>
    %15 = vector.broadcast %7 : vector<16x1xf32> to vector<16x32xf32>
    %16 = arith.subf %1, %15 : vector<16x32xf32>
    %cst_6 = arith.constant 9.99999974E-6 : f32
    %17 = vector.broadcast %cst_6 : f32 to vector<16x1xf32>
    %18 = arith.addf %14, %17 : vector<16x1xf32>
    %19 = math.rsqrt %18 : vector<16x1xf32>
    %20 = vector.broadcast %19 : vector<16x1xf32> to vector<16x32xf32>
    %21 = arith.mulf %16, %20 : vector<16x32xf32>
    %22 = vector.broadcast %2 : vector<1x32xf32> to vector<16x32xf32>
    %23 = arith.mulf %21, %22 : vector<16x32xf32>
    %24 = vector.broadcast %3 : vector<1x32xf32> to vector<16x32xf32>
    %25 = arith.addf %23, %24 : vector<16x32xf32>
    %c0_7 = arith.constant 0 : index
    %c0_8 = arith.constant 0 : index
    %c0_9 = arith.constant 0 : index
    %26 = vector.load %arg2[%c0_7, %c0_8, %c0_9] : memref<2x1x8xf32, #tpu.memory_space<vmem>>, vector<2x1x8xf32>
    %27 = vector.shape_cast %26 : vector<2x1x8xf32> to vector<2x1x8xf32>
    %28 = vector.broadcast %27 : vector<2x1x8xf32> to vector<2x8x8xf32>
    %c0_10 = arith.constant 0 : index
    %c0_11 = arith.constant 0 : index
    %c0_12 = arith.constant 0 : index
    %29 = vector.load %arg9[%c0_10, %c0_11, %c0_12] : memref<2x6x32xf32, #tpu.memory_space<vmem>>, vector<1x6x32xf32>
    %30 = vector.shape_cast %29 : vector<1x6x32xf32> to vector<6x32xf32>
    %31 = vector.extract_strided_slice %30 {offsets = [0, 0], sizes = [1, 32], strides = [1, 1]} : vector<6x32xf32> to vector<1x32xf32>
    %32 = vector.extract_strided_slice %30 {offsets = [1, 0], sizes = [1, 32], strides = [1, 1]} : vector<6x32xf32> to vector<1x32xf32>
    %33 = vector.extract_strided_slice %30 {offsets = [2, 0], sizes = [1, 32], strides = [1, 1]} : vector<6x32xf32> to vector<1x32xf32>
    %34 = vector.extract_strided_slice %30 {offsets = [3, 0], sizes = [1, 32], strides = [1, 1]} : vector<6x32xf32> to vector<1x32xf32>
    %35 = vector.extract_strided_slice %30 {offsets = [4, 0], sizes = [1, 32], strides = [1, 1]} : vector<6x32xf32> to vector<1x32xf32>
    %36 = vector.extract_strided_slice %30 {offsets = [5, 0], sizes = [1, 32], strides = [1, 1]} : vector<6x32xf32> to vector<1x32xf32>
    %c0_13 = arith.constant 0 : index
    %c0_14 = arith.constant 0 : index
    %c0_15 = arith.constant 0 : index
    %37 = vector.load %arg3[%c0_13, %c0_14, %c0_15] : memref<2x32x96xf32, #tpu.memory_space<vmem>>, vector<1x32x96xf32>
    %38 = vector.shape_cast %37 : vector<1x32x96xf32> to vector<32x96xf32>
    %cst_16 = arith.constant dense<0.000000e+00> : vector<16x96xf32>
    %39 = tpu.matmul %25, %38, %cst_16 {dimension_numbers = #tpu.dot_dimension_numbers<[1], [0], [0], [1], [0, 0, 1, 1], [], []>} : vector<16x32xf32>, vector<32x96xf32>, vector<16x96xf32> -> vector<16x96xf32>
    %c0_17 = arith.constant 0 : index
    %c0_18 = arith.constant 0 : index
    %c0_19 = arith.constant 0 : index
    %40 = vector.load %arg4[%c0_17, %c0_18, %c0_19] : memref<2x1x96xf32, #tpu.memory_space<vmem>>, vector<1x1x96xf32>
    %41 = vector.shape_cast %40 : vector<1x1x96xf32> to vector<1x96xf32>
    %42 = vector.broadcast %41 : vector<1x96xf32> to vector<16x96xf32>
    %43 = arith.addf %39, %42 : vector<16x96xf32>
    %44 = vector.extract_strided_slice %43 {offsets = [0, 0], sizes = [16, 8], strides = [1, 1]} : vector<16x96xf32> to vector<16x8xf32>
    %45 = vector.shape_cast %44 : vector<16x8xf32> to vector<2x8x8xf32>
    %46 = vector.extract_strided_slice %43 {offsets = [0, 32], sizes = [16, 8], strides = [1, 1]} : vector<16x96xf32> to vector<16x8xf32>
    %47 = vector.shape_cast %46 : vector<16x8xf32> to vector<2x8x8xf32>
    %48 = vector.extract_strided_slice %43 {offsets = [0, 64], sizes = [16, 8], strides = [1, 1]} : vector<16x96xf32> to vector<16x8xf32>
    %49 = vector.shape_cast %48 : vector<16x8xf32> to vector<2x8x8xf32>
    "tpu.trace_start"() <{level = 10 : i32, message = "bqd,bkd->bqk"}> : () -> ()
    %cst_20 = arith.constant dense<0.000000e+00> : vector<2x8x8xf32>
    %50 = tpu.matmul %45, %47, %cst_20 {dimension_numbers = #tpu.dot_dimension_numbers<[2], [2], [1], [1], [0, 0, 0, 1, 1, 1], [0], [0]>} : vector<2x8x8xf32>, vector<2x8x8xf32>, vector<2x8x8xf32> -> vector<2x8x8xf32>
    "tpu.trace_stop"() : () -> ()
    %51 = arith.addf %50, %28 : vector<2x8x8xf32>
    %cst_21 = arith.constant dense<0xFF800000> : vector<2x8xf32>
    %52 = vector.multi_reduction <maximumf>, %51, %cst_21 [2] : vector<2x8x8xf32> to vector<2x8xf32>
    %53 = vector.shape_cast %52 : vector<2x8xf32> to vector<2x8x1xf32>
    %54 = vector.broadcast %53 : vector<2x8x1xf32> to vector<2x8x8xf32>
    %55 = arith.subf %51, %54 : vector<2x8x8xf32>
    %56 = math.exp %55 : vector<2x8x8xf32>
    %cst_22 = arith.constant dense<0.000000e+00> : vector<2x8xf32>
    %57 = vector.multi_reduction <add>, %56, %cst_22 [2] : vector<2x8x8xf32> to vector<2x8xf32>
    %58 = vector.shape_cast %57 : vector<2x8xf32> to vector<2x8x1xf32>
    %59 = tpu.reciprocal %58 {approx = true} : vector<2x8x1xf32> -> vector<2x8x1xf32>
    %60 = vector.broadcast %59 : vector<2x8x1xf32> to vector<2x8x8xf32>
    %61 = arith.mulf %56, %60 : vector<2x8x8xf32>
    "tpu.trace_start"() <{level = 10 : i32, message = "bqk,bkd->bqd"}> : () -> ()
    %cst_23 = arith.constant dense<0.000000e+00> : vector<2x8x8xf32>
    %62 = tpu.matmul %61, %49, %cst_23 {dimension_numbers = #tpu.dot_dimension_numbers<[2], [1], [1], [2], [0, 0, 0, 1, 1, 2], [0], [0]>} : vector<2x8x8xf32>, vector<2x8x8xf32>, vector<2x8x8xf32> -> vector<2x8x8xf32>
    "tpu.trace_stop"() : () -> ()
    %63 = vector.shape_cast %62 : vector<2x8x8xf32> to vector<16x8xf32>
    %64 = vector.extract_strided_slice %43 {offsets = [0, 8], sizes = [16, 8], strides = [1, 1]} : vector<16x96xf32> to vector<16x8xf32>
    %65 = vector.shape_cast %64 : vector<16x8xf32> to vector<2x8x8xf32>
    %66 = vector.extract_strided_slice %43 {offsets = [0, 40], sizes = [16, 8], strides = [1, 1]} : vector<16x96xf32> to vector<16x8xf32>
    %67 = vector.shape_cast %66 : vector<16x8xf32> to vector<2x8x8xf32>
    %68 = vector.extract_strided_slice %43 {offsets = [0, 72], sizes = [16, 8], strides = [1, 1]} : vector<16x96xf32> to vector<16x8xf32>
    %69 = vector.shape_cast %68 : vector<16x8xf32> to vector<2x8x8xf32>
    "tpu.trace_start"() <{level = 10 : i32, message = "bqd,bkd->bqk"}> : () -> ()
    %cst_24 = arith.constant dense<0.000000e+00> : vector<2x8x8xf32>
    %70 = tpu.matmul %65, %67, %cst_24 {dimension_numbers = #tpu.dot_dimension_numbers<[2], [2], [1], [1], [0, 0, 0, 1, 1, 1], [0], [0]>} : vector<2x8x8xf32>, vector<2x8x8xf32>, vector<2x8x8xf32> -> vector<2x8x8xf32>
    "tpu.trace_stop"() : () -> ()
    %71 = arith.addf %70, %28 : vector<2x8x8xf32>
    %cst_25 = arith.constant dense<0xFF800000> : vector<2x8xf32>
    %72 = vector.multi_reduction <maximumf>, %71, %cst_25 [2] : vector<2x8x8xf32> to vector<2x8xf32>
    %73 = vector.shape_cast %72 : vector<2x8xf32> to vector<2x8x1xf32>
    %74 = vector.broadcast %73 : vector<2x8x1xf32> to vector<2x8x8xf32>
    %75 = arith.subf %71, %74 : vector<2x8x8xf32>
    %76 = math.exp %75 : vector<2x8x8xf32>
    %cst_26 = arith.constant dense<0.000000e+00> : vector<2x8xf32>
    %77 = vector.multi_reduction <add>, %76, %cst_26 [2] : vector<2x8x8xf32> to vector<2x8xf32>
    %78 = vector.shape_cast %77 : vector<2x8xf32> to vector<2x8x1xf32>
    %79 = tpu.reciprocal %78 {approx = true} : vector<2x8x1xf32> -> vector<2x8x1xf32>
    %80 = vector.broadcast %79 : vector<2x8x1xf32> to vector<2x8x8xf32>
    %81 = arith.mulf %76, %80 : vector<2x8x8xf32>
    "tpu.trace_start"() <{level = 10 : i32, message = "bqk,bkd->bqd"}> : () -> ()
    %cst_27 = arith.constant dense<0.000000e+00> : vector<2x8x8xf32>
    %82 = tpu.matmul %81, %69, %cst_27 {dimension_numbers = #tpu.dot_dimension_numbers<[2], [1], [1], [2], [0, 0, 0, 1, 1, 2], [0], [0]>} : vector<2x8x8xf32>, vector<2x8x8xf32>, vector<2x8x8xf32> -> vector<2x8x8xf32>
    "tpu.trace_stop"() : () -> ()
    %83 = vector.shape_cast %82 : vector<2x8x8xf32> to vector<16x8xf32>
    %84 = vector.extract_strided_slice %43 {offsets = [0, 16], sizes = [16, 8], strides = [1, 1]} : vector<16x96xf32> to vector<16x8xf32>
    %85 = vector.shape_cast %84 : vector<16x8xf32> to vector<2x8x8xf32>
    %86 = vector.extract_strided_slice %43 {offsets = [0, 48], sizes = [16, 8], strides = [1, 1]} : vector<16x96xf32> to vector<16x8xf32>
    %87 = vector.shape_cast %86 : vector<16x8xf32> to vector<2x8x8xf32>
    %88 = vector.extract_strided_slice %43 {offsets = [0, 80], sizes = [16, 8], strides = [1, 1]} : vector<16x96xf32> to vector<16x8xf32>
    %89 = vector.shape_cast %88 : vector<16x8xf32> to vector<2x8x8xf32>
    "tpu.trace_start"() <{level = 10 : i32, message = "bqd,bkd->bqk"}> : () -> ()
    %cst_28 = arith.constant dense<0.000000e+00> : vector<2x8x8xf32>
    %90 = tpu.matmul %85, %87, %cst_28 {dimension_numbers = #tpu.dot_dimension_numbers<[2], [2], [1], [1], [0, 0, 0, 1, 1, 1], [0], [0]>} : vector<2x8x8xf32>, vector<2x8x8xf32>, vector<2x8x8xf32> -> vector<2x8x8xf32>
    "tpu.trace_stop"() : () -> ()
    %91 = arith.addf %90, %28 : vector<2x8x8xf32>
    %cst_29 = arith.constant dense<0xFF800000> : vector<2x8xf32>
    %92 = vector.multi_reduction <maximumf>, %91, %cst_29 [2] : vector<2x8x8xf32> to vector<2x8xf32>
    %93 = vector.shape_cast %92 : vector<2x8xf32> to vector<2x8x1xf32>
    %94 = vector.broadcast %93 : vector<2x8x1xf32> to vector<2x8x8xf32>
    %95 = arith.subf %91, %94 : vector<2x8x8xf32>
    %96 = math.exp %95 : vector<2x8x8xf32>
    %cst_30 = arith.constant dense<0.000000e+00> : vector<2x8xf32>
    %97 = vector.multi_reduction <add>, %96, %cst_30 [2] : vector<2x8x8xf32> to vector<2x8xf32>
    %98 = vector.shape_cast %97 : vector<2x8xf32> to vector<2x8x1xf32>
    %99 = tpu.reciprocal %98 {approx = true} : vector<2x8x1xf32> -> vector<2x8x1xf32>
    %100 = vector.broadcast %99 : vector<2x8x1xf32> to vector<2x8x8xf32>
    %101 = arith.mulf %96, %100 : vector<2x8x8xf32>
    "tpu.trace_start"() <{level = 10 : i32, message = "bqk,bkd->bqd"}> : () -> ()
    %cst_31 = arith.constant dense<0.000000e+00> : vector<2x8x8xf32>
    %102 = tpu.matmul %101, %89, %cst_31 {dimension_numbers = #tpu.dot_dimension_numbers<[2], [1], [1], [2], [0, 0, 0, 1, 1, 2], [0], [0]>} : vector<2x8x8xf32>, vector<2x8x8xf32>, vector<2x8x8xf32> -> vector<2x8x8xf32>
    "tpu.trace_stop"() : () -> ()
    %103 = vector.shape_cast %102 : vector<2x8x8xf32> to vector<16x8xf32>
    %104 = vector.extract_strided_slice %43 {offsets = [0, 24], sizes = [16, 8], strides = [1, 1]} : vector<16x96xf32> to vector<16x8xf32>
    %105 = vector.shape_cast %104 : vector<16x8xf32> to vector<2x8x8xf32>
    %106 = vector.extract_strided_slice %43 {offsets = [0, 56], sizes = [16, 8], strides = [1, 1]} : vector<16x96xf32> to vector<16x8xf32>
    %107 = vector.shape_cast %106 : vector<16x8xf32> to vector<2x8x8xf32>
    %108 = vector.extract_strided_slice %43 {offsets = [0, 88], sizes = [16, 8], strides = [1, 1]} : vector<16x96xf32> to vector<16x8xf32>
    %109 = vector.shape_cast %108 : vector<16x8xf32> to vector<2x8x8xf32>
    "tpu.trace_start"() <{level = 10 : i32, message = "bqd,bkd->bqk"}> : () -> ()
    %cst_32 = arith.constant dense<0.000000e+00> : vector<2x8x8xf32>
    %110 = tpu.matmul %105, %107, %cst_32 {dimension_numbers = #tpu.dot_dimension_numbers<[2], [2], [1], [1], [0, 0, 0, 1, 1, 1], [0], [0]>} : vector<2x8x8xf32>, vector<2x8x8xf32>, vector<2x8x8xf32> -> vector<2x8x8xf32>
    "tpu.trace_stop"() : () -> ()
    %111 = arith.addf %110, %28 : vector<2x8x8xf32>
    %cst_33 = arith.constant dense<0xFF800000> : vector<2x8xf32>
    %112 = vector.multi_reduction <maximumf>, %111, %cst_33 [2] : vector<2x8x8xf32> to vector<2x8xf32>
    %113 = vector.shape_cast %112 : vector<2x8xf32> to vector<2x8x1xf32>
    %114 = vector.broadcast %113 : vector<2x8x1xf32> to vector<2x8x8xf32>
    %115 = arith.subf %111, %114 : vector<2x8x8xf32>
    %116 = math.exp %115 : vector<2x8x8xf32>
    %cst_34 = arith.constant dense<0.000000e+00> : vector<2x8xf32>
    %117 = vector.multi_reduction <add>, %116, %cst_34 [2] : vector<2x8x8xf32> to vector<2x8xf32>
    %118 = vector.shape_cast %117 : vector<2x8xf32> to vector<2x8x1xf32>
    %119 = tpu.reciprocal %118 {approx = true} : vector<2x8x1xf32> -> vector<2x8x1xf32>
    %120 = vector.broadcast %119 : vector<2x8x1xf32> to vector<2x8x8xf32>
    %121 = arith.mulf %116, %120 : vector<2x8x8xf32>
    "tpu.trace_start"() <{level = 10 : i32, message = "bqk,bkd->bqd"}> : () -> ()
    %cst_35 = arith.constant dense<0.000000e+00> : vector<2x8x8xf32>
    %122 = tpu.matmul %121, %109, %cst_35 {dimension_numbers = #tpu.dot_dimension_numbers<[2], [1], [1], [2], [0, 0, 0, 1, 1, 2], [0], [0]>} : vector<2x8x8xf32>, vector<2x8x8xf32>, vector<2x8x8xf32> -> vector<2x8x8xf32>
    "tpu.trace_stop"() : () -> ()
    %123 = vector.shape_cast %122 : vector<2x8x8xf32> to vector<16x8xf32>
    %124 = tpu.concatenate %63, %83, %103, %123 in 1 : vector<16x8xf32>, vector<16x8xf32>, vector<16x8xf32>, vector<16x8xf32> -> vector<16x32xf32>
    %c0_36 = arith.constant 0 : index
    %c0_37 = arith.constant 0 : index
    %c0_38 = arith.constant 0 : index
    %125 = vector.load %arg5[%c0_36, %c0_37, %c0_38] : memref<2x32x32xf32, #tpu.memory_space<vmem>>, vector<1x32x32xf32>
    %126 = vector.shape_cast %125 : vector<1x32x32xf32> to vector<32x32xf32>
    %cst_39 = arith.constant dense<0.000000e+00> : vector<16x32xf32>
    %127 = tpu.matmul %124, %126, %cst_39 {dimension_numbers = #tpu.dot_dimension_numbers<[1], [0], [0], [1], [0, 0, 1, 1], [], []>} : vector<16x32xf32>, vector<32x32xf32>, vector<16x32xf32> -> vector<16x32xf32>
    %128 = vector.broadcast %31 : vector<1x32xf32> to vector<16x32xf32>
    %129 = arith.addf %127, %128 : vector<16x32xf32>
    %130 = arith.addf %129, %25 : vector<16x32xf32>
    %cst_40 = arith.constant dense<0.000000e+00> : vector<16xf32>
    %131 = vector.multi_reduction <add>, %130, %cst_40 [1] : vector<16x32xf32> to vector<16xf32>
    %132 = vector.shape_cast %131 : vector<16xf32> to vector<16x1xf32>
    %cst_41 = arith.constant 3.200000e+01 : f32
    %133 = vector.broadcast %cst_41 : f32 to vector<16x1xf32>
    %134 = arith.divf %132, %133 : vector<16x1xf32>
    %135 = vector.broadcast %134 : vector<16x1xf32> to vector<16x32xf32>
    %136 = arith.subf %130, %135 : vector<16x32xf32>
    %137 = arith.mulf %136, %136 : vector<16x32xf32>
    %cst_42 = arith.constant dense<0.000000e+00> : vector<16xf32>
    %138 = vector.multi_reduction <add>, %137, %cst_42 [1] : vector<16x32xf32> to vector<16xf32>
    %139 = vector.shape_cast %138 : vector<16xf32> to vector<16x1xf32>
    %cst_43 = arith.constant 3.200000e+01 : f32
    %140 = vector.broadcast %cst_43 : f32 to vector<16x1xf32>
    %141 = arith.divf %139, %140 : vector<16x1xf32>
    %142 = vector.broadcast %134 : vector<16x1xf32> to vector<16x32xf32>
    %143 = arith.subf %130, %142 : vector<16x32xf32>
    %cst_44 = arith.constant 9.99999974E-6 : f32
    %144 = vector.broadcast %cst_44 : f32 to vector<16x1xf32>
    %145 = arith.addf %141, %144 : vector<16x1xf32>
    %146 = math.rsqrt %145 : vector<16x1xf32>
    %147 = vector.broadcast %146 : vector<16x1xf32> to vector<16x32xf32>
    %148 = arith.mulf %143, %147 : vector<16x32xf32>
    %149 = vector.broadcast %32 : vector<1x32xf32> to vector<16x32xf32>
    %150 = arith.mulf %148, %149 : vector<16x32xf32>
    %151 = vector.broadcast %33 : vector<1x32xf32> to vector<16x32xf32>
    %152 = arith.addf %150, %151 : vector<16x32xf32>
    %c0_45 = arith.constant 0 : index
    %c0_46 = arith.constant 0 : index
    %c0_47 = arith.constant 0 : index
    %153 = vector.load %arg6[%c0_45, %c0_46, %c0_47] : memref<2x32x64xf32, #tpu.memory_space<vmem>>, vector<1x32x64xf32>
    %154 = vector.shape_cast %153 : vector<1x32x64xf32> to vector<32x64xf32>
    %cst_48 = arith.constant dense<0.000000e+00> : vector<16x64xf32>
    %155 = tpu.matmul %152, %154, %cst_48 {dimension_numbers = #tpu.dot_dimension_numbers<[1], [0], [0], [1], [0, 0, 1, 1], [], []>} : vector<16x32xf32>, vector<32x64xf32>, vector<16x64xf32> -> vector<16x64xf32>
    %c0_49 = arith.constant 0 : index
    %c0_50 = arith.constant 0 : index
    %c0_51 = arith.constant 0 : index
    %156 = vector.load %arg7[%c0_49, %c0_50, %c0_51] : memref<2x1x64xf32, #tpu.memory_space<vmem>>, vector<1x1x64xf32>
    %157 = vector.shape_cast %156 : vector<1x1x64xf32> to vector<1x64xf32>
    %158 = vector.broadcast %157 : vector<1x64xf32> to vector<16x64xf32>
    %159 = arith.addf %155, %158 : vector<16x64xf32>
    %160 = arith.mulf %159, %159 : vector<16x64xf32>
    %161 = arith.mulf %159, %160 : vector<16x64xf32>
    %cst_52 = arith.constant 4.471500e-02 : f32
    %162 = vector.broadcast %cst_52 : f32 to vector<16x64xf32>
    %163 = arith.mulf %162, %161 : vector<16x64xf32>
    %164 = arith.addf %159, %163 : vector<16x64xf32>
    %cst_53 = arith.constant 0.797884583 : f32
    %165 = vector.broadcast %cst_53 : f32 to vector<16x64xf32>
    %166 = arith.mulf %165, %164 : vector<16x64xf32>
    %167 = math.tanh %166 : vector<16x64xf32>
    %cst_54 = arith.constant 1.000000e+00 : f32
    %168 = vector.broadcast %cst_54 : f32 to vector<16x64xf32>
    %169 = arith.addf %168, %167 : vector<16x64xf32>
    %cst_55 = arith.constant 5.000000e-01 : f32
    %170 = vector.broadcast %cst_55 : f32 to vector<16x64xf32>
    %171 = arith.mulf %170, %169 : vector<16x64xf32>
    %172 = arith.mulf %159, %171 : vector<16x64xf32>
    %c0_56 = arith.constant 0 : index
    %c0_57 = arith.constant 0 : index
    %c0_58 = arith.constant 0 : index
    %173 = vector.load %arg8[%c0_56, %c0_57, %c0_58] : memref<2x64x32xf32, #tpu.memory_space<vmem>>, vector<1x64x32xf32>
    %174 = vector.shape_cast %173 : vector<1x64x32xf32> to vector<64x32xf32>
    %cst_59 = arith.constant dense<0.000000e+00> : vector<16x32xf32>
    %175 = tpu.matmul %172, %174, %cst_59 {dimension_numbers = #tpu.dot_dimension_numbers<[1], [0], [0], [1], [0, 0, 1, 1], [], []>} : vector<16x64xf32>, vector<64x32xf32>, vector<16x32xf32> -> vector<16x32xf32>
    %176 = vector.broadcast %34 : vector<1x32xf32> to vector<16x32xf32>
    %177 = arith.addf %175, %176 : vector<16x32xf32>
    %178 = arith.addf %177, %152 : vector<16x32xf32>
    %cst_60 = arith.constant dense<0.000000e+00> : vector<16xf32>
    %179 = vector.multi_reduction <add>, %178, %cst_60 [1] : vector<16x32xf32> to vector<16xf32>
    %180 = vector.shape_cast %179 : vector<16xf32> to vector<16x1xf32>
    %cst_61 = arith.constant 3.200000e+01 : f32
    %181 = vector.broadcast %cst_61 : f32 to vector<16x1xf32>
    %182 = arith.divf %180, %181 : vector<16x1xf32>
    %183 = vector.broadcast %182 : vector<16x1xf32> to vector<16x32xf32>
    %184 = arith.subf %178, %183 : vector<16x32xf32>
    %185 = arith.mulf %184, %184 : vector<16x32xf32>
    %cst_62 = arith.constant dense<0.000000e+00> : vector<16xf32>
    %186 = vector.multi_reduction <add>, %185, %cst_62 [1] : vector<16x32xf32> to vector<16xf32>
    %187 = vector.shape_cast %186 : vector<16xf32> to vector<16x1xf32>
    %cst_63 = arith.constant 3.200000e+01 : f32
    %188 = vector.broadcast %cst_63 : f32 to vector<16x1xf32>
    %189 = arith.divf %187, %188 : vector<16x1xf32>
    %190 = vector.broadcast %182 : vector<16x1xf32> to vector<16x32xf32>
    %191 = arith.subf %178, %190 : vector<16x32xf32>
    %cst_64 = arith.constant 9.99999974E-6 : f32
    %192 = vector.broadcast %cst_64 : f32 to vector<16x1xf32>
    %193 = arith.addf %189, %192 : vector<16x1xf32>
    %194 = math.rsqrt %193 : vector<16x1xf32>
    %195 = vector.broadcast %194 : vector<16x1xf32> to vector<16x32xf32>
    %196 = arith.mulf %191, %195 : vector<16x32xf32>
    %197 = vector.broadcast %35 : vector<1x32xf32> to vector<16x32xf32>
    %198 = arith.mulf %196, %197 : vector<16x32xf32>
    %199 = vector.broadcast %36 : vector<1x32xf32> to vector<16x32xf32>
    %200 = arith.addf %198, %199 : vector<16x32xf32>
    %c1 = arith.constant 1 : index
    %c0_65 = arith.constant 0 : index
    %c0_66 = arith.constant 0 : index
    %201 = vector.load %arg9[%c1, %c0_65, %c0_66] : memref<2x6x32xf32, #tpu.memory_space<vmem>>, vector<1x6x32xf32>
    %202 = vector.shape_cast %201 : vector<1x6x32xf32> to vector<6x32xf32>
    %203 = vector.extract_strided_slice %202 {offsets = [0, 0], sizes = [1, 32], strides = [1, 1]} : vector<6x32xf32> to vector<1x32xf32>
    %204 = vector.extract_strided_slice %202 {offsets = [1, 0], sizes = [1, 32], strides = [1, 1]} : vector<6x32xf32> to vector<1x32xf32>
    %205 = vector.extract_strided_slice %202 {offsets = [2, 0], sizes = [1, 32], strides = [1, 1]} : vector<6x32xf32> to vector<1x32xf32>
    %206 = vector.extract_strided_slice %202 {offsets = [3, 0], sizes = [1, 32], strides = [1, 1]} : vector<6x32xf32> to vector<1x32xf32>
    %207 = vector.extract_strided_slice %202 {offsets = [4, 0], sizes = [1, 32], strides = [1, 1]} : vector<6x32xf32> to vector<1x32xf32>
    %208 = vector.extract_strided_slice %202 {offsets = [5, 0], sizes = [1, 32], strides = [1, 1]} : vector<6x32xf32> to vector<1x32xf32>
    %c1_67 = arith.constant 1 : index
    %c0_68 = arith.constant 0 : index
    %c0_69 = arith.constant 0 : index
    %209 = vector.load %arg3[%c1_67, %c0_68, %c0_69] : memref<2x32x96xf32, #tpu.memory_space<vmem>>, vector<1x32x96xf32>
    %210 = vector.shape_cast %209 : vector<1x32x96xf32> to vector<32x96xf32>
    %cst_70 = arith.constant dense<0.000000e+00> : vector<16x96xf32>
    %211 = tpu.matmul %200, %210, %cst_70 {dimension_numbers = #tpu.dot_dimension_numbers<[1], [0], [0], [1], [0, 0, 1, 1], [], []>} : vector<16x32xf32>, vector<32x96xf32>, vector<16x96xf32> -> vector<16x96xf32>
    %c1_71 = arith.constant 1 : index
    %c0_72 = arith.constant 0 : index
    %c0_73 = arith.constant 0 : index
    %212 = vector.load %arg4[%c1_71, %c0_72, %c0_73] : memref<2x1x96xf32, #tpu.memory_space<vmem>>, vector<1x1x96xf32>
    %213 = vector.shape_cast %212 : vector<1x1x96xf32> to vector<1x96xf32>
    %214 = vector.broadcast %213 : vector<1x96xf32> to vector<16x96xf32>
    %215 = arith.addf %211, %214 : vector<16x96xf32>
    %216 = vector.extract_strided_slice %215 {offsets = [0, 0], sizes = [16, 8], strides = [1, 1]} : vector<16x96xf32> to vector<16x8xf32>
    %217 = vector.shape_cast %216 : vector<16x8xf32> to vector<2x8x8xf32>
    %218 = vector.extract_strided_slice %215 {offsets = [0, 32], sizes = [16, 8], strides = [1, 1]} : vector<16x96xf32> to vector<16x8xf32>
    %219 = vector.shape_cast %218 : vector<16x8xf32> to vector<2x8x8xf32>
    %220 = vector.extract_strided_slice %215 {offsets = [0, 64], sizes = [16, 8], strides = [1, 1]} : vector<16x96xf32> to vector<16x8xf32>
    %221 = vector.shape_cast %220 : vector<16x8xf32> to vector<2x8x8xf32>
    "tpu.trace_start"() <{level = 10 : i32, message = "bqd,bkd->bqk"}> : () -> ()
    %cst_74 = arith.constant dense<0.000000e+00> : vector<2x8x8xf32>
    %222 = tpu.matmul %217, %219, %cst_74 {dimension_numbers = #tpu.dot_dimension_numbers<[2], [2], [1], [1], [0, 0, 0, 1, 1, 1], [0], [0]>} : vector<2x8x8xf32>, vector<2x8x8xf32>, vector<2x8x8xf32> -> vector<2x8x8xf32>
    "tpu.trace_stop"() : () -> ()
    %223 = arith.addf %222, %28 : vector<2x8x8xf32>
    %cst_75 = arith.constant dense<0xFF800000> : vector<2x8xf32>
    %224 = vector.multi_reduction <maximumf>, %223, %cst_75 [2] : vector<2x8x8xf32> to vector<2x8xf32>
    %225 = vector.shape_cast %224 : vector<2x8xf32> to vector<2x8x1xf32>
    %226 = vector.broadcast %225 : vector<2x8x1xf32> to vector<2x8x8xf32>
    %227 = arith.subf %223, %226 : vector<2x8x8xf32>
    %228 = math.exp %227 : vector<2x8x8xf32>
    %cst_76 = arith.constant dense<0.000000e+00> : vector<2x8xf32>
    %229 = vector.multi_reduction <add>, %228, %cst_76 [2] : vector<2x8x8xf32> to vector<2x8xf32>
    %230 = vector.shape_cast %229 : vector<2x8xf32> to vector<2x8x1xf32>
    %231 = tpu.reciprocal %230 {approx = true} : vector<2x8x1xf32> -> vector<2x8x1xf32>
    %232 = vector.broadcast %231 : vector<2x8x1xf32> to vector<2x8x8xf32>
    %233 = arith.mulf %228, %232 : vector<2x8x8xf32>
    "tpu.trace_start"() <{level = 10 : i32, message = "bqk,bkd->bqd"}> : () -> ()
    %cst_77 = arith.constant dense<0.000000e+00> : vector<2x8x8xf32>
    %234 = tpu.matmul %233, %221, %cst_77 {dimension_numbers = #tpu.dot_dimension_numbers<[2], [1], [1], [2], [0, 0, 0, 1, 1, 2], [0], [0]>} : vector<2x8x8xf32>, vector<2x8x8xf32>, vector<2x8x8xf32> -> vector<2x8x8xf32>
    "tpu.trace_stop"() : () -> ()
    %235 = vector.shape_cast %234 : vector<2x8x8xf32> to vector<16x8xf32>
    %236 = vector.extract_strided_slice %215 {offsets = [0, 8], sizes = [16, 8], strides = [1, 1]} : vector<16x96xf32> to vector<16x8xf32>
    %237 = vector.shape_cast %236 : vector<16x8xf32> to vector<2x8x8xf32>
    %238 = vector.extract_strided_slice %215 {offsets = [0, 40], sizes = [16, 8], strides = [1, 1]} : vector<16x96xf32> to vector<16x8xf32>
    %239 = vector.shape_cast %238 : vector<16x8xf32> to vector<2x8x8xf32>
    %240 = vector.extract_strided_slice %215 {offsets = [0, 72], sizes = [16, 8], strides = [1, 1]} : vector<16x96xf32> to vector<16x8xf32>
    %241 = vector.shape_cast %240 : vector<16x8xf32> to vector<2x8x8xf32>
    "tpu.trace_start"() <{level = 10 : i32, message = "bqd,bkd->bqk"}> : () -> ()
    %cst_78 = arith.constant dense<0.000000e+00> : vector<2x8x8xf32>
    %242 = tpu.matmul %237, %239, %cst_78 {dimension_numbers = #tpu.dot_dimension_numbers<[2], [2], [1], [1], [0, 0, 0, 1, 1, 1], [0], [0]>} : vector<2x8x8xf32>, vector<2x8x8xf32>, vector<2x8x8xf32> -> vector<2x8x8xf32>
    "tpu.trace_stop"() : () -> ()
    %243 = arith.addf %242, %28 : vector<2x8x8xf32>
    %cst_79 = arith.constant dense<0xFF800000> : vector<2x8xf32>
    %244 = vector.multi_reduction <maximumf>, %243, %cst_79 [2] : vector<2x8x8xf32> to vector<2x8xf32>
    %245 = vector.shape_cast %244 : vector<2x8xf32> to vector<2x8x1xf32>
    %246 = vector.broadcast %245 : vector<2x8x1xf32> to vector<2x8x8xf32>
    %247 = arith.subf %243, %246 : vector<2x8x8xf32>
    %248 = math.exp %247 : vector<2x8x8xf32>
    %cst_80 = arith.constant dense<0.000000e+00> : vector<2x8xf32>
    %249 = vector.multi_reduction <add>, %248, %cst_80 [2] : vector<2x8x8xf32> to vector<2x8xf32>
    %250 = vector.shape_cast %249 : vector<2x8xf32> to vector<2x8x1xf32>
    %251 = tpu.reciprocal %250 {approx = true} : vector<2x8x1xf32> -> vector<2x8x1xf32>
    %252 = vector.broadcast %251 : vector<2x8x1xf32> to vector<2x8x8xf32>
    %253 = arith.mulf %248, %252 : vector<2x8x8xf32>
    "tpu.trace_start"() <{level = 10 : i32, message = "bqk,bkd->bqd"}> : () -> ()
    %cst_81 = arith.constant dense<0.000000e+00> : vector<2x8x8xf32>
    %254 = tpu.matmul %253, %241, %cst_81 {dimension_numbers = #tpu.dot_dimension_numbers<[2], [1], [1], [2], [0, 0, 0, 1, 1, 2], [0], [0]>} : vector<2x8x8xf32>, vector<2x8x8xf32>, vector<2x8x8xf32> -> vector<2x8x8xf32>
    "tpu.trace_stop"() : () -> ()
    %255 = vector.shape_cast %254 : vector<2x8x8xf32> to vector<16x8xf32>
    %256 = vector.extract_strided_slice %215 {offsets = [0, 16], sizes = [16, 8], strides = [1, 1]} : vector<16x96xf32> to vector<16x8xf32>
    %257 = vector.shape_cast %256 : vector<16x8xf32> to vector<2x8x8xf32>
    %258 = vector.extract_strided_slice %215 {offsets = [0, 48], sizes = [16, 8], strides = [1, 1]} : vector<16x96xf32> to vector<16x8xf32>
    %259 = vector.shape_cast %258 : vector<16x8xf32> to vector<2x8x8xf32>
    %260 = vector.extract_strided_slice %215 {offsets = [0, 80], sizes = [16, 8], strides = [1, 1]} : vector<16x96xf32> to vector<16x8xf32>
    %261 = vector.shape_cast %260 : vector<16x8xf32> to vector<2x8x8xf32>
    "tpu.trace_start"() <{level = 10 : i32, message = "bqd,bkd->bqk"}> : () -> ()
    %cst_82 = arith.constant dense<0.000000e+00> : vector<2x8x8xf32>
    %262 = tpu.matmul %257, %259, %cst_82 {dimension_numbers = #tpu.dot_dimension_numbers<[2], [2], [1], [1], [0, 0, 0, 1, 1, 1], [0], [0]>} : vector<2x8x8xf32>, vector<2x8x8xf32>, vector<2x8x8xf32> -> vector<2x8x8xf32>
    "tpu.trace_stop"() : () -> ()
    %263 = arith.addf %262, %28 : vector<2x8x8xf32>
    %cst_83 = arith.constant dense<0xFF800000> : vector<2x8xf32>
    %264 = vector.multi_reduction <maximumf>, %263, %cst_83 [2] : vector<2x8x8xf32> to vector<2x8xf32>
    %265 = vector.shape_cast %264 : vector<2x8xf32> to vector<2x8x1xf32>
    %266 = vector.broadcast %265 : vector<2x8x1xf32> to vector<2x8x8xf32>
    %267 = arith.subf %263, %266 : vector<2x8x8xf32>
    %268 = math.exp %267 : vector<2x8x8xf32>
    %cst_84 = arith.constant dense<0.000000e+00> : vector<2x8xf32>
    %269 = vector.multi_reduction <add>, %268, %cst_84 [2] : vector<2x8x8xf32> to vector<2x8xf32>
    %270 = vector.shape_cast %269 : vector<2x8xf32> to vector<2x8x1xf32>
    %271 = tpu.reciprocal %270 {approx = true} : vector<2x8x1xf32> -> vector<2x8x1xf32>
    %272 = vector.broadcast %271 : vector<2x8x1xf32> to vector<2x8x8xf32>
    %273 = arith.mulf %268, %272 : vector<2x8x8xf32>
    "tpu.trace_start"() <{level = 10 : i32, message = "bqk,bkd->bqd"}> : () -> ()
    %cst_85 = arith.constant dense<0.000000e+00> : vector<2x8x8xf32>
    %274 = tpu.matmul %273, %261, %cst_85 {dimension_numbers = #tpu.dot_dimension_numbers<[2], [1], [1], [2], [0, 0, 0, 1, 1, 2], [0], [0]>} : vector<2x8x8xf32>, vector<2x8x8xf32>, vector<2x8x8xf32> -> vector<2x8x8xf32>
    "tpu.trace_stop"() : () -> ()
    %275 = vector.shape_cast %274 : vector<2x8x8xf32> to vector<16x8xf32>
    %276 = vector.extract_strided_slice %215 {offsets = [0, 24], sizes = [16, 8], strides = [1, 1]} : vector<16x96xf32> to vector<16x8xf32>
    %277 = vector.shape_cast %276 : vector<16x8xf32> to vector<2x8x8xf32>
    %278 = vector.extract_strided_slice %215 {offsets = [0, 56], sizes = [16, 8], strides = [1, 1]} : vector<16x96xf32> to vector<16x8xf32>
    %279 = vector.shape_cast %278 : vector<16x8xf32> to vector<2x8x8xf32>
    %280 = vector.extract_strided_slice %215 {offsets = [0, 88], sizes = [16, 8], strides = [1, 1]} : vector<16x96xf32> to vector<16x8xf32>
    %281 = vector.shape_cast %280 : vector<16x8xf32> to vector<2x8x8xf32>
    "tpu.trace_start"() <{level = 10 : i32, message = "bqd,bkd->bqk"}> : () -> ()
    %cst_86 = arith.constant dense<0.000000e+00> : vector<2x8x8xf32>
    %282 = tpu.matmul %277, %279, %cst_86 {dimension_numbers = #tpu.dot_dimension_numbers<[2], [2], [1], [1], [0, 0, 0, 1, 1, 1], [0], [0]>} : vector<2x8x8xf32>, vector<2x8x8xf32>, vector<2x8x8xf32> -> vector<2x8x8xf32>
    "tpu.trace_stop"() : () -> ()
    %283 = arith.addf %282, %28 : vector<2x8x8xf32>
    %cst_87 = arith.constant dense<0xFF800000> : vector<2x8xf32>
    %284 = vector.multi_reduction <maximumf>, %283, %cst_87 [2] : vector<2x8x8xf32> to vector<2x8xf32>
    %285 = vector.shape_cast %284 : vector<2x8xf32> to vector<2x8x1xf32>
    %286 = vector.broadcast %285 : vector<2x8x1xf32> to vector<2x8x8xf32>
    %287 = arith.subf %283, %286 : vector<2x8x8xf32>
    %288 = math.exp %287 : vector<2x8x8xf32>
    %cst_88 = arith.constant dense<0.000000e+00> : vector<2x8xf32>
    %289 = vector.multi_reduction <add>, %288, %cst_88 [2] : vector<2x8x8xf32> to vector<2x8xf32>
    %290 = vector.shape_cast %289 : vector<2x8xf32> to vector<2x8x1xf32>
    %291 = tpu.reciprocal %290 {approx = true} : vector<2x8x1xf32> -> vector<2x8x1xf32>
    %292 = vector.broadcast %291 : vector<2x8x1xf32> to vector<2x8x8xf32>
    %293 = arith.mulf %288, %292 : vector<2x8x8xf32>
    "tpu.trace_start"() <{level = 10 : i32, message = "bqk,bkd->bqd"}> : () -> ()
    %cst_89 = arith.constant dense<0.000000e+00> : vector<2x8x8xf32>
    %294 = tpu.matmul %293, %281, %cst_89 {dimension_numbers = #tpu.dot_dimension_numbers<[2], [1], [1], [2], [0, 0, 0, 1, 1, 2], [0], [0]>} : vector<2x8x8xf32>, vector<2x8x8xf32>, vector<2x8x8xf32> -> vector<2x8x8xf32>
    "tpu.trace_stop"() : () -> ()
    %295 = vector.shape_cast %294 : vector<2x8x8xf32> to vector<16x8xf32>
    %296 = tpu.concatenate %235, %255, %275, %295 in 1 : vector<16x8xf32>, vector<16x8xf32>, vector<16x8xf32>, vector<16x8xf32> -> vector<16x32xf32>
    %c1_90 = arith.constant 1 : index
    %c0_91 = arith.constant 0 : index
    %c0_92 = arith.constant 0 : index
    %297 = vector.load %arg5[%c1_90, %c0_91, %c0_92] : memref<2x32x32xf32, #tpu.memory_space<vmem>>, vector<1x32x32xf32>
    %298 = vector.shape_cast %297 : vector<1x32x32xf32> to vector<32x32xf32>
    %cst_93 = arith.constant dense<0.000000e+00> : vector<16x32xf32>
    %299 = tpu.matmul %296, %298, %cst_93 {dimension_numbers = #tpu.dot_dimension_numbers<[1], [0], [0], [1], [0, 0, 1, 1], [], []>} : vector<16x32xf32>, vector<32x32xf32>, vector<16x32xf32> -> vector<16x32xf32>
    %300 = vector.broadcast %203 : vector<1x32xf32> to vector<16x32xf32>
    %301 = arith.addf %299, %300 : vector<16x32xf32>
    %302 = arith.addf %301, %200 : vector<16x32xf32>
    %cst_94 = arith.constant dense<0.000000e+00> : vector<16xf32>
    %303 = vector.multi_reduction <add>, %302, %cst_94 [1] : vector<16x32xf32> to vector<16xf32>
    %304 = vector.shape_cast %303 : vector<16xf32> to vector<16x1xf32>
    %cst_95 = arith.constant 3.200000e+01 : f32
    %305 = vector.broadcast %cst_95 : f32 to vector<16x1xf32>
    %306 = arith.divf %304, %305 : vector<16x1xf32>
    %307 = vector.broadcast %306 : vector<16x1xf32> to vector<16x32xf32>
    %308 = arith.subf %302, %307 : vector<16x32xf32>
    %309 = arith.mulf %308, %308 : vector<16x32xf32>
    %cst_96 = arith.constant dense<0.000000e+00> : vector<16xf32>
    %310 = vector.multi_reduction <add>, %309, %cst_96 [1] : vector<16x32xf32> to vector<16xf32>
    %311 = vector.shape_cast %310 : vector<16xf32> to vector<16x1xf32>
    %cst_97 = arith.constant 3.200000e+01 : f32
    %312 = vector.broadcast %cst_97 : f32 to vector<16x1xf32>
    %313 = arith.divf %311, %312 : vector<16x1xf32>
    %314 = vector.broadcast %306 : vector<16x1xf32> to vector<16x32xf32>
    %315 = arith.subf %302, %314 : vector<16x32xf32>
    %cst_98 = arith.constant 9.99999974E-6 : f32
    %316 = vector.broadcast %cst_98 : f32 to vector<16x1xf32>
    %317 = arith.addf %313, %316 : vector<16x1xf32>
    %318 = math.rsqrt %317 : vector<16x1xf32>
    %319 = vector.broadcast %318 : vector<16x1xf32> to vector<16x32xf32>
    %320 = arith.mulf %315, %319 : vector<16x32xf32>
    %321 = vector.broadcast %204 : vector<1x32xf32> to vector<16x32xf32>
    %322 = arith.mulf %320, %321 : vector<16x32xf32>
    %323 = vector.broadcast %205 : vector<1x32xf32> to vector<16x32xf32>
    %324 = arith.addf %322, %323 : vector<16x32xf32>
    %c1_99 = arith.constant 1 : index
    %c0_100 = arith.constant 0 : index
    %c0_101 = arith.constant 0 : index
    %325 = vector.load %arg6[%c1_99, %c0_100, %c0_101] : memref<2x32x64xf32, #tpu.memory_space<vmem>>, vector<1x32x64xf32>
    %326 = vector.shape_cast %325 : vector<1x32x64xf32> to vector<32x64xf32>
    %cst_102 = arith.constant dense<0.000000e+00> : vector<16x64xf32>
    %327 = tpu.matmul %324, %326, %cst_102 {dimension_numbers = #tpu.dot_dimension_numbers<[1], [0], [0], [1], [0, 0, 1, 1], [], []>} : vector<16x32xf32>, vector<32x64xf32>, vector<16x64xf32> -> vector<16x64xf32>
    %c1_103 = arith.constant 1 : index
    %c0_104 = arith.constant 0 : index
    %c0_105 = arith.constant 0 : index
    %328 = vector.load %arg7[%c1_103, %c0_104, %c0_105] : memref<2x1x64xf32, #tpu.memory_space<vmem>>, vector<1x1x64xf32>
    %329 = vector.shape_cast %328 : vector<1x1x64xf32> to vector<1x64xf32>
    %330 = vector.broadcast %329 : vector<1x64xf32> to vector<16x64xf32>
    %331 = arith.addf %327, %330 : vector<16x64xf32>
    %332 = arith.mulf %331, %331 : vector<16x64xf32>
    %333 = arith.mulf %331, %332 : vector<16x64xf32>
    %cst_106 = arith.constant 4.471500e-02 : f32
    %334 = vector.broadcast %cst_106 : f32 to vector<16x64xf32>
    %335 = arith.mulf %334, %333 : vector<16x64xf32>
    %336 = arith.addf %331, %335 : vector<16x64xf32>
    %cst_107 = arith.constant 0.797884583 : f32
    %337 = vector.broadcast %cst_107 : f32 to vector<16x64xf32>
    %338 = arith.mulf %337, %336 : vector<16x64xf32>
    %339 = math.tanh %338 : vector<16x64xf32>
    %cst_108 = arith.constant 1.000000e+00 : f32
    %340 = vector.broadcast %cst_108 : f32 to vector<16x64xf32>
    %341 = arith.addf %340, %339 : vector<16x64xf32>
    %cst_109 = arith.constant 5.000000e-01 : f32
    %342 = vector.broadcast %cst_109 : f32 to vector<16x64xf32>
    %343 = arith.mulf %342, %341 : vector<16x64xf32>
    %344 = arith.mulf %331, %343 : vector<16x64xf32>
    %c1_110 = arith.constant 1 : index
    %c0_111 = arith.constant 0 : index
    %c0_112 = arith.constant 0 : index
    %345 = vector.load %arg8[%c1_110, %c0_111, %c0_112] : memref<2x64x32xf32, #tpu.memory_space<vmem>>, vector<1x64x32xf32>
    %346 = vector.shape_cast %345 : vector<1x64x32xf32> to vector<64x32xf32>
    %cst_113 = arith.constant dense<0.000000e+00> : vector<16x32xf32>
    %347 = tpu.matmul %344, %346, %cst_113 {dimension_numbers = #tpu.dot_dimension_numbers<[1], [0], [0], [1], [0, 0, 1, 1], [], []>} : vector<16x64xf32>, vector<64x32xf32>, vector<16x32xf32> -> vector<16x32xf32>
    %348 = vector.broadcast %206 : vector<1x32xf32> to vector<16x32xf32>
    %349 = arith.addf %347, %348 : vector<16x32xf32>
    %350 = arith.addf %349, %324 : vector<16x32xf32>
    %cst_114 = arith.constant dense<0.000000e+00> : vector<16xf32>
    %351 = vector.multi_reduction <add>, %350, %cst_114 [1] : vector<16x32xf32> to vector<16xf32>
    %352 = vector.shape_cast %351 : vector<16xf32> to vector<16x1xf32>
    %cst_115 = arith.constant 3.200000e+01 : f32
    %353 = vector.broadcast %cst_115 : f32 to vector<16x1xf32>
    %354 = arith.divf %352, %353 : vector<16x1xf32>
    %355 = vector.broadcast %354 : vector<16x1xf32> to vector<16x32xf32>
    %356 = arith.subf %350, %355 : vector<16x32xf32>
    %357 = arith.mulf %356, %356 : vector<16x32xf32>
    %cst_116 = arith.constant dense<0.000000e+00> : vector<16xf32>
    %358 = vector.multi_reduction <add>, %357, %cst_116 [1] : vector<16x32xf32> to vector<16xf32>
    %359 = vector.shape_cast %358 : vector<16xf32> to vector<16x1xf32>
    %cst_117 = arith.constant 3.200000e+01 : f32
    %360 = vector.broadcast %cst_117 : f32 to vector<16x1xf32>
    %361 = arith.divf %359, %360 : vector<16x1xf32>
    %362 = vector.broadcast %354 : vector<16x1xf32> to vector<16x32xf32>
    %363 = arith.subf %350, %362 : vector<16x32xf32>
    %cst_118 = arith.constant 9.99999974E-6 : f32
    %364 = vector.broadcast %cst_118 : f32 to vector<16x1xf32>
    %365 = arith.addf %361, %364 : vector<16x1xf32>
    %366 = math.rsqrt %365 : vector<16x1xf32>
    %367 = vector.broadcast %366 : vector<16x1xf32> to vector<16x32xf32>
    %368 = arith.mulf %363, %367 : vector<16x32xf32>
    %369 = vector.broadcast %207 : vector<1x32xf32> to vector<16x32xf32>
    %370 = arith.mulf %368, %369 : vector<16x32xf32>
    %371 = vector.broadcast %208 : vector<1x32xf32> to vector<16x32xf32>
    %372 = arith.addf %370, %371 : vector<16x32xf32>
    %373 = vector.shape_cast %372 : vector<16x32xf32> to vector<2x8x32xf32>
    %374 = vector.extract_strided_slice %373 {offsets = [0, 0, 0], sizes = [2, 1, 32], strides = [1, 1, 1]} : vector<2x8x32xf32> to vector<2x1x32xf32>
    %375 = vector.shape_cast %374 : vector<2x1x32xf32> to vector<2x32xf32>
    %c0_119 = arith.constant 0 : index
    %c0_120 = arith.constant 0 : index
    %376 = vector.load %arg10[%c0_119, %c0_120] : memref<32x32xf32, #tpu.memory_space<vmem>>, vector<32x32xf32>
    %cst_121 = arith.constant dense<0.000000e+00> : vector<2x32xf32>
    %377 = tpu.matmul %375, %376, %cst_121 {dimension_numbers = #tpu.dot_dimension_numbers<[1], [0], [0], [1], [0, 0, 1, 1], [], []>} : vector<2x32xf32>, vector<32x32xf32>, vector<2x32xf32> -> vector<2x32xf32>
    %378 = vector.extract_strided_slice %0 {offsets = [2, 0], sizes = [1, 32], strides = [1, 1]} : vector<4x32xf32> to vector<1x32xf32>
    %379 = vector.broadcast %378 : vector<1x32xf32> to vector<2x32xf32>
    %380 = arith.addf %377, %379 : vector<2x32xf32>
    %381 = math.tanh %380 : vector<2x32xf32>
    %c0_122 = arith.constant 0 : index
    %c0_123 = arith.constant 0 : index
    %382 = vector.load %arg11[%c0_122, %c0_123] : memref<32x2xf32, #tpu.memory_space<vmem>>, vector<32x2xf32>
    %cst_124 = arith.constant dense<0.000000e+00> : vector<2x2xf32>
    %383 = tpu.matmul %381, %382, %cst_124 {dimension_numbers = #tpu.dot_dimension_numbers<[1], [0], [0], [1], [0, 0, 1, 1], [], []>} : vector<2x32xf32>, vector<32x2xf32>, vector<2x2xf32> -> vector<2x2xf32>
    %384 = vector.extract_strided_slice %0 {offsets = [3, 0], sizes = [1, 2], strides = [1, 1]} : vector<4x32xf32> to vector<1x2xf32>
    %385 = vector.broadcast %384 : vector<1x2xf32> to vector<2x2xf32>
    %386 = arith.addf %383, %385 : vector<2x2xf32>
    %c0_125 = arith.constant 0 : index
    %c0_126 = arith.constant 0 : index
    %387 = vector.load %arg14[%c0_125, %c0_126] : memref<2x32xf32, #tpu.memory_space<vmem>>, vector<2x32xf32>
    tpu.vector_store %arg14[%c0_125, %c0_126], %381 {strides = array<i32>} : memref<2x32xf32, #tpu.memory_space<vmem>>, vector<2x32xf32>,
    %c0_127 = arith.constant 0 : index
    %c0_128 = arith.constant 0 : index
    %388 = vector.load %arg13[%c0_127, %c0_128] : memref<2x2xf32, #tpu.memory_space<vmem>>, vector<2x2xf32>
    tpu.vector_store %arg13[%c0_127, %c0_128], %386 {strides = array<i32>} : memref<2x2xf32, #tpu.memory_space<vmem>>, vector<2x2xf32>,
    return
  }
  func.func @transform_0(%arg0: i32) -> (i32, i32) {
    %c0_i32 = arith.constant 0 : i32
    %c0_i32_0 = arith.constant 0 : i32
    %c0_i32_1 = arith.constant 0 : i32
    return %c0_i32, %c0_i32_0 : i32, i32
  }
  func.func @transform_1(%arg0: i32) -> (i32, i32, i32) {
    %c0_i32 = arith.constant 0 : i32
    %c0_i32_0 = arith.constant 0 : i32
    %c0_i32_1 = arith.constant 0 : i32
    %c0_i32_2 = arith.constant 0 : i32
    return %c0_i32, %c0_i32_0, %c0_i32_1 : i32, i32, i32
  }
  func.func @transform_2(%arg0: i32) -> (i32, i32, i32) {
    %c0_i32 = arith.constant 0 : i32
    %c0_i32_0 = arith.constant 0 : i32
    %c0_i32_1 = arith.constant 0 : i32
    %c0_i32_2 = arith.constant 0 : i32
    return %c0_i32, %c0_i32_0, %c0_i32_1 : i32, i32, i32
  }
  func.func @transform_3(%arg0: i32) -> (i32, i32, i32) {
    %c0_i32 = arith.constant 0 : i32
    %c0_i32_0 = arith.constant 0 : i32
    %c0_i32_1 = arith.constant 0 : i32
    %c0_i32_2 = arith.constant 0 : i32
    return %c0_i32, %c0_i32_0, %c0_i32_1 : i32, i32, i32
  }
  func.func @transform_4(%arg0: i32) -> (i32, i32, i32) {
    %c0_i32 = arith.constant 0 : i32
    %c0_i32_0 = arith.constant 0 : i32
    %c0_i32_1 = arith.constant 0 : i32
    %c0_i32_2 = arith.constant 0 : i32
    return %c0_i32, %c0_i32_0, %c0_i32_1 : i32, i32, i32
  }
  func.func @transform_5(%arg0: i32) -> (i32, i32, i32) {
    %c0_i32 = arith.constant 0 : i32
    %c0_i32_0 = arith.constant 0 : i32
    %c0_i32_1 = arith.constant 0 : i32
    %c0_i32_2 = arith.constant 0 : i32
    return %c0_i32, %c0_i32_0, %c0_i32_1 : i32, i32, i32
  }
  func.func @transform_6(%arg0: i32) -> (i32, i32, i32) {
    %c0_i32 = arith.constant 0 : i32
    %c0_i32_0 = arith.constant 0 : i32
    %c0_i32_1 = arith.constant 0 : i32
    %c0_i32_2 = arith.constant 0 : i32
    return %c0_i32, %c0_i32_0, %c0_i32_1 : i32, i32, i32
  }
  func.func @transform_7(%arg0: i32) -> (i32, i32, i32) {
    %c0_i32 = arith.constant 0 : i32
    %c0_i32_0 = arith.constant 0 : i32
    %c0_i32_1 = arith.constant 0 : i32
    %c0_i32_2 = arith.constant 0 : i32
    return %c0_i32, %c0_i32_0, %c0_i32_1 : i32, i32, i32
  }
  func.func @transform_8(%arg0: i32) -> (i32, i32, i32) {
    %c0_i32 = arith.constant 0 : i32
    %c0_i32_0 = arith.constant 0 : i32
    %c0_i32_1 = arith.constant 0 : i32
    %c0_i32_2 = arith.constant 0 : i32
    return %c0_i32, %c0_i32_0, %c0_i32_1 : i32, i32, i32
  }
  func.func @transform_9(%arg0: i32) -> (i32, i32) {
    %c0_i32 = arith.constant 0 : i32
    %c0_i32_0 = arith.constant 0 : i32
    %c0_i32_1 = arith.constant 0 : i32
    return %c0_i32, %c0_i32_0 : i32, i32
  }
  func.func @transform_10(%arg0: i32) -> (i32, i32) {
    %c0_i32 = arith.constant 0 : i32
    %c0_i32_0 = arith.constant 0 : i32
    %c0_i32_1 = arith.constant 0 : i32
    return %c0_i32, %c0_i32_0 : i32, i32
  }
  func.func @transform_11(%arg0: i32) -> (i32, i32) {
    %c0_i32 = arith.constant 0 : i32
    %c0_i32_0 = arith.constant 0 : i32
    %c0_i32_1 = arith.constant 0 : i32
    return %c0_i32, %c0_i32_0 : i32, i32
  }
  func.func @transform_12(%arg0: i32) -> (i32, i32) {
    %c0_i32 = arith.constant 0 : i32
    %c0_i32_0 = arith.constant 0 : i32
    %c0_i32_1 = arith.constant 0 : i32
    return %c0_i32, %c0_i32_0 : i32, i32
  }
  func.func @transform_13(%arg0: i32) -> (i32, i32) {
    %c0_i32 = arith.constant 0 : i32
    %c0_i32_0 = arith.constant 0 : i32
    %c0_i32_1 = arith.constant 0 : i32
    return %c0_i32, %c0_i32_0 : i32, i32
  }
}

</mosaic_0001>

<llo_original>
// kernel: base_model_forward.1
$region0: #{base_model_forward.1}
  #allocation0 [shape = 'u32[]', space=smem, size = 0x4, offset = 0x4, fixed_abs, tag = 'smem constant byte address 0x4 - core index']
  #allocation1 [shape = 'u32[144,128]{1,0:T(1,128)}', space=vmem, size = 0x12000, scoped, tag = 'internal scratch']
  %s0 = inlined_call_operand.vmem [shape: f32[16,32], index: 0, kind: input, shape index: {}]
  %s1 = inlined_call_operand.vmem [shape: f32[2,1,8], index: 1, kind: input, shape index: {}]
  %s2 = inlined_call_operand.vmem [shape: f32[2,32,96], index: 2, kind: input, shape index: {}]
  %s3 = inlined_call_operand.vmem [shape: f32[2,1,96], index: 3, kind: input, shape index: {}]
  %s4 = inlined_call_operand.vmem [shape: f32[2,32,32], index: 4, kind: input, shape index: {}]
  %s5 = inlined_call_operand.vmem [shape: f32[2,32,64], index: 5, kind: input, shape index: {}]
  %s6 = inlined_call_operand.vmem [shape: f32[2,1,64], index: 6, kind: input, shape index: {}]
  %s7 = inlined_call_operand.vmem [shape: f32[2,64,32], index: 7, kind: input, shape index: {}]
  %s8 = inlined_call_operand.vmem [shape: f32[2,6,32], index: 8, kind: input, shape index: {}]
  %s9 = inlined_call_operand.vmem [shape: f32[32,32], index: 9, kind: input, shape index: {}]
  %s10 = inlined_call_operand.vmem [shape: f32[32,2], index: 10, kind: input, shape index: {}]
  %s11 = inlined_call_operand.vmem [shape: f32[4,32], index: 11, kind: input, shape index: {}]
  %s12 = inlined_call_operand.hbm [shape: f32[2,2], index: 12, kind: output, shape index: {0}]
  %s13 = inlined_call_operand.hbm [shape: f32[2,32], index: 13, kind: output, shape index: {1}]
  %14 = xla_tuple %s12, %s13
  %s15 = sld [smem:[#allocation0]]
  $region66: #{base_model_forward.1} parent=0
    _
  %s17 = ssub.s32 1, %s15
  %s18 = scalar_select 0, %s17, %s15
  $region1: #{base_model_forward.1} parent=0
    #allocation2 [shape = 'u8[1024]{0}', space=vmem, size = 0x400, scoped, tag = 'output window, operand 0, single buffered']
    #allocation3 [shape = 's32[1]{0}', space=sflag, size = 0x4, scoped, tag = 'scoped memory for base_model_forward.1']
    #allocation4 [shape = 'u8[1024]{0}', space=vmem, size = 0x400, scoped, tag = 'output window, operand 1, single buffered']
    #allocation5 [shape = 's32[1]{0}', space=sflag, size = 0x4, scoped, tag = 'scoped memory for base_model_forward.1']
    %19 = vsyncpa [#allocation3], 0
    %20 = vsyncpa [#allocation5], 0
    // Predicated region
    $region2: #{base_model_forward.1} parent=1 // pred_check
      _
    $region3: #{base_model_forward.1} parent=1 // pred_check_branch
      %22 = sbr.rel (0) target = $region5
    $region4: #{base_model_forward.1} parent=1 // pred_region
      _
    $region5: #{base_model_forward.1} parent=1 // pred_fallthru
      _
    // Predicated region
    $region6: #{base_model_forward.1} parent=1 // pred_check
      _
    $region7: #{base_model_forward.1} parent=1 // pred_check_branch
      %24 = sbr.rel (0) target = $region9
    $region8: #{base_model_forward.1} parent=1 // pred_region
      _
    $region9: #{base_model_forward.1} parent=1 // pred_fallthru
      _
    // Predicated region
    $region10: #{base_model_forward.1} parent=1 // pred_check
      _
    $region11: #{base_model_forward.1} parent=1 // pred_check_branch
      %26 = sbr.rel (0) target = $region13
    $region12: #{base_model_forward.1} parent=1 // pred_region
      _
    $region13: #{base_model_forward.1} parent=1 // pred_fallthru
      _
    // Predicated region
    $region14: #{base_model_forward.1} parent=1 // pred_check
      _
    $region15: #{base_model_forward.1} parent=1 // pred_check_branch
      %28 = sbr.rel (0) target = $region17
    $region16: #{base_model_forward.1} parent=1 // pred_region
      _
    $region17: #{base_model_forward.1} parent=1 // pred_fallthru
      _
    // Predicated region
    $region18: #{base_model_forward.1} parent=1 // pred_check
      _
    $region19: #{base_model_forward.1} parent=1 // pred_check_branch
      %30 = sbr.rel (0) target = $region21
    $region20: #{base_model_forward.1} parent=1 // pred_region
      _
    $region21: #{base_model_forward.1} parent=1 // pred_fallthru
      _
    // Predicated region
    $region22: #{base_model_forward.1} parent=1 // pred_check
      _
    $region23: #{base_model_forward.1} parent=1 // pred_check_branch
      %32 = sbr.rel (0) target = $region25
    $region24: #{base_model_forward.1} parent=1 // pred_region
      _
    $region25: #{base_model_forward.1} parent=1 // pred_fallthru
      _
    // Predicated region
    $region26: #{base_model_forward.1} parent=1 // pred_check
      _
    $region27: #{base_model_forward.1} parent=1 // pred_check_branch
      %34 = sbr.rel (0) target = $region29
    $region28: #{base_model_forward.1} parent=1 // pred_region
      _
    $region29: #{base_model_forward.1} parent=1 // pred_fallthru
      _
    // Predicated region
    $region30: #{base_model_forward.1} parent=1 // pred_check
      _
    $region31: #{base_model_forward.1} parent=1 // pred_check_branch
      %36 = sbr.rel (0) target = $region33
    $region32: #{base_model_forward.1} parent=1 // pred_region
      _
    $region33: #{base_model_forward.1} parent=1 // pred_fallthru
      _
    // Predicated region
    $region34: #{base_model_forward.1} parent=1 // pred_check
      _
    $region35: #{base_model_forward.1} parent=1 // pred_check_branch
      %38 = sbr.rel (0) target = $region37
    $region36: #{base_model_forward.1} parent=1 // pred_region
      _
    $region37: #{base_model_forward.1} parent=1 // pred_fallthru
      _
    // Predicated region
    $region38: #{base_model_forward.1} parent=1 // pred_check
      _
    $region39: #{base_model_forward.1} parent=1 // pred_check_branch
      %40 = sbr.rel (0) target = $region41
    $region40: #{base_model_forward.1} parent=1 // pred_region
      _
    $region41: #{base_model_forward.1} parent=1 // pred_fallthru
      _
    // Predicated region
    $region42: #{base_model_forward.1} parent=1 // pred_check
      _
    $region43: #{base_model_forward.1} parent=1 // pred_check_branch
      %42 = sbr.rel (0) target = $region45
    $region44: #{base_model_forward.1} parent=1 // pred_region
      _
    $region45: #{base_model_forward.1} parent=1 // pred_fallthru
      _
    // Predicated region
    $region46: #{base_model_forward.1} parent=1 // pred_check
      _
    $region47: #{base_model_forward.1} parent=1 // pred_check_branch
      %44 = sbr.rel (0) target = $region49
    $region48: #{base_model_forward.1} parent=1 // pred_region
      _
    $region49: #{base_model_forward.1} parent=1 // pred_fallthru
      _
    %v45 = vld [vmem:[%s11] sm:$0xf]
    %v46 = vld [vmem:[%s0] sm:$0xff]
    %v47 = vld [vmem:[%s0 + $0x8] sm:$0xff]
    %vm48 = vcmask 261120
    %v49 = vsel %vm48, %v46, 0.0
    %50 = vadd.xlane.f32.xlu0 %v49
    %v51 = vpop.xlane.xlu0 %50
    %v52 = vsel %vm48, %v47, 0.0
    %53 = vadd.xlane.f32.xlu0 %v52
    %v54 = vpop.xlane.xlu0 %53
    %v55 = vrcp.pop 32.0
    %v56 = vmul.f32 %v51, %v55
    %v57 = vmul.f32 %v54, %v55
    %v58 = vsub.f32 %v46, %v56
    %v59 = vsub.f32 %v47, %v57
    %v60 = vmul.f32 %v58, %v58
    %v61 = vmul.f32 %v59, %v59
    %v62 = vsel %vm48, %v60, 0.0
    %63 = vadd.xlane.f32.xlu0 %v62
    %v64 = vpop.xlane.xlu0 %63
    %v65 = vsel %vm48, %v61, 0.0
    %66 = vadd.xlane.f32.xlu0 %v65
    %v67 = vpop.xlane.xlu0 %66
    %v68 = vmul.f32 %v64, %v55
    %v69 = vmul.f32 %v67, %v55
    %v70 = vadd.f32 %v68, 1e-05
    %v71 = vadd.f32 %v69, 1e-05
    %v72 = vrsqrt.pop %v70
    %v73 = vrsqrt.pop %v71
    %v74 = vmul.f32 %v58, %v72
    %v75 = vmul.f32 %v59, %v73
    %v76 = vlaneseq
    %v77 = vshrl.u32 %v76, 7
    %v78 = vsub.s32 0, %v77
    %v79 = vrot.slane %v45, %v78
    %v80 = vmul.f32 %v74, %v79
    %v81 = vmul.f32 %v75, %v79
    %v82 = vlaneseq
    %v83 = vshrl.u32 %v82, 7
    %v84 = vsub.s32 1, %v83
    %v85 = vrot.slane %v45, %v84
    %v86 = vadd.f32 %v80, %v85
    %v87 = vadd.f32 %v81, %v85
    %v88 = vld [vmem:[%s1] sm:$0x1]
    %v89 = vld [vmem:[%s1 + $0x1] sm:$0x1]
    %v92 = vlaneseq
    %v93 = vshrl.u32 %v92, 7
    %v94 = vsub.s32 0, %v93
    %v95 = vrot.slane %v88, %v94
    %v96 = vlaneseq
    %v97 = vshrl.u32 %v96, 7
    %v98 = vsub.s32 0, %v97
    %v99 = vrot.slane %v89, %v98
    %v102 = vld [vmem:[%s8] sm:$0x3f]
    %v103 = vld [vmem:[%s2] sm:$0xff]
    %v104 = vld [vmem:[%s2 + $0x8] sm:$0xff]
    %v105 = vld [vmem:[%s2 + $0x10] sm:$0xff]
    %v106 = vld [vmem:[%s2 + $0x18] sm:$0xff]
    %v107 = vld [vmem:[%s3] sm:$0x1]
    %v109 = vlaneseq
    %v110 = vshrl.u32 %v109, 7
    %v111 = vsub.s32 0, %v110
    %v112 = vrot.slane %v107, %v111
    %v115 = vsel %vm48, %v86, 0
    %v118 = vsel %vm48, %v87, 0
    %120 = vmatprep.subr.mxu0 0.0
    %121 = vmatpush1.msra.mxu0 %v103
    %122 = vmatprep.subr.mxu0 0.0
    %123 = vmatpush1.msra.mxu0 %v104
    %124 = vmatprep.subr.mxu0 0.0
    %125 = vmatpush1.msra.mxu0 %v105
    %126 = vmatprep.subr.mxu0 0.0
    %127 = vmatpush1.msra.mxu0 %v106
    %128 = vmatprep.subr.mxu0 0.0
    %129 = vmatpush1.msra.mxu0 0.0
    %130 = vmatprep.subr.mxu0 0.0
    %131 = vmatpush1.msra.mxu0 0.0
    %132 = vmatprep.subr.mxu0 0.0
    %133 = vmatpush1.msra.mxu0 0.0
    %134 = vmatprep.subr.mxu0 0.0
    %135 = vmatpush1.msra.mxu0 0.0
    %136 = vmatprep.subr.mxu0 0.0
    %137 = vmatpush1.msra.mxu0 0.0
    %138 = vmatprep.subr.mxu0 0.0
    %139 = vmatpush1.msra.mxu0 0.0
    %140 = vmatprep.subr.mxu0 0.0
    %141 = vmatpush1.msra.mxu0 0.0
    %142 = vmatprep.subr.mxu0 0.0
    %143 = vmatpush1.msra.mxu0 0.0
    %144 = vmatprep.subr.mxu0 0.0
    %145 = vmatpush1.msra.mxu0 0.0
    %146 = vmatprep.subr.mxu0 0.0
    %147 = vmatpush1.msra.mxu0 0.0
    %148 = vmatprep.subr.mxu0 0.0
    %149 = vmatpush1.msra.mxu0 0.0
    %150 = vmatprep.subr.mxu0 0.0
    %151 = vmatpush1.msra.mxu0 0.0
    %152 = vmatprep.subr.mxu0 0.0
    %153 = vmatpush1.msra.mxu0 0.0
    %154 = vmatprep.subr.mxu0 0.0
    %155 = vmatpush1.msra.mxu0 0.0
    %156 = vmatprep.subr.mxu0 0.0
    %157 = vmatpush1.msra.mxu0 0.0
    %158 = vmatprep.subr.mxu0 0.0
    %159 = vmatpush1.msra.mxu0 0.0
    %160 = vmatprep.subr.mxu0 0.0
    %161 = vmatpush1.msra.mxu0 0.0
    %162 = vmatprep.subr.mxu0 0.0
    %163 = vmatpush1.msra.mxu0 0.0
    %164 = vmatprep.subr.mxu0 0.0
    %165 = vmatpush1.msra.mxu0 0.0
    %166 = vmatprep.subr.mxu0 0.0
    %167 = vmatpush1.msra.mxu0 0.0
    %168 = vmatprep.subr.mxu0 0.0
    %169 = vmatpush1.msra.mxu0 0.0
    %170 = vmatprep.subr.mxu0 0.0
    %171 = vmatpush1.msra.mxu0 0.0
    %172 = vmatprep.subr.mxu0 0.0
    %173 = vmatpush1.msra.mxu0 0.0
    %174 = vmatprep.subr.mxu0 0.0
    %175 = vmatpush1.msra.mxu0 0.0
    %176 = vmatprep.subr.mxu0 0.0
    %177 = vmatpush1.msra.mxu0 0.0
    %178 = vmatprep.subr.mxu0 0.0
    %179 = vmatpush1.msra.mxu0 0.0
    %180 = vmatprep.subr.mxu0 0.0
    %181 = vmatpush1.msra.mxu0 0.0
    %182 = vmatprep.subr.mxu0 0.0
    %183 = vmatpush1.msra.mxu0 0.0
    %184 = vmatprep.mubr.f32.mxu0 0.0
    %185 = vmatmul.mubr.f32.gmra.mrb[0].mxu0 %v115
    %v186 = vpop.f32.mrb[0].mxu0
    %v187 = vadd.f32 %v112, %v186
    %v188 = vpop.f32.mrb[0].mxu0
    %189 = vmatprep.mubr.f32.mxu0 0.0
    %190 = vmatmul.mubr.f32.gmra.mrb[0].mxu0 %v118
    %v191 = vpop.f32.mrb[0].mxu0
    %v192 = vadd.f32 %v112, %v191
    %v193 = vpop.f32.mrb[0].mxu0
    %194 = vdwg.mxu0
    %196 = vrot.lane.b32.xlu0 %v187, 96
    %v197 = vpop.permute.xlu0 %196
    %vm198 = vcmask 64512
    %v199 = vsel %vm198, %v187, 0
    %v201 = vsel %vm198, %v197, 0
    %203 = vmatprep.subr.mxu0 0.0
    %204 = vmatpush1.xpose.msra.mxu0 %v201
    %205 = vmatprep.subr.mxu0 0.0
    %206 = vmatpush1.xpose.msra.mxu0 0.0
    %207 = vmatprep.subr.mxu0 0.0
    %208 = vmatpush1.xpose.msra.mxu0 0.0
    %209 = vmatprep.subr.mxu0 0.0
    %210 = vmatpush1.xpose.msra.mxu0 0.0
    %211 = vmatprep.subr.mxu0 0.0
    %212 = vmatpush1.xpose.msra.mxu0 0.0
    %213 = vmatprep.subr.mxu0 0.0
    %214 = vmatpush1.xpose.msra.mxu0 0.0
    %215 = vmatprep.subr.mxu0 0.0
    %216 = vmatpush1.xpose.msra.mxu0 0.0
    %217 = vmatprep.subr.mxu0 0.0
    %218 = vmatpush1.xpose.msra.mxu0 0.0
    %219 = vmatprep.subr.mxu0 0.0
    %220 = vmatpush1.xpose.msra.mxu0 0.0
    %221 = vmatprep.subr.mxu0 0.0
    %222 = vmatpush1.xpose.msra.mxu0 0.0
    %223 = vmatprep.subr.mxu0 0.0
    %224 = vmatpush1.xpose.msra.mxu0 0.0
    %225 = vmatprep.subr.mxu0 0.0
    %226 = vmatpush1.xpose.msra.mxu0 0.0
    %227 = vmatprep.subr.mxu0 0.0
    %228 = vmatpush1.xpose.msra.mxu0 0.0
    %229 = vmatprep.subr.mxu0 0.0
    %230 = vmatpush1.xpose.msra.mxu0 0.0
    %231 = vmatprep.subr.mxu0 0.0
    %232 = vmatpush1.xpose.msra.mxu0 0.0
    %233 = vmatprep.subr.mxu0 0.0
    %234 = vmatpush1.xpose.msra.mxu0 0.0
    %235 = vmatprep.subr.mxu0 0.0
    %236 = vmatpush1.xpose.msra.mxu0 0.0
    %237 = vmatprep.subr.mxu0 0.0
    %238 = vmatpush1.xpose.msra.mxu0 0.0
    %239 = vmatprep.subr.mxu0 0.0
    %240 = vmatpush1.xpose.msra.mxu0 0.0
    %241 = vmatprep.subr.mxu0 0.0
    %242 = vmatpush1.xpose.msra.mxu0 0.0
    %243 = vmatprep.subr.mxu0 0.0
    %244 = vmatpush1.xpose.msra.mxu0 0.0
    %245 = vmatprep.subr.mxu0 0.0
    %246 = vmatpush1.xpose.msra.mxu0 0.0
    %247 = vmatprep.subr.mxu0 0.0
    %248 = vmatpush1.xpose.msra.mxu0 0.0
    %249 = vmatprep.subr.mxu0 0.0
    %250 = vmatpush1.xpose.msra.mxu0 0.0
    %251 = vmatprep.subr.mxu0 0.0
    %252 = vmatpush1.xpose.msra.mxu0 0.0
    %253 = vmatprep.subr.mxu0 0.0
    %254 = vmatpush1.xpose.msra.mxu0 0.0
    %255 = vmatprep.subr.mxu0 0.0
    %256 = vmatpush1.xpose.msra.mxu0 0.0
    %257 = vmatprep.subr.mxu0 0.0
    %258 = vmatpush1.xpose.msra.mxu0 0.0
    %259 = vmatprep.subr.mxu0 0.0
    %260 = vmatpush1.xpose.msra.mxu0 0.0
    %261 = vmatprep.subr.mxu0 0.0
    %262 = vmatpush1.xpose.msra.mxu0 0.0
    %263 = vmatprep.subr.mxu0 0.0
    %264 = vmatpush1.xpose.msra.mxu0 0.0
    %265 = vmatprep.subr.mxu0 0.0
    %266 = vmatpush1.xpose.msra.mxu0 0.0
    %267 = vmatprep.mubr.f32.mxu0 0.0
    %268 = vmatmul.mubr.f32.gmra.mrb[0].mxu0 %v199
    %v269 = vpop.f32.mrb[0].mxu0
    %v270 = vadd.f32 %v95, %v269
    %v271 = vpop.f32.mrb[0].mxu0
    %272 = vdwg.mxu0
    %274 = vrot.lane.b32.xlu0 %v192, 96
    %v275 = vpop.permute.xlu0 %274
    %v276 = vsel %vm198, %v192, 0
    %v278 = vsel %vm198, %v275, 0
    %280 = vmatprep.subr.mxu0 0.0
    %281 = vmatpush1.xpose.msra.mxu0 %v278
    %282 = vmatprep.subr.mxu0 0.0
    %283 = vmatpush1.xpose.msra.mxu0 0.0
    %284 = vmatprep.subr.mxu0 0.0
    %285 = vmatpush1.xpose.msra.mxu0 0.0
    %286 = vmatprep.subr.mxu0 0.0
    %287 = vmatpush1.xpose.msra.mxu0 0.0
    %288 = vmatprep.subr.mxu0 0.0
    %289 = vmatpush1.xpose.msra.mxu0 0.0
    %290 = vmatprep.subr.mxu0 0.0
    %291 = vmatpush1.xpose.msra.mxu0 0.0
    %292 = vmatprep.subr.mxu0 0.0
    %293 = vmatpush1.xpose.msra.mxu0 0.0
    %294 = vmatprep.subr.mxu0 0.0
    %295 = vmatpush1.xpose.msra.mxu0 0.0
    %296 = vmatprep.subr.mxu0 0.0
    %297 = vmatpush1.xpose.msra.mxu0 0.0
    %298 = vmatprep.subr.mxu0 0.0
    %299 = vmatpush1.xpose.msra.mxu0 0.0
    %300 = vmatprep.subr.mxu0 0.0
    %301 = vmatpush1.xpose.msra.mxu0 0.0
    %302 = vmatprep.subr.mxu0 0.0
    %303 = vmatpush1.xpose.msra.mxu0 0.0
    %304 = vmatprep.subr.mxu0 0.0
    %305 = vmatpush1.xpose.msra.mxu0 0.0
    %306 = vmatprep.subr.mxu0 0.0
    %307 = vmatpush1.xpose.msra.mxu0 0.0
    %308 = vmatprep.subr.mxu0 0.0
    %309 = vmatpush1.xpose.msra.mxu0 0.0
    %310 = vmatprep.subr.mxu0 0.0
    %311 = vmatpush1.xpose.msra.mxu0 0.0
    %312 = vmatprep.subr.mxu0 0.0
    %313 = vmatpush1.xpose.msra.mxu0 0.0
    %314 = vmatprep.subr.mxu0 0.0
    %315 = vmatpush1.xpose.msra.mxu0 0.0
    %316 = vmatprep.subr.mxu0 0.0
    %317 = vmatpush1.xpose.msra.mxu0 0.0
    %318 = vmatprep.subr.mxu0 0.0
    %319 = vmatpush1.xpose.msra.mxu0 0.0
    %320 = vmatprep.subr.mxu0 0.0
    %321 = vmatpush1.xpose.msra.mxu0 0.0
    %322 = vmatprep.subr.mxu0 0.0
    %323 = vmatpush1.xpose.msra.mxu0 0.0
    %324 = vmatprep.subr.mxu0 0.0
    %325 = vmatpush1.xpose.msra.mxu0 0.0
    %326 = vmatprep.subr.mxu0 0.0
    %327 = vmatpush1.xpose.msra.mxu0 0.0
    %328 = vmatprep.subr.mxu0 0.0
    %329 = vmatpush1.xpose.msra.mxu0 0.0
    %330 = vmatprep.subr.mxu0 0.0
    %331 = vmatpush1.xpose.msra.mxu0 0.0
    %332 = vmatprep.subr.mxu0 0.0
    %333 = vmatpush1.xpose.msra.mxu0 0.0
    %334 = vmatprep.subr.mxu0 0.0
    %335 = vmatpush1.xpose.msra.mxu0 0.0
    %336 = vmatprep.subr.mxu0 0.0
    %337 = vmatpush1.xpose.msra.mxu0 0.0
    %338 = vmatprep.subr.mxu0 0.0
    %339 = vmatpush1.xpose.msra.mxu0 0.0
    %340 = vmatprep.subr.mxu0 0.0
    %341 = vmatpush1.xpose.msra.mxu0 0.0
    %342 = vmatprep.subr.mxu0 0.0
    %343 = vmatpush1.xpose.msra.mxu0 0.0
    %344 = vmatprep.mubr.f32.mxu0 0.0
    %345 = vmatmul.mubr.f32.gmra.mrb[0].mxu0 %v276
    %v346 = vpop.f32.mrb[0].mxu0
    %v347 = vadd.f32 %v99, %v346
    %v348 = vpop.f32.mrb[0].mxu0
    %349 = vdwg.mxu0
    %v350 = vsel %vm198, %v270, -inf
    %351 = vmax.xlane.f32.xlu0 %v350
    %v352 = vpop.xlane.xlu0 %351
    %v353 = vsel %vm198, %v347, -inf
    %354 = vmax.xlane.f32.xlu0 %v353
    %v355 = vpop.xlane.xlu0 %354
    %v356 = vsub.f32 %v270, %v352
    %v357 = vsub.f32 %v347, %v355
    %v358 = vmul.f32 %v356, 1.442695
    %v359 = vpow.pop %v358
    %v360 = vmul.f32 %v357, 1.442695
    %v361 = vpow.pop %v360
    %v362 = vsel %vm198, %v359, 0.0
    %363 = vadd.xlane.f32.xlu0 %v362
    %v364 = vpop.xlane.xlu0 %363
    %v365 = vsel %vm198, %v361, 0.0
    %366 = vadd.xlane.f32.xlu0 %v365
    %v367 = vpop.xlane.xlu0 %366
    %v368 = vrcp.pop %v364
    %v369 = vrcp.pop %v367
    %v370 = vmul.f32 %v359, %v368
    %v371 = vmul.f32 %v361, %v369
    %372 = vrot.lane.b32.xlu0 %v187, 64
    %v373 = vpop.permute.xlu0 %372
    %v376 = vsel %vm198, %v370, 0
    %378 = vmatprep.subr.mxu0 0.0
    %379 = vmatpush1.msra.mxu0 %v373
    %380 = vmatprep.subr.mxu0 0.0
    %381 = vmatpush1.msra.mxu0 0.0
    %382 = vmatprep.subr.mxu0 0.0
    %383 = vmatpush1.msra.mxu0 0.0
    %384 = vmatprep.subr.mxu0 0.0
    %385 = vmatpush1.msra.mxu0 0.0
    %386 = vmatprep.subr.mxu0 0.0
    %387 = vmatpush1.msra.mxu0 0.0
    %388 = vmatprep.subr.mxu0 0.0
    %389 = vmatpush1.msra.mxu0 0.0
    %390 = vmatprep.subr.mxu0 0.0
    %391 = vmatpush1.msra.mxu0 0.0
    %392 = vmatprep.subr.mxu0 0.0
    %393 = vmatpush1.msra.mxu0 0.0
    %394 = vmatprep.subr.mxu0 0.0
    %395 = vmatpush1.msra.mxu0 0.0
    %396 = vmatprep.subr.mxu0 0.0
    %397 = vmatpush1.msra.mxu0 0.0
    %398 = vmatprep.subr.mxu0 0.0
    %399 = vmatpush1.msra.mxu0 0.0
    %400 = vmatprep.subr.mxu0 0.0
    %401 = vmatpush1.msra.mxu0 0.0
    %402 = vmatprep.subr.mxu0 0.0
    %403 = vmatpush1.msra.mxu0 0.0
    %404 = vmatprep.subr.mxu0 0.0
    %405 = vmatpush1.msra.mxu0 0.0
    %406 = vmatprep.subr.mxu0 0.0
    %407 = vmatpush1.msra.mxu0 0.0
    %408 = vmatprep.subr.mxu0 0.0
    %409 = vmatpush1.msra.mxu0 0.0
    %410 = vmatprep.subr.mxu0 0.0
    %411 = vmatpush1.msra.mxu0 0.0
    %412 = vmatprep.subr.mxu0 0.0
    %413 = vmatpush1.msra.mxu0 0.0
    %414 = vmatprep.subr.mxu0 0.0
    %415 = vmatpush1.msra.mxu0 0.0
    %416 = vmatprep.subr.mxu0 0.0
    %417 = vmatpush1.msra.mxu0 0.0
    %418 = vmatprep.subr.mxu0 0.0
    %419 = vmatpush1.msra.mxu0 0.0
    %420 = vmatprep.subr.mxu0 0.0
    %421 = vmatpush1.msra.mxu0 0.0
    %422 = vmatprep.subr.mxu0 0.0
    %423 = vmatpush1.msra.mxu0 0.0
    %424 = vmatprep.subr.mxu0 0.0
    %425 = vmatpush1.msra.mxu0 0.0
    %426 = vmatprep.subr.mxu0 0.0
    %427 = vmatpush1.msra.mxu0 0.0
    %428 = vmatprep.subr.mxu0 0.0
    %429 = vmatpush1.msra.mxu0 0.0
    %430 = vmatprep.subr.mxu0 0.0
    %431 = vmatpush1.msra.mxu0 0.0
    %432 = vmatprep.subr.mxu0 0.0
    %433 = vmatpush1.msra.mxu0 0.0
    %434 = vmatprep.subr.mxu0 0.0
    %435 = vmatpush1.msra.mxu0 0.0
    %436 = vmatprep.subr.mxu0 0.0
    %437 = vmatpush1.msra.mxu0 0.0
    %438 = vmatprep.subr.mxu0 0.0
    %439 = vmatpush1.msra.mxu0 0.0
    %440 = vmatprep.subr.mxu0 0.0
    %441 = vmatpush1.msra.mxu0 0.0
    %442 = vmatprep.mubr.f32.mxu0 0.0
    %443 = vmatmul.mubr.f32.gmra.mrb[0].mxu0 %v376
    %v444 = vpop.f32.mrb[0].mxu0
    %v445 = vadd.f32 0.0, %v444
    %v446 = vpop.f32.mrb[0].mxu0
    %447 = vdwg.mxu0
    %448 = vrot.lane.b32.xlu0 %v192, 64
    %v449 = vpop.permute.xlu0 %448
    %v452 = vsel %vm198, %v371, 0
    %454 = vmatprep.subr.mxu0 0.0
    %455 = vmatpush1.msra.mxu0 %v449
    %456 = vmatprep.subr.mxu0 0.0
    %457 = vmatpush1.msra.mxu0 0.0
    %458 = vmatprep.subr.mxu0 0.0
    %459 = vmatpush1.msra.mxu0 0.0
    %460 = vmatprep.subr.mxu0 0.0
    %461 = vmatpush1.msra.mxu0 0.0
    %462 = vmatprep.subr.mxu0 0.0
    %463 = vmatpush1.msra.mxu0 0.0
    %464 = vmatprep.subr.mxu0 0.0
    %465 = vmatpush1.msra.mxu0 0.0
    %466 = vmatprep.subr.mxu0 0.0
    %467 = vmatpush1.msra.mxu0 0.0
    %468 = vmatprep.subr.mxu0 0.0
    %469 = vmatpush1.msra.mxu0 0.0
    %470 = vmatprep.subr.mxu0 0.0
    %471 = vmatpush1.msra.mxu0 0.0
    %472 = vmatprep.subr.mxu0 0.0
    %473 = vmatpush1.msra.mxu0 0.0
    %474 = vmatprep.subr.mxu0 0.0
    %475 = vmatpush1.msra.mxu0 0.0
    %476 = vmatprep.subr.mxu0 0.0
    %477 = vmatpush1.msra.mxu0 0.0
    %478 = vmatprep.subr.mxu0 0.0
    %479 = vmatpush1.msra.mxu0 0.0
    %480 = vmatprep.subr.mxu0 0.0
    %481 = vmatpush1.msra.mxu0 0.0
    %482 = vmatprep.subr.mxu0 0.0
    %483 = vmatpush1.msra.mxu0 0.0
    %484 = vmatprep.subr.mxu0 0.0
    %485 = vmatpush1.msra.mxu0 0.0
    %486 = vmatprep.subr.mxu0 0.0
    %487 = vmatpush1.msra.mxu0 0.0
    %488 = vmatprep.subr.mxu0 0.0
    %489 = vmatpush1.msra.mxu0 0.0
    %490 = vmatprep.subr.mxu0 0.0
    %491 = vmatpush1.msra.mxu0 0.0
    %492 = vmatprep.subr.mxu0 0.0
    %493 = vmatpush1.msra.mxu0 0.0
    %494 = vmatprep.subr.mxu0 0.0
    %495 = vmatpush1.msra.mxu0 0.0
    %496 = vmatprep.subr.mxu0 0.0
    %497 = vmatpush1.msra.mxu0 0.0
    %498 = vmatprep.subr.mxu0 0.0
    %499 = vmatpush1.msra.mxu0 0.0
    %500 = vmatprep.subr.mxu0 0.0
    %501 = vmatpush1.msra.mxu0 0.0
    %502 = vmatprep.subr.mxu0 0.0
    %503 = vmatpush1.msra.mxu0 0.0
    %504 = vmatprep.subr.mxu0 0.0
    %505 = vmatpush1.msra.mxu0 0.0
    %506 = vmatprep.subr.mxu0 0.0
    %507 = vmatpush1.msra.mxu0 0.0
    %508 = vmatprep.subr.mxu0 0.0
    %509 = vmatpush1.msra.mxu0 0.0
    %510 = vmatprep.subr.mxu0 0.0
    %511 = vmatpush1.msra.mxu0 0.0
    %512 = vmatprep.subr.mxu0 0.0
    %513 = vmatpush1.msra.mxu0 0.0
    %514 = vmatprep.subr.mxu0 0.0
    %515 = vmatpush1.msra.mxu0 0.0
    %516 = vmatprep.subr.mxu0 0.0
    %517 = vmatpush1.msra.mxu0 0.0
    %518 = vmatprep.mubr.f32.mxu0 0.0
    %519 = vmatmul.mubr.f32.gmra.mrb[0].mxu0 %v452
    %v520 = vpop.f32.mrb[0].mxu0
    %v521 = vadd.f32 0.0, %v520
    %v522 = vpop.f32.mrb[0].mxu0
    %523 = vdwg.mxu0
    %524 = vrot.lane.b32.xlu0 %v187, 120
    %v525 = vpop.permute.xlu0 %524
    %526 = vrot.lane.b32.xlu0 %v187, 88
    %v527 = vpop.permute.xlu0 %526
    %v528 = vsel %vm198, %v525, 0
    %v530 = vsel %vm198, %v527, 0
    %532 = vmatprep.subr.mxu0 0.0
    %533 = vmatpush1.xpose.msra.mxu0 %v530
    %534 = vmatprep.subr.mxu0 0.0
    %535 = vmatpush1.xpose.msra.mxu0 0.0
    %536 = vmatprep.subr.mxu0 0.0
    %537 = vmatpush1.xpose.msra.mxu0 0.0
    %538 = vmatprep.subr.mxu0 0.0
    %539 = vmatpush1.xpose.msra.mxu0 0.0
    %540 = vmatprep.subr.mxu0 0.0
    %541 = vmatpush1.xpose.msra.mxu0 0.0
    %542 = vmatprep.subr.mxu0 0.0
    %543 = vmatpush1.xpose.msra.mxu0 0.0
    %544 = vmatprep.subr.mxu0 0.0
    %545 = vmatpush1.xpose.msra.mxu0 0.0
    %546 = vmatprep.subr.mxu0 0.0
    %547 = vmatpush1.xpose.msra.mxu0 0.0
    %548 = vmatprep.subr.mxu0 0.0
    %549 = vmatpush1.xpose.msra.mxu0 0.0
    %550 = vmatprep.subr.mxu0 0.0
    %551 = vmatpush1.xpose.msra.mxu0 0.0
    %552 = vmatprep.subr.mxu0 0.0
    %553 = vmatpush1.xpose.msra.mxu0 0.0
    %554 = vmatprep.subr.mxu0 0.0
    %555 = vmatpush1.xpose.msra.mxu0 0.0
    %556 = vmatprep.subr.mxu0 0.0
    %557 = vmatpush1.xpose.msra.mxu0 0.0
    %558 = vmatprep.subr.mxu0 0.0
    %559 = vmatpush1.xpose.msra.mxu0 0.0
    %560 = vmatprep.subr.mxu0 0.0
    %561 = vmatpush1.xpose.msra.mxu0 0.0
    %562 = vmatprep.subr.mxu0 0.0
    %563 = vmatpush1.xpose.msra.mxu0 0.0
    %564 = vmatprep.subr.mxu0 0.0
    %565 = vmatpush1.xpose.msra.mxu0 0.0
    %566 = vmatprep.subr.mxu0 0.0
    %567 = vmatpush1.xpose.msra.mxu0 0.0
    %568 = vmatprep.subr.mxu0 0.0
    %569 = vmatpush1.xpose.msra.mxu0 0.0
    %570 = vmatprep.subr.mxu0 0.0
    %571 = vmatpush1.xpose.msra.mxu0 0.0
    %572 = vmatprep.subr.mxu0 0.0
    %573 = vmatpush1.xpose.msra.mxu0 0.0
    %574 = vmatprep.subr.mxu0 0.0
    %575 = vmatpush1.xpose.msra.mxu0 0.0
    %576 = vmatprep.subr.mxu0 0.0
    %577 = vmatpush1.xpose.msra.mxu0 0.0
    %578 = vmatprep.subr.mxu0 0.0
    %579 = vmatpush1.xpose.msra.mxu0 0.0
    %580 = vmatprep.subr.mxu0 0.0
    %581 = vmatpush1.xpose.msra.mxu0 0.0
    %582 = vmatprep.subr.mxu0 0.0
    %583 = vmatpush1.xpose.msra.mxu0 0.0
    %584 = vmatprep.subr.mxu0 0.0
    %585 = vmatpush1.xpose.msra.mxu0 0.0
    %586 = vmatprep.subr.mxu0 0.0
    %587 = vmatpush1.xpose.msra.mxu0 0.0
    %588 = vmatprep.subr.mxu0 0.0
    %589 = vmatpush1.xpose.msra.mxu0 0.0
    %590 = vmatprep.subr.mxu0 0.0
    %591 = vmatpush1.xpose.msra.mxu0 0.0
    %592 = vmatprep.subr.mxu0 0.0
    %593 = vmatpush1.xpose.msra.mxu0 0.0
    %594 = vmatprep.subr.mxu0 0.0
    %595 = vmatpush1.xpose.msra.mxu0 0.0
    %596 = vmatprep.mubr.f32.mxu0 0.0
    %597 = vmatmul.mubr.f32.gmra.mrb[0].mxu0 %v528
    %v598 = vpop.f32.mrb[0].mxu0
    %v599 = vadd.f32 %v95, %v598
    %v600 = vpop.f32.mrb[0].mxu0
    %601 = vdwg.mxu0
    %602 = vrot.lane.b32.xlu0 %v192, 120
    %v603 = vpop.permute.xlu0 %602
    %604 = vrot.lane.b32.xlu0 %v192, 88
    %v605 = vpop.permute.xlu0 %604
    %v606 = vsel %vm198, %v603, 0
    %v608 = vsel %vm198, %v605, 0
    %610 = vmatprep.subr.mxu0 0.0
    %611 = vmatpush1.xpose.msra.mxu0 %v608
    %612 = vmatprep.subr.mxu0 0.0
    %613 = vmatpush1.xpose.msra.mxu0 0.0
    %614 = vmatprep.subr.mxu0 0.0
    %615 = vmatpush1.xpose.msra.mxu0 0.0
    %616 = vmatprep.subr.mxu0 0.0
    %617 = vmatpush1.xpose.msra.mxu0 0.0
    %618 = vmatprep.subr.mxu0 0.0
    %619 = vmatpush1.xpose.msra.mxu0 0.0
    %620 = vmatprep.subr.mxu0 0.0
    %621 = vmatpush1.xpose.msra.mxu0 0.0
    %622 = vmatprep.subr.mxu0 0.0
    %623 = vmatpush1.xpose.msra.mxu0 0.0
    %624 = vmatprep.subr.mxu0 0.0
    %625 = vmatpush1.xpose.msra.mxu0 0.0
    %626 = vmatprep.subr.mxu0 0.0
    %627 = vmatpush1.xpose.msra.mxu0 0.0
    %628 = vmatprep.subr.mxu0 0.0
    %629 = vmatpush1.xpose.msra.mxu0 0.0
    %630 = vmatprep.subr.mxu0 0.0
    %631 = vmatpush1.xpose.msra.mxu0 0.0
    %632 = vmatprep.subr.mxu0 0.0
    %633 = vmatpush1.xpose.msra.mxu0 0.0
    %634 = vmatprep.subr.mxu0 0.0
    %635 = vmatpush1.xpose.msra.mxu0 0.0
    %636 = vmatprep.subr.mxu0 0.0
    %637 = vmatpush1.xpose.msra.mxu0 0.0
    %638 = vmatprep.subr.mxu0 0.0
    %639 = vmatpush1.xpose.msra.mxu0 0.0
    %640 = vmatprep.subr.mxu0 0.0
    %641 = vmatpush1.xpose.msra.mxu0 0.0
    %642 = vmatprep.subr.mxu0 0.0
    %643 = vmatpush1.xpose.msra.mxu0 0.0
    %644 = vmatprep.subr.mxu0 0.0
    %645 = vmatpush1.xpose.msra.mxu0 0.0
    %646 = vmatprep.subr.mxu0 0.0
    %647 = vmatpush1.xpose.msra.mxu0 0.0
    %648 = vmatprep.subr.mxu0 0.0
    %649 = vmatpush1.xpose.msra.mxu0 0.0
    %650 = vmatprep.subr.mxu0 0.0
    %651 = vmatpush1.xpose.msra.mxu0 0.0
    %652 = vmatprep.subr.mxu0 0.0
    %653 = vmatpush1.xpose.msra.mxu0 0.0
    %654 = vmatprep.subr.mxu0 0.0
    %655 = vmatpush1.xpose.msra.mxu0 0.0
    %656 = vmatprep.subr.mxu0 0.0
    %657 = vmatpush1.xpose.msra.mxu0 0.0
    %658 = vmatprep.subr.mxu0 0.0
    %659 = vmatpush1.xpose.msra.mxu0 0.0
    %660 = vmatprep.subr.mxu0 0.0
    %661 = vmatpush1.xpose.msra.mxu0 0.0
    %662 = vmatprep.subr.mxu0 0.0
    %663 = vmatpush1.xpose.msra.mxu0 0.0
    %664 = vmatprep.subr.mxu0 0.0
    %665 = vmatpush1.xpose.msra.mxu0 0.0
    %666 = vmatprep.subr.mxu0 0.0
    %667 = vmatpush1.xpose.msra.mxu0 0.0
    %668 = vmatprep.subr.mxu0 0.0
    %669 = vmatpush1.xpose.msra.mxu0 0.0
    %670 = vmatprep.subr.mxu0 0.0
    %671 = vmatpush1.xpose.msra.mxu0 0.0
    %672 = vmatprep.subr.mxu0 0.0
    %673 = vmatpush1.xpose.msra.mxu0 0.0
    %674 = vmatprep.mubr.f32.mxu0 0.0
    %675 = vmatmul.mubr.f32.gmra.mrb[0].mxu0 %v606
    %v676 = vpop.f32.mrb[0].mxu0
    %v677 = vadd.f32 %v99, %v676
    %v678 = vpop.f32.mrb[0].mxu0
    %679 = vdwg.mxu0
    %v680 = vsel %vm198, %v599, -inf
    %681 = vmax.xlane.f32.xlu0 %v680
    %v682 = vpop.xlane.xlu0 %681
    %v683 = vsel %vm198, %v677, -inf
    %684 = vmax.xlane.f32.xlu0 %v683
    %v685 = vpop.xlane.xlu0 %684
    %v686 = vsub.f32 %v599, %v682
    %v687 = vsub.f32 %v677, %v685
    %v688 = vmul.f32 %v686, 1.442695
    %v689 = vpow.pop %v688
    %v690 = vmul.f32 %v687, 1.442695
    %v691 = vpow.pop %v690
    %v692 = vsel %vm198, %v689, 0.0
    %693 = vadd.xlane.f32.xlu0 %v692
    %v694 = vpop.xlane.xlu0 %693
    %v695 = vsel %vm198, %v691, 0.0
    %696 = vadd.xlane.f32.xlu0 %v695
    %v697 = vpop.xlane.xlu0 %696
    %v698 = vrcp.pop %v694
    %v699 = vrcp.pop %v697
    %v700 = vmul.f32 %v689, %v698
    %v701 = vmul.f32 %v691, %v699
    %702 = vrot.lane.b32.xlu0 %v187, 56
    %v703 = vpop.permute.xlu0 %702
    %v706 = vsel %vm198, %v700, 0
    %708 = vmatprep.subr.mxu0 0.0
    %709 = vmatpush1.msra.mxu0 %v703
    %710 = vmatprep.subr.mxu0 0.0
    %711 = vmatpush1.msra.mxu0 0.0
    %712 = vmatprep.subr.mxu0 0.0
    %713 = vmatpush1.msra.mxu0 0.0
    %714 = vmatprep.subr.mxu0 0.0
    %715 = vmatpush1.msra.mxu0 0.0
    %716 = vmatprep.subr.mxu0 0.0
    %717 = vmatpush1.msra.mxu0 0.0
    %718 = vmatprep.subr.mxu0 0.0
    %719 = vmatpush1.msra.mxu0 0.0
    %720 = vmatprep.subr.mxu0 0.0
    %721 = vmatpush1.msra.mxu0 0.0
    %722 = vmatprep.subr.mxu0 0.0
    %723 = vmatpush1.msra.mxu0 0.0
    %724 = vmatprep.subr.mxu0 0.0
    %725 = vmatpush1.msra.mxu0 0.0
    %726 = vmatprep.subr.mxu0 0.0
    %727 = vmatpush1.msra.mxu0 0.0
    %728 = vmatprep.subr.mxu0 0.0
    %729 = vmatpush1.msra.mxu0 0.0
    %730 = vmatprep.subr.mxu0 0.0
    %731 = vmatpush1.msra.mxu0 0.0
    %732 = vmatprep.subr.mxu0 0.0
    %733 = vmatpush1.msra.mxu0 0.0
    %734 = vmatprep.subr.mxu0 0.0
    %735 = vmatpush1.msra.mxu0 0.0
    %736 = vmatprep.subr.mxu0 0.0
    %737 = vmatpush1.msra.mxu0 0.0
    %738 = vmatprep.subr.mxu0 0.0
    %739 = vmatpush1.msra.mxu0 0.0
    %740 = vmatprep.subr.mxu0 0.0
    %741 = vmatpush1.msra.mxu0 0.0
    %742 = vmatprep.subr.mxu0 0.0
    %743 = vmatpush1.msra.mxu0 0.0
    %744 = vmatprep.subr.mxu0 0.0
    %745 = vmatpush1.msra.mxu0 0.0
    %746 = vmatprep.subr.mxu0 0.0
    %747 = vmatpush1.msra.mxu0 0.0
    %748 = vmatprep.subr.mxu0 0.0
    %749 = vmatpush1.msra.mxu0 0.0
    %750 = vmatprep.subr.mxu0 0.0
    %751 = vmatpush1.msra.mxu0 0.0
    %752 = vmatprep.subr.mxu0 0.0
    %753 = vmatpush1.msra.mxu0 0.0
    %754 = vmatprep.subr.mxu0 0.0
    %755 = vmatpush1.msra.mxu0 0.0
    %756 = vmatprep.subr.mxu0 0.0
    %757 = vmatpush1.msra.mxu0 0.0
    %758 = vmatprep.subr.mxu0 0.0
    %759 = vmatpush1.msra.mxu0 0.0
    %760 = vmatprep.subr.mxu0 0.0
    %761 = vmatpush1.msra.mxu0 0.0
    %762 = vmatprep.subr.mxu0 0.0
    %763 = vmatpush1.msra.mxu0 0.0
    %764 = vmatprep.subr.mxu0 0.0
    %765 = vmatpush1.msra.mxu0 0.0
    %766 = vmatprep.subr.mxu0 0.0
    %767 = vmatpush1.msra.mxu0 0.0
    %768 = vmatprep.subr.mxu0 0.0
    %769 = vmatpush1.msra.mxu0 0.0
    %770 = vmatprep.subr.mxu0 0.0
    %771 = vmatpush1.msra.mxu0 0.0
    %772 = vmatprep.mubr.f32.mxu0 0.0
    %773 = vmatmul.mubr.f32.gmra.mrb[0].mxu0 %v706
    %v774 = vpop.f32.mrb[0].mxu0
    %v775 = vadd.f32 0.0, %v774
    %v776 = vpop.f32.mrb[0].mxu0
    %777 = vdwg.mxu0
    %778 = vrot.lane.b32.xlu0 %v192, 56
    %v779 = vpop.permute.xlu0 %778
    %v782 = vsel %vm198, %v701, 0
    %784 = vmatprep.subr.mxu0 0.0
    %785 = vmatpush1.msra.mxu0 %v779
    %786 = vmatprep.subr.mxu0 0.0
    %787 = vmatpush1.msra.mxu0 0.0
    %788 = vmatprep.subr.mxu0 0.0
    %789 = vmatpush1.msra.mxu0 0.0
    %790 = vmatprep.subr.mxu0 0.0
    %791 = vmatpush1.msra.mxu0 0.0
    %792 = vmatprep.subr.mxu0 0.0
    %793 = vmatpush1.msra.mxu0 0.0
    %794 = vmatprep.subr.mxu0 0.0
    %795 = vmatpush1.msra.mxu0 0.0
    %796 = vmatprep.subr.mxu0 0.0
    %797 = vmatpush1.msra.mxu0 0.0
    %798 = vmatprep.subr.mxu0 0.0
    %799 = vmatpush1.msra.mxu0 0.0
    %800 = vmatprep.subr.mxu0 0.0
    %801 = vmatpush1.msra.mxu0 0.0
    %802 = vmatprep.subr.mxu0 0.0
    %803 = vmatpush1.msra.mxu0 0.0
    %804 = vmatprep.subr.mxu0 0.0
    %805 = vmatpush1.msra.mxu0 0.0
    %806 = vmatprep.subr.mxu0 0.0
    %807 = vmatpush1.msra.mxu0 0.0
    %808 = vmatprep.subr.mxu0 0.0
    %809 = vmatpush1.msra.mxu0 0.0
    %810 = vmatprep.subr.mxu0 0.0
    %811 = vmatpush1.msra.mxu0 0.0
    %812 = vmatprep.subr.mxu0 0.0
    %813 = vmatpush1.msra.mxu0 0.0
    %814 = vmatprep.subr.mxu0 0.0
    %815 = vmatpush1.msra.mxu0 0.0
    %816 = vmatprep.subr.mxu0 0.0
    %817 = vmatpush1.msra.mxu0 0.0
    %818 = vmatprep.subr.mxu0 0.0
    %819 = vmatpush1.msra.mxu0 0.0
    %820 = vmatprep.subr.mxu0 0.0
    %821 = vmatpush1.msra.mxu0 0.0
    %822 = vmatprep.subr.mxu0 0.0
    %823 = vmatpush1.msra.mxu0 0.0
    %824 = vmatprep.subr.mxu0 0.0
    %825 = vmatpush1.msra.mxu0 0.0
    %826 = vmatprep.subr.mxu0 0.0
    %827 = vmatpush1.msra.mxu0 0.0
    %828 = vmatprep.subr.mxu0 0.0
    %829 = vmatpush1.msra.mxu0 0.0
    %830 = vmatprep.subr.mxu0 0.0
    %831 = vmatpush1.msra.mxu0 0.0
    %832 = vmatprep.subr.mxu0 0.0
    %833 = vmatpush1.msra.mxu0 0.0
    %834 = vmatprep.subr.mxu0 0.0
    %835 = vmatpush1.msra.mxu0 0.0
    %836 = vmatprep.subr.mxu0 0.0
    %837 = vmatpush1.msra.mxu0 0.0
    %838 = vmatprep.subr.mxu0 0.0
    %839 = vmatpush1.msra.mxu0 0.0
    %840 = vmatprep.subr.mxu0 0.0
    %841 = vmatpush1.msra.mxu0 0.0
    %842 = vmatprep.subr.mxu0 0.0
    %843 = vmatpush1.msra.mxu0 0.0
    %844 = vmatprep.subr.mxu0 0.0
    %845 = vmatpush1.msra.mxu0 0.0
    %846 = vmatprep.subr.mxu0 0.0
    %847 = vmatpush1.msra.mxu0 0.0
    %848 = vmatprep.mubr.f32.mxu0 0.0
    %849 = vmatmul.mubr.f32.gmra.mrb[0].mxu0 %v782
    %v850 = vpop.f32.mrb[0].mxu0
    %v851 = vadd.f32 0.0, %v850
    %v852 = vpop.f32.mrb[0].mxu0
    %853 = vdwg.mxu0
    %854 = vrot.lane.b32.xlu0 %v187, 112
    %v855 = vpop.permute.xlu0 %854
    %856 = vrot.lane.b32.xlu0 %v187, 80
    %v857 = vpop.permute.xlu0 %856
    %v858 = vsel %vm198, %v855, 0
    %v860 = vsel %vm198, %v857, 0
    %862 = vmatprep.subr.mxu0 0.0
    %863 = vmatpush1.xpose.msra.mxu0 %v860
    %864 = vmatprep.subr.mxu0 0.0
    %865 = vmatpush1.xpose.msra.mxu0 0.0
    %866 = vmatprep.subr.mxu0 0.0
    %867 = vmatpush1.xpose.msra.mxu0 0.0
    %868 = vmatprep.subr.mxu0 0.0
    %869 = vmatpush1.xpose.msra.mxu0 0.0
    %870 = vmatprep.subr.mxu0 0.0
    %871 = vmatpush1.xpose.msra.mxu0 0.0
    %872 = vmatprep.subr.mxu0 0.0
    %873 = vmatpush1.xpose.msra.mxu0 0.0
    %874 = vmatprep.subr.mxu0 0.0
    %875 = vmatpush1.xpose.msra.mxu0 0.0
    %876 = vmatprep.subr.mxu0 0.0
    %877 = vmatpush1.xpose.msra.mxu0 0.0
    %878 = vmatprep.subr.mxu0 0.0
    %879 = vmatpush1.xpose.msra.mxu0 0.0
    %880 = vmatprep.subr.mxu0 0.0
    %881 = vmatpush1.xpose.msra.mxu0 0.0
    %882 = vmatprep.subr.mxu0 0.0
    %883 = vmatpush1.xpose.msra.mxu0 0.0
    %884 = vmatprep.subr.mxu0 0.0
    %885 = vmatpush1.xpose.msra.mxu0 0.0
    %886 = vmatprep.subr.mxu0 0.0
    %887 = vmatpush1.xpose.msra.mxu0 0.0
    %888 = vmatprep.subr.mxu0 0.0
    %889 = vmatpush1.xpose.msra.mxu0 0.0
    %890 = vmatprep.subr.mxu0 0.0
    %891 = vmatpush1.xpose.msra.mxu0 0.0
    %892 = vmatprep.subr.mxu0 0.0
    %893 = vmatpush1.xpose.msra.mxu0 0.0
    %894 = vmatprep.subr.mxu0 0.0
    %895 = vmatpush1.xpose.msra.mxu0 0.0
    %896 = vmatprep.subr.mxu0 0.0
    %897 = vmatpush1.xpose.msra.mxu0 0.0
    %898 = vmatprep.subr.mxu0 0.0
    %899 = vmatpush1.xpose.msra.mxu0 0.0
    %900 = vmatprep.subr.mxu0 0.0
    %901 = vmatpush1.xpose.msra.mxu0 0.0
    %902 = vmatprep.subr.mxu0 0.0
    %903 = vmatpush1.xpose.msra.mxu0 0.0
    %904 = vmatprep.subr.mxu0 0.0
    %905 = vmatpush1.xpose.msra.mxu0 0.0
    %906 = vmatprep.subr.mxu0 0.0
    %907 = vmatpush1.xpose.msra.mxu0 0.0
    %908 = vmatprep.subr.mxu0 0.0
    %909 = vmatpush1.xpose.msra.mxu0 0.0
    %910 = vmatprep.subr.mxu0 0.0
    %911 = vmatpush1.xpose.msra.mxu0 0.0
    %912 = vmatprep.subr.mxu0 0.0
    %913 = vmatpush1.xpose.msra.mxu0 0.0
    %914 = vmatprep.subr.mxu0 0.0
    %915 = vmatpush1.xpose.msra.mxu0 0.0
    %916 = vmatprep.subr.mxu0 0.0
    %917 = vmatpush1.xpose.msra.mxu0 0.0
    %918 = vmatprep.subr.mxu0 0.0
    %919 = vmatpush1.xpose.msra.mxu0 0.0
    %920 = vmatprep.subr.mxu0 0.0
    %921 = vmatpush1.xpose.msra.mxu0 0.0
    %922 = vmatprep.subr.mxu0 0.0
    %923 = vmatpush1.xpose.msra.mxu0 0.0
    %924 = vmatprep.subr.mxu0 0.0
    %925 = vmatpush1.xpose.msra.mxu0 0.0
    %926 = vmatprep.mubr.f32.mxu0 0.0
    %927 = vmatmul.mubr.f32.gmra.mrb[0].mxu0 %v858
    %v928 = vpop.f32.mrb[0].mxu0
    %v929 = vadd.f32 %v95, %v928
    %v930 = vpop.f32.mrb[0].mxu0
    %931 = vdwg.mxu0
    %932 = vrot.lane.b32.xlu0 %v192, 112
    %v933 = vpop.permute.xlu0 %932
    %934 = vrot.lane.b32.xlu0 %v192, 80
    %v935 = vpop.permute.xlu0 %934
    %v936 = vsel %vm198, %v933, 0
    %v938 = vsel %vm198, %v935, 0
    %940 = vmatprep.subr.mxu0 0.0
    %941 = vmatpush1.xpose.msra.mxu0 %v938
    %942 = vmatprep.subr.mxu0 0.0
    %943 = vmatpush1.xpose.msra.mxu0 0.0
    %944 = vmatprep.subr.mxu0 0.0
    %945 = vmatpush1.xpose.msra.mxu0 0.0
    %946 = vmatprep.subr.mxu0 0.0
    %947 = vmatpush1.xpose.msra.mxu0 0.0
    %948 = vmatprep.subr.mxu0 0.0
    %949 = vmatpush1.xpose.msra.mxu0 0.0
    %950 = vmatprep.subr.mxu0 0.0
    %951 = vmatpush1.xpose.msra.mxu0 0.0
    %952 = vmatprep.subr.mxu0 0.0
    %953 = vmatpush1.xpose.msra.mxu0 0.0
    %954 = vmatprep.subr.mxu0 0.0
    %955 = vmatpush1.xpose.msra.mxu0 0.0
    %956 = vmatprep.subr.mxu0 0.0
    %957 = vmatpush1.xpose.msra.mxu0 0.0
    %958 = vmatprep.subr.mxu0 0.0
    %959 = vmatpush1.xpose.msra.mxu0 0.0
    %960 = vmatprep.subr.mxu0 0.0
    %961 = vmatpush1.xpose.msra.mxu0 0.0
    %962 = vmatprep.subr.mxu0 0.0
    %963 = vmatpush1.xpose.msra.mxu0 0.0
    %964 = vmatprep.subr.mxu0 0.0
    %965 = vmatpush1.xpose.msra.mxu0 0.0
    %966 = vmatprep.subr.mxu0 0.0
    %967 = vmatpush1.xpose.msra.mxu0 0.0
    %968 = vmatprep.subr.mxu0 0.0
    %969 = vmatpush1.xpose.msra.mxu0 0.0
    %970 = vmatprep.subr.mxu0 0.0
    %971 = vmatpush1.xpose.msra.mxu0 0.0
    %972 = vmatprep.subr.mxu0 0.0
    %973 = vmatpush1.xpose.msra.mxu0 0.0
    %974 = vmatprep.subr.mxu0 0.0
    %975 = vmatpush1.xpose.msra.mxu0 0.0
    %976 = vmatprep.subr.mxu0 0.0
    %977 = vmatpush1.xpose.msra.mxu0 0.0
    %978 = vmatprep.subr.mxu0 0.0
    %979 = vmatpush1.xpose.msra.mxu0 0.0
    %980 = vmatprep.subr.mxu0 0.0
    %981 = vmatpush1.xpose.msra.mxu0 0.0
    %982 = vmatprep.subr.mxu0 0.0
    %983 = vmatpush1.xpose.msra.mxu0 0.0
    %984 = vmatprep.subr.mxu0 0.0
    %985 = vmatpush1.xpose.msra.mxu0 0.0
    %986 = vmatprep.subr.mxu0 0.0
    %987 = vmatpush1.xpose.msra.mxu0 0.0
    %988 = vmatprep.subr.mxu0 0.0
    %989 = vmatpush1.xpose.msra.mxu0 0.0
    %990 = vmatprep.subr.mxu0 0.0
    %991 = vmatpush1.xpose.msra.mxu0 0.0
    %992 = vmatprep.subr.mxu0 0.0
    %993 = vmatpush1.xpose.msra.mxu0 0.0
    %994 = vmatprep.subr.mxu0 0.0
    %995 = vmatpush1.xpose.msra.mxu0 0.0
    %996 = vmatprep.subr.mxu0 0.0
    %997 = vmatpush1.xpose.msra.mxu0 0.0
    %998 = vmatprep.subr.mxu0 0.0
    %999 = vmatpush1.xpose.msra.mxu0 0.0
    %1000 = vmatprep.subr.mxu0 0.0
    %1001 = vmatpush1.xpose.msra.mxu0 0.0
    %1002 = vmatprep.subr.mxu0 0.0
    %1003 = vmatpush1.xpose.msra.mxu0 0.0
    %1004 = vmatprep.mubr.f32.mxu0 0.0
    %1005 = vmatmul.mubr.f32.gmra.mrb[0].mxu0 %v936
    %v1006 = vpop.f32.mrb[0].mxu0
    %v1007 = vadd.f32 %v99, %v1006
    %v1008 = vpop.f32.mrb[0].mxu0
    %1009 = vdwg.mxu0
    %v1010 = vsel %vm198, %v929, -inf
    %1011 = vmax.xlane.f32.xlu0 %v1010
    %v1012 = vpop.xlane.xlu0 %1011
    %v1013 = vsel %vm198, %v1007, -inf
    %1014 = vmax.xlane.f32.xlu0 %v1013
    %v1015 = vpop.xlane.xlu0 %1014
    %v1016 = vsub.f32 %v929, %v1012
    %v1017 = vsub.f32 %v1007, %v1015
    %v1018 = vmul.f32 %v1016, 1.442695
    %v1019 = vpow.pop %v1018
    %v1020 = vmul.f32 %v1017, 1.442695
    %v1021 = vpow.pop %v1020
    %v1022 = vsel %vm198, %v1019, 0.0
    %1023 = vadd.xlane.f32.xlu0 %v1022
    %v1024 = vpop.xlane.xlu0 %1023
    %v1025 = vsel %vm198, %v1021, 0.0
    %1026 = vadd.xlane.f32.xlu0 %v1025
    %v1027 = vpop.xlane.xlu0 %1026
    %v1028 = vrcp.pop %v1024
    %v1029 = vrcp.pop %v1027
    %v1030 = vmul.f32 %v1019, %v1028
    %v1031 = vmul.f32 %v1021, %v1029
    %1032 = vrot.lane.b32.xlu0 %v187, 48
    %v1033 = vpop.permute.xlu0 %1032
    %v1036 = vsel %vm198, %v1030, 0
    %1038 = vmatprep.subr.mxu0 0.0
    %1039 = vmatpush1.msra.mxu0 %v1033
    %1040 = vmatprep.subr.mxu0 0.0
    %1041 = vmatpush1.msra.mxu0 0.0
    %1042 = vmatprep.subr.mxu0 0.0
    %1043 = vmatpush1.msra.mxu0 0.0
    %1044 = vmatprep.subr.mxu0 0.0
    %1045 = vmatpush1.msra.mxu0 0.0
    %1046 = vmatprep.subr.mxu0 0.0
    %1047 = vmatpush1.msra.mxu0 0.0
    %1048 = vmatprep.subr.mxu0 0.0
    %1049 = vmatpush1.msra.mxu0 0.0
    %1050 = vmatprep.subr.mxu0 0.0
    %1051 = vmatpush1.msra.mxu0 0.0
    %1052 = vmatprep.subr.mxu0 0.0
    %1053 = vmatpush1.msra.mxu0 0.0
    %1054 = vmatprep.subr.mxu0 0.0
    %1055 = vmatpush1.msra.mxu0 0.0
    %1056 = vmatprep.subr.mxu0 0.0
    %1057 = vmatpush1.msra.mxu0 0.0
    %1058 = vmatprep.subr.mxu0 0.0
    %1059 = vmatpush1.msra.mxu0 0.0
    %1060 = vmatprep.subr.mxu0 0.0
    %1061 = vmatpush1.msra.mxu0 0.0
    %1062 = vmatprep.subr.mxu0 0.0
    %1063 = vmatpush1.msra.mxu0 0.0
    %1064 = vmatprep.subr.mxu0 0.0
    %1065 = vmatpush1.msra.mxu0 0.0
    %1066 = vmatprep.subr.mxu0 0.0
    %1067 = vmatpush1.msra.mxu0 0.0
    %1068 = vmatprep.subr.mxu0 0.0
    %1069 = vmatpush1.msra.mxu0 0.0
    %1070 = vmatprep.subr.mxu0 0.0
    %1071 = vmatpush1.msra.mxu0 0.0
    %1072 = vmatprep.subr.mxu0 0.0
    %1073 = vmatpush1.msra.mxu0 0.0
    %1074 = vmatprep.subr.mxu0 0.0
    %1075 = vmatpush1.msra.mxu0 0.0
    %1076 = vmatprep.subr.mxu0 0.0
    %1077 = vmatpush1.msra.mxu0 0.0
    %1078 = vmatprep.subr.mxu0 0.0
    %1079 = vmatpush1.msra.mxu0 0.0
    %1080 = vmatprep.subr.mxu0 0.0
    %1081 = vmatpush1.msra.mxu0 0.0
    %1082 = vmatprep.subr.mxu0 0.0
    %1083 = vmatpush1.msra.mxu0 0.0
    %1084 = vmatprep.subr.mxu0 0.0
    %1085 = vmatpush1.msra.mxu0 0.0
    %1086 = vmatprep.subr.mxu0 0.0
    %1087 = vmatpush1.msra.mxu0 0.0
    %1088 = vmatprep.subr.mxu0 0.0
    %1089 = vmatpush1.msra.mxu0 0.0
    %1090 = vmatprep.subr.mxu0 0.0
    %1091 = vmatpush1.msra.mxu0 0.0
    %1092 = vmatprep.subr.mxu0 0.0
    %1093 = vmatpush1.msra.mxu0 0.0
    %1094 = vmatprep.subr.mxu0 0.0
    %1095 = vmatpush1.msra.mxu0 0.0
    %1096 = vmatprep.subr.mxu0 0.0
    %1097 = vmatpush1.msra.mxu0 0.0
    %1098 = vmatprep.subr.mxu0 0.0
    %1099 = vmatpush1.msra.mxu0 0.0
    %1100 = vmatprep.subr.mxu0 0.0
    %1101 = vmatpush1.msra.mxu0 0.0
    %1102 = vmatprep.mubr.f32.mxu0 0.0
    %1103 = vmatmul.mubr.f32.gmra.mrb[0].mxu0 %v1036
    %v1104 = vpop.f32.mrb[0].mxu0
    %v1105 = vadd.f32 0.0, %v1104
    %v1106 = vpop.f32.mrb[0].mxu0
    %1107 = vdwg.mxu0
    %1108 = vrot.lane.b32.xlu0 %v192, 48
    %v1109 = vpop.permute.xlu0 %1108
    %v1112 = vsel %vm198, %v1031, 0
    %1114 = vmatprep.subr.mxu0 0.0
    %1115 = vmatpush1.msra.mxu0 %v1109
    %1116 = vmatprep.subr.mxu0 0.0
    %1117 = vmatpush1.msra.mxu0 0.0
    %1118 = vmatprep.subr.mxu0 0.0
    %1119 = vmatpush1.msra.mxu0 0.0
    %1120 = vmatprep.subr.mxu0 0.0
    %1121 = vmatpush1.msra.mxu0 0.0
    %1122 = vmatprep.subr.mxu0 0.0
    %1123 = vmatpush1.msra.mxu0 0.0
    %1124 = vmatprep.subr.mxu0 0.0
    %1125 = vmatpush1.msra.mxu0 0.0
    %1126 = vmatprep.subr.mxu0 0.0
    %1127 = vmatpush1.msra.mxu0 0.0
    %1128 = vmatprep.subr.mxu0 0.0
    %1129 = vmatpush1.msra.mxu0 0.0
    %1130 = vmatprep.subr.mxu0 0.0
    %1131 = vmatpush1.msra.mxu0 0.0
    %1132 = vmatprep.subr.mxu0 0.0
    %1133 = vmatpush1.msra.mxu0 0.0
    %1134 = vmatprep.subr.mxu0 0.0
    %1135 = vmatpush1.msra.mxu0 0.0
    %1136 = vmatprep.subr.mxu0 0.0
    %1137 = vmatpush1.msra.mxu0 0.0
    %1138 = vmatprep.subr.mxu0 0.0
    %1139 = vmatpush1.msra.mxu0 0.0
    %1140 = vmatprep.subr.mxu0 0.0
    %1141 = vmatpush1.msra.mxu0 0.0
    %1142 = vmatprep.subr.mxu0 0.0
    %1143 = vmatpush1.msra.mxu0 0.0
    %1144 = vmatprep.subr.mxu0 0.0
    %1145 = vmatpush1.msra.mxu0 0.0
    %1146 = vmatprep.subr.mxu0 0.0
    %1147 = vmatpush1.msra.mxu0 0.0
    %1148 = vmatprep.subr.mxu0 0.0
    %1149 = vmatpush1.msra.mxu0 0.0
    %1150 = vmatprep.subr.mxu0 0.0
    %1151 = vmatpush1.msra.mxu0 0.0
    %1152 = vmatprep.subr.mxu0 0.0
    %1153 = vmatpush1.msra.mxu0 0.0
    %1154 = vmatprep.subr.mxu0 0.0
    %1155 = vmatpush1.msra.mxu0 0.0
    %1156 = vmatprep.subr.mxu0 0.0
    %1157 = vmatpush1.msra.mxu0 0.0
    %1158 = vmatprep.subr.mxu0 0.0
    %1159 = vmatpush1.msra.mxu0 0.0
    %1160 = vmatprep.subr.mxu0 0.0
    %1161 = vmatpush1.msra.mxu0 0.0
    %1162 = vmatprep.subr.mxu0 0.0
    %1163 = vmatpush1.msra.mxu0 0.0
    %1164 = vmatprep.subr.mxu0 0.0
    %1165 = vmatpush1.msra.mxu0 0.0
    %1166 = vmatprep.subr.mxu0 0.0
    %1167 = vmatpush1.msra.mxu0 0.0
    %1168 = vmatprep.subr.mxu0 0.0
    %1169 = vmatpush1.msra.mxu0 0.0
    %1170 = vmatprep.subr.mxu0 0.0
    %1171 = vmatpush1.msra.mxu0 0.0
    %1172 = vmatprep.subr.mxu0 0.0
    %1173 = vmatpush1.msra.mxu0 0.0
    %1174 = vmatprep.subr.mxu0 0.0
    %1175 = vmatpush1.msra.mxu0 0.0
    %1176 = vmatprep.subr.mxu0 0.0
    %1177 = vmatpush1.msra.mxu0 0.0
    %1178 = vmatprep.mubr.f32.mxu0 0.0
    %1179 = vmatmul.mubr.f32.gmra.mrb[0].mxu0 %v1112
    %v1180 = vpop.f32.mrb[0].mxu0
    %v1181 = vadd.f32 0.0, %v1180
    %v1182 = vpop.f32.mrb[0].mxu0
    %1183 = vdwg.mxu0
    %1184 = vrot.lane.b32.xlu0 %v187, 104
    %v1185 = vpop.permute.xlu0 %1184
    %1186 = vrot.lane.b32.xlu0 %v187, 72
    %v1187 = vpop.permute.xlu0 %1186
    %v1188 = vsel %vm198, %v1185, 0
    %v1190 = vsel %vm198, %v1187, 0
    %1192 = vmatprep.subr.mxu0 0.0
    %1193 = vmatpush1.xpose.msra.mxu0 %v1190
    %1194 = vmatprep.subr.mxu0 0.0
    %1195 = vmatpush1.xpose.msra.mxu0 0.0
    %1196 = vmatprep.subr.mxu0 0.0
    %1197 = vmatpush1.xpose.msra.mxu0 0.0
    %1198 = vmatprep.subr.mxu0 0.0
    %1199 = vmatpush1.xpose.msra.mxu0 0.0
    %1200 = vmatprep.subr.mxu0 0.0
    %1201 = vmatpush1.xpose.msra.mxu0 0.0
    %1202 = vmatprep.subr.mxu0 0.0
    %1203 = vmatpush1.xpose.msra.mxu0 0.0
    %1204 = vmatprep.subr.mxu0 0.0
    %1205 = vmatpush1.xpose.msra.mxu0 0.0
    %1206 = vmatprep.subr.mxu0 0.0
    %1207 = vmatpush1.xpose.msra.mxu0 0.0
    %1208 = vmatprep.subr.mxu0 0.0
    %1209 = vmatpush1.xpose.msra.mxu0 0.0
    %1210 = vmatprep.subr.mxu0 0.0
    %1211 = vmatpush1.xpose.msra.mxu0 0.0
    %1212 = vmatprep.subr.mxu0 0.0
    %1213 = vmatpush1.xpose.msra.mxu0 0.0
    %1214 = vmatprep.subr.mxu0 0.0
    %1215 = vmatpush1.xpose.msra.mxu0 0.0
    %1216 = vmatprep.subr.mxu0 0.0
    %1217 = vmatpush1.xpose.msra.mxu0 0.0
    %1218 = vmatprep.subr.mxu0 0.0
    %1219 = vmatpush1.xpose.msra.mxu0 0.0
    %1220 = vmatprep.subr.mxu0 0.0
    %1221 = vmatpush1.xpose.msra.mxu0 0.0
    %1222 = vmatprep.subr.mxu0 0.0
    %1223 = vmatpush1.xpose.msra.mxu0 0.0
    %1224 = vmatprep.subr.mxu0 0.0
    %1225 = vmatpush1.xpose.msra.mxu0 0.0
    %1226 = vmatprep.subr.mxu0 0.0
    %1227 = vmatpush1.xpose.msra.mxu0 0.0
    %1228 = vmatprep.subr.mxu0 0.0
    %1229 = vmatpush1.xpose.msra.mxu0 0.0
    %1230 = vmatprep.subr.mxu0 0.0
    %1231 = vmatpush1.xpose.msra.mxu0 0.0
    %1232 = vmatprep.subr.mxu0 0.0
    %1233 = vmatpush1.xpose.msra.mxu0 0.0
    %1234 = vmatprep.subr.mxu0 0.0
    %1235 = vmatpush1.xpose.msra.mxu0 0.0
    %1236 = vmatprep.subr.mxu0 0.0
    %1237 = vmatpush1.xpose.msra.mxu0 0.0
    %1238 = vmatprep.subr.mxu0 0.0
    %1239 = vmatpush1.xpose.msra.mxu0 0.0
    %1240 = vmatprep.subr.mxu0 0.0
    %1241 = vmatpush1.xpose.msra.mxu0 0.0
    %1242 = vmatprep.subr.mxu0 0.0
    %1243 = vmatpush1.xpose.msra.mxu0 0.0
    %1244 = vmatprep.subr.mxu0 0.0
    %1245 = vmatpush1.xpose.msra.mxu0 0.0
    %1246 = vmatprep.subr.mxu0 0.0
    %1247 = vmatpush1.xpose.msra.mxu0 0.0
    %1248 = vmatprep.subr.mxu0 0.0
    %1249 = vmatpush1.xpose.msra.mxu0 0.0
    %1250 = vmatprep.subr.mxu0 0.0
    %1251 = vmatpush1.xpose.msra.mxu0 0.0
    %1252 = vmatprep.subr.mxu0 0.0
    %1253 = vmatpush1.xpose.msra.mxu0 0.0
    %1254 = vmatprep.subr.mxu0 0.0
    %1255 = vmatpush1.xpose.msra.mxu0 0.0
    %1256 = vmatprep.mubr.f32.mxu0 0.0
    %1257 = vmatmul.mubr.f32.gmra.mrb[0].mxu0 %v1188
    %v1258 = vpop.f32.mrb[0].mxu0
    %v1259 = vadd.f32 %v95, %v1258
    %v1260 = vpop.f32.mrb[0].mxu0
    %1261 = vdwg.mxu0
    %1262 = vrot.lane.b32.xlu0 %v192, 104
    %v1263 = vpop.permute.xlu0 %1262
    %1264 = vrot.lane.b32.xlu0 %v192, 72
    %v1265 = vpop.permute.xlu0 %1264
    %v1266 = vsel %vm198, %v1263, 0
    %v1268 = vsel %vm198, %v1265, 0
    %1270 = vmatprep.subr.mxu0 0.0
    %1271 = vmatpush1.xpose.msra.mxu0 %v1268
    %1272 = vmatprep.subr.mxu0 0.0
    %1273 = vmatpush1.xpose.msra.mxu0 0.0
    %1274 = vmatprep.subr.mxu0 0.0
    %1275 = vmatpush1.xpose.msra.mxu0 0.0
    %1276 = vmatprep.subr.mxu0 0.0
    %1277 = vmatpush1.xpose.msra.mxu0 0.0
    %1278 = vmatprep.subr.mxu0 0.0
    %1279 = vmatpush1.xpose.msra.mxu0 0.0
    %1280 = vmatprep.subr.mxu0 0.0
    %1281 = vmatpush1.xpose.msra.mxu0 0.0
    %1282 = vmatprep.subr.mxu0 0.0
    %1283 = vmatpush1.xpose.msra.mxu0 0.0
    %1284 = vmatprep.subr.mxu0 0.0
    %1285 = vmatpush1.xpose.msra.mxu0 0.0
    %1286 = vmatprep.subr.mxu0 0.0
    %1287 = vmatpush1.xpose.msra.mxu0 0.0
    %1288 = vmatprep.subr.mxu0 0.0
    %1289 = vmatpush1.xpose.msra.mxu0 0.0
    %1290 = vmatprep.subr.mxu0 0.0
    %1291 = vmatpush1.xpose.msra.mxu0 0.0
    %1292 = vmatprep.subr.mxu0 0.0
    %1293 = vmatpush1.xpose.msra.mxu0 0.0
    %1294 = vmatprep.subr.mxu0 0.0
    %1295 = vmatpush1.xpose.msra.mxu0 0.0
    %1296 = vmatprep.subr.mxu0 0.0
    %1297 = vmatpush1.xpose.msra.mxu0 0.0
    %1298 = vmatprep.subr.mxu0 0.0
    %1299 = vmatpush1.xpose.msra.mxu0 0.0
    %1300 = vmatprep.subr.mxu0 0.0
    %1301 = vmatpush1.xpose.msra.mxu0 0.0
    %1302 = vmatprep.subr.mxu0 0.0
    %1303 = vmatpush1.xpose.msra.mxu0 0.0
    %1304 = vmatprep.subr.mxu0 0.0
    %1305 = vmatpush1.xpose.msra.mxu0 0.0
    %1306 = vmatprep.subr.mxu0 0.0
    %1307 = vmatpush1.xpose.msra.mxu0 0.0
    %1308 = vmatprep.subr.mxu0 0.0
    %1309 = vmatpush1.xpose.msra.mxu0 0.0
    %1310 = vmatprep.subr.mxu0 0.0
    %1311 = vmatpush1.xpose.msra.mxu0 0.0
    %1312 = vmatprep.subr.mxu0 0.0
    %1313 = vmatpush1.xpose.msra.mxu0 0.0
    %1314 = vmatprep.subr.mxu0 0.0
    %1315 = vmatpush1.xpose.msra.mxu0 0.0
    %1316 = vmatprep.subr.mxu0 0.0
    %1317 = vmatpush1.xpose.msra.mxu0 0.0
    %1318 = vmatprep.subr.mxu0 0.0
    %1319 = vmatpush1.xpose.msra.mxu0 0.0
    %1320 = vmatprep.subr.mxu0 0.0
    %1321 = vmatpush1.xpose.msra.mxu0 0.0
    %1322 = vmatprep.subr.mxu0 0.0
    %1323 = vmatpush1.xpose.msra.mxu0 0.0
    %1324 = vmatprep.subr.mxu0 0.0
    %1325 = vmatpush1.xpose.msra.mxu0 0.0
    %1326 = vmatprep.subr.mxu0 0.0
    %1327 = vmatpush1.xpose.msra.mxu0 0.0
    %1328 = vmatprep.subr.mxu0 0.0
    %1329 = vmatpush1.xpose.msra.mxu0 0.0
    %1330 = vmatprep.subr.mxu0 0.0
    %1331 = vmatpush1.xpose.msra.mxu0 0.0
    %1332 = vmatprep.subr.mxu0 0.0
    %1333 = vmatpush1.xpose.msra.mxu0 0.0
    %1334 = vmatprep.mubr.f32.mxu0 0.0
    %1335 = vmatmul.mubr.f32.gmra.mrb[0].mxu0 %v1266
    %v1336 = vpop.f32.mrb[0].mxu0
    %v1337 = vadd.f32 %v99, %v1336
    %v1338 = vpop.f32.mrb[0].mxu0
    %1339 = vdwg.mxu0
    %v1340 = vsel %vm198, %v1259, -inf
    %1341 = vmax.xlane.f32.xlu0 %v1340
    %v1342 = vpop.xlane.xlu0 %1341
    %v1343 = vsel %vm198, %v1337, -inf
    %1344 = vmax.xlane.f32.xlu0 %v1343
    %v1345 = vpop.xlane.xlu0 %1344
    %v1346 = vsub.f32 %v1259, %v1342
    %v1347 = vsub.f32 %v1337, %v1345
    %v1348 = vmul.f32 %v1346, 1.442695
    %v1349 = vpow.pop %v1348
    %v1350 = vmul.f32 %v1347, 1.442695
    %v1351 = vpow.pop %v1350
    %v1352 = vsel %vm198, %v1349, 0.0
    %1353 = vadd.xlane.f32.xlu0 %v1352
    %v1354 = vpop.xlane.xlu0 %1353
    %v1355 = vsel %vm198, %v1351, 0.0
    %1356 = vadd.xlane.f32.xlu0 %v1355
    %v1357 = vpop.xlane.xlu0 %1356
    %v1358 = vrcp.pop %v1354
    %v1359 = vrcp.pop %v1357
    %v1360 = vmul.f32 %v1349, %v1358
    %v1361 = vmul.f32 %v1351, %v1359
    %1362 = vrot.lane.b32.xlu0 %v187, 40
    %v1363 = vpop.permute.xlu0 %1362
    %v1366 = vsel %vm198, %v1360, 0
    %1368 = vmatprep.subr.mxu0 0.0
    %1369 = vmatpush1.msra.mxu0 %v1363
    %1370 = vmatprep.subr.mxu0 0.0
    %1371 = vmatpush1.msra.mxu0 0.0
    %1372 = vmatprep.subr.mxu0 0.0
    %1373 = vmatpush1.msra.mxu0 0.0
    %1374 = vmatprep.subr.mxu0 0.0
    %1375 = vmatpush1.msra.mxu0 0.0
    %1376 = vmatprep.subr.mxu0 0.0
    %1377 = vmatpush1.msra.mxu0 0.0
    %1378 = vmatprep.subr.mxu0 0.0
    %1379 = vmatpush1.msra.mxu0 0.0
    %1380 = vmatprep.subr.mxu0 0.0
    %1381 = vmatpush1.msra.mxu0 0.0
    %1382 = vmatprep.subr.mxu0 0.0
    %1383 = vmatpush1.msra.mxu0 0.0
    %1384 = vmatprep.subr.mxu0 0.0
    %1385 = vmatpush1.msra.mxu0 0.0
    %1386 = vmatprep.subr.mxu0 0.0
    %1387 = vmatpush1.msra.mxu0 0.0
    %1388 = vmatprep.subr.mxu0 0.0
    %1389 = vmatpush1.msra.mxu0 0.0
    %1390 = vmatprep.subr.mxu0 0.0
    %1391 = vmatpush1.msra.mxu0 0.0
    %1392 = vmatprep.subr.mxu0 0.0
    %1393 = vmatpush1.msra.mxu0 0.0
    %1394 = vmatprep.subr.mxu0 0.0
    %1395 = vmatpush1.msra.mxu0 0.0
    %1396 = vmatprep.subr.mxu0 0.0
    %1397 = vmatpush1.msra.mxu0 0.0
    %1398 = vmatprep.subr.mxu0 0.0
    %1399 = vmatpush1.msra.mxu0 0.0
    %1400 = vmatprep.subr.mxu0 0.0
    %1401 = vmatpush1.msra.mxu0 0.0
    %1402 = vmatprep.subr.mxu0 0.0
    %1403 = vmatpush1.msra.mxu0 0.0
    %1404 = vmatprep.subr.mxu0 0.0
    %1405 = vmatpush1.msra.mxu0 0.0
    %1406 = vmatprep.subr.mxu0 0.0
    %1407 = vmatpush1.msra.mxu0 0.0
    %1408 = vmatprep.subr.mxu0 0.0
    %1409 = vmatpush1.msra.mxu0 0.0
    %1410 = vmatprep.subr.mxu0 0.0
    %1411 = vmatpush1.msra.mxu0 0.0
    %1412 = vmatprep.subr.mxu0 0.0
    %1413 = vmatpush1.msra.mxu0 0.0
    %1414 = vmatprep.subr.mxu0 0.0
    %1415 = vmatpush1.msra.mxu0 0.0
    %1416 = vmatprep.subr.mxu0 0.0
    %1417 = vmatpush1.msra.mxu0 0.0
    %1418 = vmatprep.subr.mxu0 0.0
    %1419 = vmatpush1.msra.mxu0 0.0
    %1420 = vmatprep.subr.mxu0 0.0
    %1421 = vmatpush1.msra.mxu0 0.0
    %1422 = vmatprep.subr.mxu0 0.0
    %1423 = vmatpush1.msra.mxu0 0.0
    %1424 = vmatprep.subr.mxu0 0.0
    %1425 = vmatpush1.msra.mxu0 0.0
    %1426 = vmatprep.subr.mxu0 0.0
    %1427 = vmatpush1.msra.mxu0 0.0
    %1428 = vmatprep.subr.mxu0 0.0
    %1429 = vmatpush1.msra.mxu0 0.0
    %1430 = vmatprep.subr.mxu0 0.0
    %1431 = vmatpush1.msra.mxu0 0.0
    %1432 = vmatprep.mubr.f32.mxu0 0.0
    %1433 = vmatmul.mubr.f32.gmra.mrb[0].mxu0 %v1366
    %v1434 = vpop.f32.mrb[0].mxu0
    %v1435 = vadd.f32 0.0, %v1434
    %v1436 = vpop.f32.mrb[0].mxu0
    %1437 = vdwg.mxu0
    %1438 = vrot.lane.b32.xlu0 %v192, 40
    %v1439 = vpop.permute.xlu0 %1438
    %v1442 = vsel %vm198, %v1361, 0
    %1444 = vmatprep.subr.mxu0 0.0
    %1445 = vmatpush1.msra.mxu0 %v1439
    %1446 = vmatprep.subr.mxu0 0.0
    %1447 = vmatpush1.msra.mxu0 0.0
    %1448 = vmatprep.subr.mxu0 0.0
    %1449 = vmatpush1.msra.mxu0 0.0
    %1450 = vmatprep.subr.mxu0 0.0
    %1451 = vmatpush1.msra.mxu0 0.0
    %1452 = vmatprep.subr.mxu0 0.0
    %1453 = vmatpush1.msra.mxu0 0.0
    %1454 = vmatprep.subr.mxu0 0.0
    %1455 = vmatpush1.msra.mxu0 0.0
    %1456 = vmatprep.subr.mxu0 0.0
    %1457 = vmatpush1.msra.mxu0 0.0
    %1458 = vmatprep.subr.mxu0 0.0
    %1459 = vmatpush1.msra.mxu0 0.0
    %1460 = vmatprep.subr.mxu0 0.0
    %1461 = vmatpush1.msra.mxu0 0.0
    %1462 = vmatprep.subr.mxu0 0.0
    %1463 = vmatpush1.msra.mxu0 0.0
    %1464 = vmatprep.subr.mxu0 0.0
    %1465 = vmatpush1.msra.mxu0 0.0
    %1466 = vmatprep.subr.mxu0 0.0
    %1467 = vmatpush1.msra.mxu0 0.0
    %1468 = vmatprep.subr.mxu0 0.0
    %1469 = vmatpush1.msra.mxu0 0.0
    %1470 = vmatprep.subr.mxu0 0.0
    %1471 = vmatpush1.msra.mxu0 0.0
    %1472 = vmatprep.subr.mxu0 0.0
    %1473 = vmatpush1.msra.mxu0 0.0
    %1474 = vmatprep.subr.mxu0 0.0
    %1475 = vmatpush1.msra.mxu0 0.0
    %1476 = vmatprep.subr.mxu0 0.0
    %1477 = vmatpush1.msra.mxu0 0.0
    %1478 = vmatprep.subr.mxu0 0.0
    %1479 = vmatpush1.msra.mxu0 0.0
    %1480 = vmatprep.subr.mxu0 0.0
    %1481 = vmatpush1.msra.mxu0 0.0
    %1482 = vmatprep.subr.mxu0 0.0
    %1483 = vmatpush1.msra.mxu0 0.0
    %1484 = vmatprep.subr.mxu0 0.0
    %1485 = vmatpush1.msra.mxu0 0.0
    %1486 = vmatprep.subr.mxu0 0.0
    %1487 = vmatpush1.msra.mxu0 0.0
    %1488 = vmatprep.subr.mxu0 0.0
    %1489 = vmatpush1.msra.mxu0 0.0
    %1490 = vmatprep.subr.mxu0 0.0
    %1491 = vmatpush1.msra.mxu0 0.0
    %1492 = vmatprep.subr.mxu0 0.0
    %1493 = vmatpush1.msra.mxu0 0.0
    %1494 = vmatprep.subr.mxu0 0.0
    %1495 = vmatpush1.msra.mxu0 0.0
    %1496 = vmatprep.subr.mxu0 0.0
    %1497 = vmatpush1.msra.mxu0 0.0
    %1498 = vmatprep.subr.mxu0 0.0
    %1499 = vmatpush1.msra.mxu0 0.0
    %1500 = vmatprep.subr.mxu0 0.0
    %1501 = vmatpush1.msra.mxu0 0.0
    %1502 = vmatprep.subr.mxu0 0.0
    %1503 = vmatpush1.msra.mxu0 0.0
    %1504 = vmatprep.subr.mxu0 0.0
    %1505 = vmatpush1.msra.mxu0 0.0
    %1506 = vmatprep.subr.mxu0 0.0
    %1507 = vmatpush1.msra.mxu0 0.0
    %1508 = vmatprep.mubr.f32.mxu0 0.0
    %1509 = vmatmul.mubr.f32.gmra.mrb[0].mxu0 %v1442
    %v1510 = vpop.f32.mrb[0].mxu0
    %v1511 = vadd.f32 0.0, %v1510
    %v1512 = vpop.f32.mrb[0].mxu0
    %1513 = vdwg.mxu0
    %1516 = vrot.lane.b32.xlu0 %v775, 8
    %v1517 = vpop.permute.xlu0 %1516
    %1518 = vrot.lane.b32.xlu0 %v851, 8
    %v1519 = vpop.permute.xlu0 %1518
    %1524 = vrot.lane.b32.xlu0 %v1105, 16
    %v1525 = vpop.permute.xlu0 %1524
    %1526 = vrot.lane.b32.xlu0 %v1181, 16
    %v1527 = vpop.permute.xlu0 %1526
    %1532 = vrot.lane.b32.xlu0 %v1435, 24
    %v1533 = vpop.permute.xlu0 %1532
    %1534 = vrot.lane.b32.xlu0 %v1511, 24
    %v1535 = vpop.permute.xlu0 %1534
    %v1538 = vsel %vm198, %v445, %v1517
    %v1539 = vsel %vm198, %v521, %v1519
    %vm1540 = vcmask 130048
    %v1541 = vsel %vm1540, %v1538, %v1525
    %v1542 = vsel %vm1540, %v1539, %v1527
    %vm1543 = vcmask 195584
    %v1544 = vsel %vm1543, %v1541, %v1533
    %v1545 = vsel %vm1543, %v1542, %v1535
    %v1546 = vld [vmem:[%s4] sm:$0xff]
    %v1547 = vld [vmem:[%s4 + $0x8] sm:$0xff]
    %v1548 = vld [vmem:[%s4 + $0x10] sm:$0xff]
    %v1549 = vld [vmem:[%s4 + $0x18] sm:$0xff]
    %v1550 = vlaneseq
    %v1551 = vshrl.u32 %v1550, 7
    %v1552 = vsub.s32 0, %v1551
    %v1553 = vrot.slane %v102, %v1552
    %v1555 = vsel %vm48, %v1544, 0
    %v1558 = vsel %vm48, %v1545, 0
    %1560 = vmatprep.subr.mxu0 0.0
    %1561 = vmatpush1.msra.mxu0 %v1546
    %1562 = vmatprep.subr.mxu0 0.0
    %1563 = vmatpush1.msra.mxu0 %v1547
    %1564 = vmatprep.subr.mxu0 0.0
    %1565 = vmatpush1.msra.mxu0 %v1548
    %1566 = vmatprep.subr.mxu0 0.0
    %1567 = vmatpush1.msra.mxu0 %v1549
    %1568 = vmatprep.subr.mxu0 0.0
    %1569 = vmatpush1.msra.mxu0 0.0
    %1570 = vmatprep.subr.mxu0 0.0
    %1571 = vmatpush1.msra.mxu0 0.0
    %1572 = vmatprep.subr.mxu0 0.0
    %1573 = vmatpush1.msra.mxu0 0.0
    %1574 = vmatprep.subr.mxu0 0.0
    %1575 = vmatpush1.msra.mxu0 0.0
    %1576 = vmatprep.subr.mxu0 0.0
    %1577 = vmatpush1.msra.mxu0 0.0
    %1578 = vmatprep.subr.mxu0 0.0
    %1579 = vmatpush1.msra.mxu0 0.0
    %1580 = vmatprep.subr.mxu0 0.0
    %1581 = vmatpush1.msra.mxu0 0.0
    %1582 = vmatprep.subr.mxu0 0.0
    %1583 = vmatpush1.msra.mxu0 0.0
    %1584 = vmatprep.subr.mxu0 0.0
    %1585 = vmatpush1.msra.mxu0 0.0
    %1586 = vmatprep.subr.mxu0 0.0
    %1587 = vmatpush1.msra.mxu0 0.0
    %1588 = vmatprep.subr.mxu0 0.0
    %1589 = vmatpush1.msra.mxu0 0.0
    %1590 = vmatprep.subr.mxu0 0.0
    %1591 = vmatpush1.msra.mxu0 0.0
    %1592 = vmatprep.subr.mxu0 0.0
    %1593 = vmatpush1.msra.mxu0 0.0
    %1594 = vmatprep.subr.mxu0 0.0
    %1595 = vmatpush1.msra.mxu0 0.0
    %1596 = vmatprep.subr.mxu0 0.0
    %1597 = vmatpush1.msra.mxu0 0.0
    %1598 = vmatprep.subr.mxu0 0.0
    %1599 = vmatpush1.msra.mxu0 0.0
    %1600 = vmatprep.subr.mxu0 0.0
    %1601 = vmatpush1.msra.mxu0 0.0
    %1602 = vmatprep.subr.mxu0 0.0
    %1603 = vmatpush1.msra.mxu0 0.0
    %1604 = vmatprep.subr.mxu0 0.0
    %1605 = vmatpush1.msra.mxu0 0.0
    %1606 = vmatprep.subr.mxu0 0.0
    %1607 = vmatpush1.msra.mxu0 0.0
    %1608 = vmatprep.subr.mxu0 0.0
    %1609 = vmatpush1.msra.mxu0 0.0
    %1610 = vmatprep.subr.mxu0 0.0
    %1611 = vmatpush1.msra.mxu0 0.0
    %1612 = vmatprep.subr.mxu0 0.0
    %1613 = vmatpush1.msra.mxu0 0.0
    %1614 = vmatprep.subr.mxu0 0.0
    %1615 = vmatpush1.msra.mxu0 0.0
    %1616 = vmatprep.subr.mxu0 0.0
    %1617 = vmatpush1.msra.mxu0 0.0
    %1618 = vmatprep.subr.mxu0 0.0
    %1619 = vmatpush1.msra.mxu0 0.0
    %1620 = vmatprep.subr.mxu0 0.0
    %1621 = vmatpush1.msra.mxu0 0.0
    %1622 = vmatprep.subr.mxu0 0.0
    %1623 = vmatpush1.msra.mxu0 0.0
    %1624 = vmatprep.mubr.f32.mxu0 0.0
    %1625 = vmatmul.mubr.f32.gmra.mrb[0].mxu0 %v1555
    %v1626 = vpop.f32.mrb[0].mxu0
    %v1627 = vadd.f32 %v1553, %v1626
    %v1628 = vpop.f32.mrb[0].mxu0
    %1629 = vmatprep.mubr.f32.mxu0 0.0
    %1630 = vmatmul.mubr.f32.gmra.mrb[0].mxu0 %v1558
    %v1631 = vpop.f32.mrb[0].mxu0
    %v1632 = vadd.f32 %v1553, %v1631
    %v1633 = vpop.f32.mrb[0].mxu0
    %1634 = vdwg.mxu0
    %v1635 = vadd.f32 %v1627, %v86
    %v1636 = vadd.f32 %v1632, %v87
    %v1637 = vsel %vm48, %v1635, 0.0
    %1638 = vadd.xlane.f32.xlu0 %v1637
    %v1639 = vpop.xlane.xlu0 %1638
    %v1640 = vsel %vm48, %v1636, 0.0
    %1641 = vadd.xlane.f32.xlu0 %v1640
    %v1642 = vpop.xlane.xlu0 %1641
    %v1643 = vmul.f32 %v1639, %v55
    %v1644 = vmul.f32 %v1642, %v55
    %v1645 = vsub.f32 %v1635, %v1643
    %v1646 = vsub.f32 %v1636, %v1644
    %v1647 = vmul.f32 %v1645, %v1645
    %v1648 = vmul.f32 %v1646, %v1646
    %v1649 = vsel %vm48, %v1647, 0.0
    %1650 = vadd.xlane.f32.xlu0 %v1649
    %v1651 = vpop.xlane.xlu0 %1650
    %v1652 = vsel %vm48, %v1648, 0.0
    %1653 = vadd.xlane.f32.xlu0 %v1652
    %v1654 = vpop.xlane.xlu0 %1653
    %v1655 = vmul.f32 %v1651, %v55
    %v1656 = vmul.f32 %v1654, %v55
    %v1657 = vadd.f32 %v1655, 1e-05
    %v1658 = vadd.f32 %v1656, 1e-05
    %v1659 = vrsqrt.pop %v1657
    %v1660 = vrsqrt.pop %v1658
    %v1661 = vmul.f32 %v1645, %v1659
    %v1662 = vmul.f32 %v1646, %v1660
    %v1663 = vlaneseq
    %v1664 = vshrl.u32 %v1663, 7
    %v1665 = vsub.s32 1, %v1664
    %v1666 = vrot.slane %v102, %v1665
    %v1667 = vmul.f32 %v1661, %v1666
    %v1668 = vmul.f32 %v1662, %v1666
    %v1669 = vlaneseq
    %v1670 = vshrl.u32 %v1669, 7
    %v1671 = vsub.s32 2, %v1670
    %v1672 = vrot.slane %v102, %v1671
    %v1673 = vadd.f32 %v1667, %v1672
    %v1674 = vadd.f32 %v1668, %v1672
    %v1675 = vld [vmem:[%s5] sm:$0xff]
    %v1676 = vld [vmem:[%s5 + $0x8] sm:$0xff]
    %v1677 = vld [vmem:[%s5 + $0x10] sm:$0xff]
    %v1678 = vld [vmem:[%s5 + $0x18] sm:$0xff]
    %v1679 = vld [vmem:[%s6] sm:$0x1]
    %v1681 = vlaneseq
    %v1682 = vshrl.u32 %v1681, 7
    %v1683 = vsub.s32 0, %v1682
    %v1684 = vrot.slane %v1679, %v1683
    %v1687 = vsel %vm48, %v1673, 0
    %v1690 = vsel %vm48, %v1674, 0
    %1692 = vmatprep.subr.mxu0 0.0
    %1693 = vmatpush1.msra.mxu0 %v1675
    %1694 = vmatprep.subr.mxu0 0.0
    %1695 = vmatpush1.msra.mxu0 %v1676
    %1696 = vmatprep.subr.mxu0 0.0
    %1697 = vmatpush1.msra.mxu0 %v1677
    %1698 = vmatprep.subr.mxu0 0.0
    %1699 = vmatpush1.msra.mxu0 %v1678
    %1700 = vmatprep.subr.mxu0 0.0
    %1701 = vmatpush1.msra.mxu0 0.0
    %1702 = vmatprep.subr.mxu0 0.0
    %1703 = vmatpush1.msra.mxu0 0.0
    %1704 = vmatprep.subr.mxu0 0.0
    %1705 = vmatpush1.msra.mxu0 0.0
    %1706 = vmatprep.subr.mxu0 0.0
    %1707 = vmatpush1.msra.mxu0 0.0
    %1708 = vmatprep.subr.mxu0 0.0
    %1709 = vmatpush1.msra.mxu0 0.0
    %1710 = vmatprep.subr.mxu0 0.0
    %1711 = vmatpush1.msra.mxu0 0.0
    %1712 = vmatprep.subr.mxu0 0.0
    %1713 = vmatpush1.msra.mxu0 0.0
    %1714 = vmatprep.subr.mxu0 0.0
    %1715 = vmatpush1.msra.mxu0 0.0
    %1716 = vmatprep.subr.mxu0 0.0
    %1717 = vmatpush1.msra.mxu0 0.0
    %1718 = vmatprep.subr.mxu0 0.0
    %1719 = vmatpush1.msra.mxu0 0.0
    %1720 = vmatprep.subr.mxu0 0.0
    %1721 = vmatpush1.msra.mxu0 0.0
    %1722 = vmatprep.subr.mxu0 0.0
    %1723 = vmatpush1.msra.mxu0 0.0
    %1724 = vmatprep.subr.mxu0 0.0
    %1725 = vmatpush1.msra.mxu0 0.0
    %1726 = vmatprep.subr.mxu0 0.0
    %1727 = vmatpush1.msra.mxu0 0.0
    %1728 = vmatprep.subr.mxu0 0.0
    %1729 = vmatpush1.msra.mxu0 0.0
    %1730 = vmatprep.subr.mxu0 0.0
    %1731 = vmatpush1.msra.mxu0 0.0
    %1732 = vmatprep.subr.mxu0 0.0
    %1733 = vmatpush1.msra.mxu0 0.0
    %1734 = vmatprep.subr.mxu0 0.0
    %1735 = vmatpush1.msra.mxu0 0.0
    %1736 = vmatprep.subr.mxu0 0.0
    %1737 = vmatpush1.msra.mxu0 0.0
    %1738 = vmatprep.subr.mxu0 0.0
    %1739 = vmatpush1.msra.mxu0 0.0
    %1740 = vmatprep.subr.mxu0 0.0
    %1741 = vmatpush1.msra.mxu0 0.0
    %1742 = vmatprep.subr.mxu0 0.0
    %1743 = vmatpush1.msra.mxu0 0.0
    %1744 = vmatprep.subr.mxu0 0.0
    %1745 = vmatpush1.msra.mxu0 0.0
    %1746 = vmatprep.subr.mxu0 0.0
    %1747 = vmatpush1.msra.mxu0 0.0
    %1748 = vmatprep.subr.mxu0 0.0
    %1749 = vmatpush1.msra.mxu0 0.0
    %1750 = vmatprep.subr.mxu0 0.0
    %1751 = vmatpush1.msra.mxu0 0.0
    %1752 = vmatprep.subr.mxu0 0.0
    %1753 = vmatpush1.msra.mxu0 0.0
    %1754 = vmatprep.subr.mxu0 0.0
    %1755 = vmatpush1.msra.mxu0 0.0
    %1756 = vmatprep.mubr.f32.mxu0 0.0
    %1757 = vmatmul.mubr.f32.gmra.mrb[0].mxu0 %v1687
    %v1758 = vpop.f32.mrb[0].mxu0
    %v1759 = vadd.f32 %v1684, %v1758
    %v1760 = vpop.f32.mrb[0].mxu0
    %1761 = vmatprep.mubr.f32.mxu0 0.0
    %1762 = vmatmul.mubr.f32.gmra.mrb[0].mxu0 %v1690
    %v1763 = vpop.f32.mrb[0].mxu0
    %v1764 = vadd.f32 %v1684, %v1763
    %v1765 = vpop.f32.mrb[0].mxu0
    %1766 = vdwg.mxu0
    %v1767 = vmul.f32 %v1759, %v1759
    %v1768 = vmul.f32 %v1764, %v1764
    %v1769 = vmul.f32 %v1759, %v1767
    %v1770 = vmul.f32 %v1764, %v1768
    %v1771 = vmul.f32 %v1769, 0.044715
    %v1772 = vmul.f32 %v1770, 0.044715
    %v1773 = vadd.f32 %v1759, %v1771
    %v1774 = vadd.f32 %v1764, %v1772
    %v1775 = vmul.f32 %v1773, 0.7978846
    %v1776 = vmul.f32 %v1774, 0.7978846
    %v1777 = vtanh.pop %v1775
    %v1778 = vtanh.pop %v1776
    %v1779 = vadd.f32 %v1777, 1.0
    %v1780 = vadd.f32 %v1778, 1.0
    %v1781 = vmul.f32 %v1779, 0.5
    %v1782 = vmul.f32 %v1780, 0.5
    %v1783 = vmul.f32 %v1759, %v1781
    %v1784 = vmul.f32 %v1764, %v1782
    %v1785 = vld [vmem:[%s7] sm:$0xff]
    %v1786 = vld [vmem:[%s7 + $0x8] sm:$0xff]
    %v1787 = vld [vmem:[%s7 + $0x10] sm:$0xff]
    %v1788 = vld [vmem:[%s7 + $0x18] sm:$0xff]
    %v1789 = vld [vmem:[%s7 + $0x20] sm:$0xff]
    %v1790 = vld [vmem:[%s7 + $0x28] sm:$0xff]
    %v1791 = vld [vmem:[%s7 + $0x30] sm:$0xff]
    %v1792 = vld [vmem:[%s7 + $0x38] sm:$0xff]
    %v1793 = vlaneseq
    %v1794 = vshrl.u32 %v1793, 7
    %v1795 = vsub.s32 3, %v1794
    %v1796 = vrot.slane %v102, %v1795
    %vm1797 = vcmask 523264
    %v1799 = vsel %vm1797, %v1783, 0
    %v1802 = vsel %vm1797, %v1784, 0
    %1804 = vmatprep.subr.mxu0 0.0
    %1805 = vmatpush1.msra.mxu0 %v1785
    %1806 = vmatprep.subr.mxu0 0.0
    %1807 = vmatpush1.msra.mxu0 %v1786
    %1808 = vmatprep.subr.mxu0 0.0
    %1809 = vmatpush1.msra.mxu0 %v1787
    %1810 = vmatprep.subr.mxu0 0.0
    %1811 = vmatpush1.msra.mxu0 %v1788
    %1812 = vmatprep.subr.mxu0 0.0
    %1813 = vmatpush1.msra.mxu0 %v1789
    %1814 = vmatprep.subr.mxu0 0.0
    %1815 = vmatpush1.msra.mxu0 %v1790
    %1816 = vmatprep.subr.mxu0 0.0
    %1817 = vmatpush1.msra.mxu0 %v1791
    %1818 = vmatprep.subr.mxu0 0.0
    %1819 = vmatpush1.msra.mxu0 %v1792
    %1820 = vmatprep.subr.mxu0 0.0
    %1821 = vmatpush1.msra.mxu0 0.0
    %1822 = vmatprep.subr.mxu0 0.0
    %1823 = vmatpush1.msra.mxu0 0.0
    %1824 = vmatprep.subr.mxu0 0.0
    %1825 = vmatpush1.msra.mxu0 0.0
    %1826 = vmatprep.subr.mxu0 0.0
    %1827 = vmatpush1.msra.mxu0 0.0
    %1828 = vmatprep.subr.mxu0 0.0
    %1829 = vmatpush1.msra.mxu0 0.0
    %1830 = vmatprep.subr.mxu0 0.0
    %1831 = vmatpush1.msra.mxu0 0.0
    %1832 = vmatprep.subr.mxu0 0.0
    %1833 = vmatpush1.msra.mxu0 0.0
    %1834 = vmatprep.subr.mxu0 0.0
    %1835 = vmatpush1.msra.mxu0 0.0
    %1836 = vmatprep.subr.mxu0 0.0
    %1837 = vmatpush1.msra.mxu0 0.0
    %1838 = vmatprep.subr.mxu0 0.0
    %1839 = vmatpush1.msra.mxu0 0.0
    %1840 = vmatprep.subr.mxu0 0.0
    %1841 = vmatpush1.msra.mxu0 0.0
    %1842 = vmatprep.subr.mxu0 0.0
    %1843 = vmatpush1.msra.mxu0 0.0
    %1844 = vmatprep.subr.mxu0 0.0
    %1845 = vmatpush1.msra.mxu0 0.0
    %1846 = vmatprep.subr.mxu0 0.0
    %1847 = vmatpush1.msra.mxu0 0.0
    %1848 = vmatprep.subr.mxu0 0.0
    %1849 = vmatpush1.msra.mxu0 0.0
    %1850 = vmatprep.subr.mxu0 0.0
    %1851 = vmatpush1.msra.mxu0 0.0
    %1852 = vmatprep.subr.mxu0 0.0
    %1853 = vmatpush1.msra.mxu0 0.0
    %1854 = vmatprep.subr.mxu0 0.0
    %1855 = vmatpush1.msra.mxu0 0.0
    %1856 = vmatprep.subr.mxu0 0.0
    %1857 = vmatpush1.msra.mxu0 0.0
    %1858 = vmatprep.subr.mxu0 0.0
    %1859 = vmatpush1.msra.mxu0 0.0
    %1860 = vmatprep.subr.mxu0 0.0
    %1861 = vmatpush1.msra.mxu0 0.0
    %1862 = vmatprep.subr.mxu0 0.0
    %1863 = vmatpush1.msra.mxu0 0.0
    %1864 = vmatprep.subr.mxu0 0.0
    %1865 = vmatpush1.msra.mxu0 0.0
    %1866 = vmatprep.subr.mxu0 0.0
    %1867 = vmatpush1.msra.mxu0 0.0
    %1868 = vmatprep.mubr.f32.mxu0 0.0
    %1869 = vmatmul.mubr.f32.gmra.mrb[0].mxu0 %v1799
    %v1870 = vpop.f32.mrb[0].mxu0
    %v1871 = vadd.f32 %v1796, %v1870
    %v1872 = vpop.f32.mrb[0].mxu0
    %1873 = vmatprep.mubr.f32.mxu0 0.0
    %1874 = vmatmul.mubr.f32.gmra.mrb[0].mxu0 %v1802
    %v1875 = vpop.f32.mrb[0].mxu0
    %v1876 = vadd.f32 %v1796, %v1875
    %v1877 = vpop.f32.mrb[0].mxu0
    %1878 = vdwg.mxu0
    %v1879 = vadd.f32 %v1871, %v1673
    %v1880 = vadd.f32 %v1876, %v1674
    %v1881 = vsel %vm48, %v1879, 0.0
    %1882 = vadd.xlane.f32.xlu0 %v1881
    %v1883 = vpop.xlane.xlu0 %1882
    %v1884 = vsel %vm48, %v1880, 0.0
    %1885 = vadd.xlane.f32.xlu0 %v1884
    %v1886 = vpop.xlane.xlu0 %1885
    %v1887 = vmul.f32 %v1883, %v55
    %v1888 = vmul.f32 %v1886, %v55
    %v1889 = vsub.f32 %v1879, %v1887
    %v1890 = vsub.f32 %v1880, %v1888
    %v1891 = vmul.f32 %v1889, %v1889
    %v1892 = vmul.f32 %v1890, %v1890
    %v1893 = vsel %vm48, %v1891, 0.0
    %1894 = vadd.xlane.f32.xlu0 %v1893
    %v1895 = vpop.xlane.xlu0 %1894
    %v1896 = vsel %vm48, %v1892, 0.0
    %1897 = vadd.xlane.f32.xlu0 %v1896
    %v1898 = vpop.xlane.xlu0 %1897
    %v1899 = vmul.f32 %v1895, %v55
    %v1900 = vmul.f32 %v1898, %v55
    %v1901 = vadd.f32 %v1899, 1e-05
    %v1902 = vadd.f32 %v1900, 1e-05
    %v1903 = vrsqrt.pop %v1901
    %v1904 = vrsqrt.pop %v1902
    %v1905 = vmul.f32 %v1889, %v1903
    %v1906 = vmul.f32 %v1890, %v1904
    %v1907 = vlaneseq
    %v1908 = vshrl.u32 %v1907, 7
    %v1909 = vsub.s32 4, %v1908
    %v1910 = vrot.slane %v102, %v1909
    %v1911 = vmul.f32 %v1905, %v1910
    %v1912 = vmul.f32 %v1906, %v1910
    %v1913 = vlaneseq
    %v1914 = vshrl.u32 %v1913, 7
    %v1915 = vsub.s32 5, %v1914
    %v1916 = vrot.slane %v102, %v1915
    %v1917 = vadd.f32 %v1911, %v1916
    %v1918 = vadd.f32 %v1912, %v1916
    %s1919 = scalar_lea.vmem %s8, 8
    %v1920 = vld [vmem:[%s1919] sm:$0x3f]
    %s1921 = scalar_lea.vmem %s2, 32
    %v1922 = vld [vmem:[%s1921] sm:$0xff]
    %v1923 = vld [vmem:[%s1921 + $0x8] sm:$0xff]
    %v1924 = vld [vmem:[%s1921 + $0x10] sm:$0xff]
    %v1925 = vld [vmem:[%s1921 + $0x18] sm:$0xff]
    %s1926 = scalar_lea.vmem %s3, 1
    %v1927 = vld [vmem:[%s1926] sm:$0x1]
    %v1929 = vlaneseq
    %v1930 = vshrl.u32 %v1929, 7
    %v1931 = vsub.s32 0, %v1930
    %v1932 = vrot.slane %v1927, %v1931
    %v1935 = vsel %vm48, %v1917, 0
    %v1938 = vsel %vm48, %v1918, 0
    %1940 = vmatprep.subr.mxu0 0.0
    %1941 = vmatpush1.msra.mxu0 %v1922
    %1942 = vmatprep.subr.mxu0 0.0
    %1943 = vmatpush1.msra.mxu0 %v1923
    %1944 = vmatprep.subr.mxu0 0.0
    %1945 = vmatpush1.msra.mxu0 %v1924
    %1946 = vmatprep.subr.mxu0 0.0
    %1947 = vmatpush1.msra.mxu0 %v1925
    %1948 = vmatprep.subr.mxu0 0.0
    %1949 = vmatpush1.msra.mxu0 0.0
    %1950 = vmatprep.subr.mxu0 0.0
    %1951 = vmatpush1.msra.mxu0 0.0
    %1952 = vmatprep.subr.mxu0 0.0
    %1953 = vmatpush1.msra.mxu0 0.0
    %1954 = vmatprep.subr.mxu0 0.0
    %1955 = vmatpush1.msra.mxu0 0.0
    %1956 = vmatprep.subr.mxu0 0.0
    %1957 = vmatpush1.msra.mxu0 0.0
    %1958 = vmatprep.subr.mxu0 0.0
    %1959 = vmatpush1.msra.mxu0 0.0
    %1960 = vmatprep.subr.mxu0 0.0
    %1961 = vmatpush1.msra.mxu0 0.0
    %1962 = vmatprep.subr.mxu0 0.0
    %1963 = vmatpush1.msra.mxu0 0.0
    %1964 = vmatprep.subr.mxu0 0.0
    %1965 = vmatpush1.msra.mxu0 0.0
    %1966 = vmatprep.subr.mxu0 0.0
    %1967 = vmatpush1.msra.mxu0 0.0
    %1968 = vmatprep.subr.mxu0 0.0
    %1969 = vmatpush1.msra.mxu0 0.0
    %1970 = vmatprep.subr.mxu0 0.0
    %1971 = vmatpush1.msra.mxu0 0.0
    %1972 = vmatprep.subr.mxu0 0.0
    %1973 = vmatpush1.msra.mxu0 0.0
    %1974 = vmatprep.subr.mxu0 0.0
    %1975 = vmatpush1.msra.mxu0 0.0
    %1976 = vmatprep.subr.mxu0 0.0
    %1977 = vmatpush1.msra.mxu0 0.0
    %1978 = vmatprep.subr.mxu0 0.0
    %1979 = vmatpush1.msra.mxu0 0.0
    %1980 = vmatprep.subr.mxu0 0.0
    %1981 = vmatpush1.msra.mxu0 0.0
    %1982 = vmatprep.subr.mxu0 0.0
    %1983 = vmatpush1.msra.mxu0 0.0
    %1984 = vmatprep.subr.mxu0 0.0
    %1985 = vmatpush1.msra.mxu0 0.0
    %1986 = vmatprep.subr.mxu0 0.0
    %1987 = vmatpush1.msra.mxu0 0.0
    %1988 = vmatprep.subr.mxu0 0.0
    %1989 = vmatpush1.msra.mxu0 0.0
    %1990 = vmatprep.subr.mxu0 0.0
    %1991 = vmatpush1.msra.mxu0 0.0
    %1992 = vmatprep.subr.mxu0 0.0
    %1993 = vmatpush1.msra.mxu0 0.0
    %1994 = vmatprep.subr.mxu0 0.0
    %1995 = vmatpush1.msra.mxu0 0.0
    %1996 = vmatprep.subr.mxu0 0.0
    %1997 = vmatpush1.msra.mxu0 0.0
    %1998 = vmatprep.subr.mxu0 0.0
    %1999 = vmatpush1.msra.mxu0 0.0
    %2000 = vmatprep.subr.mxu0 0.0
    %2001 = vmatpush1.msra.mxu0 0.0
    %2002 = vmatprep.subr.mxu0 0.0
    %2003 = vmatpush1.msra.mxu0 0.0
    %2004 = vmatprep.mubr.f32.mxu0 0.0
    %2005 = vmatmul.mubr.f32.gmra.mrb[0].mxu0 %v1935
    %v2006 = vpop.f32.mrb[0].mxu0
    %v2007 = vadd.f32 %v1932, %v2006
    %v2008 = vpop.f32.mrb[0].mxu0
    %2009 = vmatprep.mubr.f32.mxu0 0.0
    %2010 = vmatmul.mubr.f32.gmra.mrb[0].mxu0 %v1938
    %v2011 = vpop.f32.mrb[0].mxu0
    %v2012 = vadd.f32 %v1932, %v2011
    %v2013 = vpop.f32.mrb[0].mxu0
    %2014 = vdwg.mxu0
    %2016 = vrot.lane.b32.xlu0 %v2007, 96
    %v2017 = vpop.permute.xlu0 %2016
    %v2018 = vsel %vm198, %v2007, 0
    %v2020 = vsel %vm198, %v2017, 0
    %2022 = vmatprep.subr.mxu0 0.0
    %2023 = vmatpush1.xpose.msra.mxu0 %v2020
    %2024 = vmatprep.subr.mxu0 0.0
    %2025 = vmatpush1.xpose.msra.mxu0 0.0
    %2026 = vmatprep.subr.mxu0 0.0
    %2027 = vmatpush1.xpose.msra.mxu0 0.0
    %2028 = vmatprep.subr.mxu0 0.0
    %2029 = vmatpush1.xpose.msra.mxu0 0.0
    %2030 = vmatprep.subr.mxu0 0.0
    %2031 = vmatpush1.xpose.msra.mxu0 0.0
    %2032 = vmatprep.subr.mxu0 0.0
    %2033 = vmatpush1.xpose.msra.mxu0 0.0
    %2034 = vmatprep.subr.mxu0 0.0
    %2035 = vmatpush1.xpose.msra.mxu0 0.0
    %2036 = vmatprep.subr.mxu0 0.0
    %2037 = vmatpush1.xpose.msra.mxu0 0.0
    %2038 = vmatprep.subr.mxu0 0.0
    %2039 = vmatpush1.xpose.msra.mxu0 0.0
    %2040 = vmatprep.subr.mxu0 0.0
    %2041 = vmatpush1.xpose.msra.mxu0 0.0
    %2042 = vmatprep.subr.mxu0 0.0
    %2043 = vmatpush1.xpose.msra.mxu0 0.0
    %2044 = vmatprep.subr.mxu0 0.0
    %2045 = vmatpush1.xpose.msra.mxu0 0.0
    %2046 = vmatprep.subr.mxu0 0.0
    %2047 = vmatpush1.xpose.msra.mxu0 0.0
    %2048 = vmatprep.subr.mxu0 0.0
    %2049 = vmatpush1.xpose.msra.mxu0 0.0
    %2050 = vmatprep.subr.mxu0 0.0
    %2051 = vmatpush1.xpose.msra.mxu0 0.0
    %2052 = vmatprep.subr.mxu0 0.0
    %2053 = vmatpush1.xpose.msra.mxu0 0.0
    %2054 = vmatprep.subr.mxu0 0.0
    %2055 = vmatpush1.xpose.msra.mxu0 0.0
    %2056 = vmatprep.subr.mxu0 0.0
    %2057 = vmatpush1.xpose.msra.mxu0 0.0
    %2058 = vmatprep.subr.mxu0 0.0
    %2059 = vmatpush1.xpose.msra.mxu0 0.0
    %2060 = vmatprep.subr.mxu0 0.0
    %2061 = vmatpush1.xpose.msra.mxu0 0.0
    %2062 = vmatprep.subr.mxu0 0.0
    %2063 = vmatpush1.xpose.msra.mxu0 0.0
    %2064 = vmatprep.subr.mxu0 0.0
    %2065 = vmatpush1.xpose.msra.mxu0 0.0
    %2066 = vmatprep.subr.mxu0 0.0
    %2067 = vmatpush1.xpose.msra.mxu0 0.0
    %2068 = vmatprep.subr.mxu0 0.0
    %2069 = vmatpush1.xpose.msra.mxu0 0.0
    %2070 = vmatprep.subr.mxu0 0.0
    %2071 = vmatpush1.xpose.msra.mxu0 0.0
    %2072 = vmatprep.subr.mxu0 0.0
    %2073 = vmatpush1.xpose.msra.mxu0 0.0
    %2074 = vmatprep.subr.mxu0 0.0
    %2075 = vmatpush1.xpose.msra.mxu0 0.0
    %2076 = vmatprep.subr.mxu0 0.0
    %2077 = vmatpush1.xpose.msra.mxu0 0.0
    %2078 = vmatprep.subr.mxu0 0.0
    %2079 = vmatpush1.xpose.msra.mxu0 0.0
    %2080 = vmatprep.subr.mxu0 0.0
    %2081 = vmatpush1.xpose.msra.mxu0 0.0
    %2082 = vmatprep.subr.mxu0 0.0
    %2083 = vmatpush1.xpose.msra.mxu0 0.0
    %2084 = vmatprep.subr.mxu0 0.0
    %2085 = vmatpush1.xpose.msra.mxu0 0.0
    %2086 = vmatprep.mubr.f32.mxu0 0.0
    %2087 = vmatmul.mubr.f32.gmra.mrb[0].mxu0 %v2018
    %v2088 = vpop.f32.mrb[0].mxu0
    %v2089 = vadd.f32 %v95, %v2088
    %v2090 = vpop.f32.mrb[0].mxu0
    %2091 = vdwg.mxu0
    %2093 = vrot.lane.b32.xlu0 %v2012, 96
    %v2094 = vpop.permute.xlu0 %2093
    %v2095 = vsel %vm198, %v2012, 0
    %v2097 = vsel %vm198, %v2094, 0
    %2099 = vmatprep.subr.mxu0 0.0
    %2100 = vmatpush1.xpose.msra.mxu0 %v2097
    %2101 = vmatprep.subr.mxu0 0.0
    %2102 = vmatpush1.xpose.msra.mxu0 0.0
    %2103 = vmatprep.subr.mxu0 0.0
    %2104 = vmatpush1.xpose.msra.mxu0 0.0
    %2105 = vmatprep.subr.mxu0 0.0
    %2106 = vmatpush1.xpose.msra.mxu0 0.0
    %2107 = vmatprep.subr.mxu0 0.0
    %2108 = vmatpush1.xpose.msra.mxu0 0.0
    %2109 = vmatprep.subr.mxu0 0.0
    %2110 = vmatpush1.xpose.msra.mxu0 0.0
    %2111 = vmatprep.subr.mxu0 0.0
    %2112 = vmatpush1.xpose.msra.mxu0 0.0
    %2113 = vmatprep.subr.mxu0 0.0
    %2114 = vmatpush1.xpose.msra.mxu0 0.0
    %2115 = vmatprep.subr.mxu0 0.0
    %2116 = vmatpush1.xpose.msra.mxu0 0.0
    %2117 = vmatprep.subr.mxu0 0.0
    %2118 = vmatpush1.xpose.msra.mxu0 0.0
    %2119 = vmatprep.subr.mxu0 0.0
    %2120 = vmatpush1.xpose.msra.mxu0 0.0
    %2121 = vmatprep.subr.mxu0 0.0
    %2122 = vmatpush1.xpose.msra.mxu0 0.0
    %2123 = vmatprep.subr.mxu0 0.0
    %2124 = vmatpush1.xpose.msra.mxu0 0.0
    %2125 = vmatprep.subr.mxu0 0.0
    %2126 = vmatpush1.xpose.msra.mxu0 0.0
    %2127 = vmatprep.subr.mxu0 0.0
    %2128 = vmatpush1.xpose.msra.mxu0 0.0
    %2129 = vmatprep.subr.mxu0 0.0
    %2130 = vmatpush1.xpose.msra.mxu0 0.0
    %2131 = vmatprep.subr.mxu0 0.0
    %2132 = vmatpush1.xpose.msra.mxu0 0.0
    %2133 = vmatprep.subr.mxu0 0.0
    %2134 = vmatpush1.xpose.msra.mxu0 0.0
    %2135 = vmatprep.subr.mxu0 0.0
    %2136 = vmatpush1.xpose.msra.mxu0 0.0
    %2137 = vmatprep.subr.mxu0 0.0
    %2138 = vmatpush1.xpose.msra.mxu0 0.0
    %2139 = vmatprep.subr.mxu0 0.0
    %2140 = vmatpush1.xpose.msra.mxu0 0.0
    %2141 = vmatprep.subr.mxu0 0.0
    %2142 = vmatpush1.xpose.msra.mxu0 0.0
    %2143 = vmatprep.subr.mxu0 0.0
    %2144 = vmatpush1.xpose.msra.mxu0 0.0
    %2145 = vmatprep.subr.mxu0 0.0
    %2146 = vmatpush1.xpose.msra.mxu0 0.0
    %2147 = vmatprep.subr.mxu0 0.0
    %2148 = vmatpush1.xpose.msra.mxu0 0.0
    %2149 = vmatprep.subr.mxu0 0.0
    %2150 = vmatpush1.xpose.msra.mxu0 0.0
    %2151 = vmatprep.subr.mxu0 0.0
    %2152 = vmatpush1.xpose.msra.mxu0 0.0
    %2153 = vmatprep.subr.mxu0 0.0
    %2154 = vmatpush1.xpose.msra.mxu0 0.0
    %2155 = vmatprep.subr.mxu0 0.0
    %2156 = vmatpush1.xpose.msra.mxu0 0.0
    %2157 = vmatprep.subr.mxu0 0.0
    %2158 = vmatpush1.xpose.msra.mxu0 0.0
    %2159 = vmatprep.subr.mxu0 0.0
    %2160 = vmatpush1.xpose.msra.mxu0 0.0
    %2161 = vmatprep.subr.mxu0 0.0
    %2162 = vmatpush1.xpose.msra.mxu0 0.0
    %2163 = vmatprep.mubr.f32.mxu0 0.0
    %2164 = vmatmul.mubr.f32.gmra.mrb[0].mxu0 %v2095
    %v2165 = vpop.f32.mrb[0].mxu0
    %v2166 = vadd.f32 %v99, %v2165
    %v2167 = vpop.f32.mrb[0].mxu0
    %2168 = vdwg.mxu0
    %v2169 = vsel %vm198, %v2089, -inf
    %2170 = vmax.xlane.f32.xlu0 %v2169
    %v2171 = vpop.xlane.xlu0 %2170
    %v2172 = vsel %vm198, %v2166, -inf
    %2173 = vmax.xlane.f32.xlu0 %v2172
    %v2174 = vpop.xlane.xlu0 %2173
    %v2175 = vsub.f32 %v2089, %v2171
    %v2176 = vsub.f32 %v2166, %v2174
    %v2177 = vmul.f32 %v2175, 1.442695
    %v2178 = vpow.pop %v2177
    %v2179 = vmul.f32 %v2176, 1.442695
    %v2180 = vpow.pop %v2179
    %v2181 = vsel %vm198, %v2178, 0.0
    %2182 = vadd.xlane.f32.xlu0 %v2181
    %v2183 = vpop.xlane.xlu0 %2182
    %v2184 = vsel %vm198, %v2180, 0.0
    %2185 = vadd.xlane.f32.xlu0 %v2184
    %v2186 = vpop.xlane.xlu0 %2185
    %v2187 = vrcp.pop %v2183
    %v2188 = vrcp.pop %v2186
    %v2189 = vmul.f32 %v2178, %v2187
    %v2190 = vmul.f32 %v2180, %v2188
    %2191 = vrot.lane.b32.xlu0 %v2007, 64
    %v2192 = vpop.permute.xlu0 %2191
    %v2195 = vsel %vm198, %v2189, 0
    %2197 = vmatprep.subr.mxu0 0.0
    %2198 = vmatpush1.msra.mxu0 %v2192
    %2199 = vmatprep.subr.mxu0 0.0
    %2200 = vmatpush1.msra.mxu0 0.0
    %2201 = vmatprep.subr.mxu0 0.0
    %2202 = vmatpush1.msra.mxu0 0.0
    %2203 = vmatprep.subr.mxu0 0.0
    %2204 = vmatpush1.msra.mxu0 0.0
    %2205 = vmatprep.subr.mxu0 0.0
    %2206 = vmatpush1.msra.mxu0 0.0
    %2207 = vmatprep.subr.mxu0 0.0
    %2208 = vmatpush1.msra.mxu0 0.0
    %2209 = vmatprep.subr.mxu0 0.0
    %2210 = vmatpush1.msra.mxu0 0.0
    %2211 = vmatprep.subr.mxu0 0.0
    %2212 = vmatpush1.msra.mxu0 0.0
    %2213 = vmatprep.subr.mxu0 0.0
    %2214 = vmatpush1.msra.mxu0 0.0
    %2215 = vmatprep.subr.mxu0 0.0
    %2216 = vmatpush1.msra.mxu0 0.0
    %2217 = vmatprep.subr.mxu0 0.0
    %2218 = vmatpush1.msra.mxu0 0.0
    %2219 = vmatprep.subr.mxu0 0.0
    %2220 = vmatpush1.msra.mxu0 0.0
    %2221 = vmatprep.subr.mxu0 0.0
    %2222 = vmatpush1.msra.mxu0 0.0
    %2223 = vmatprep.subr.mxu0 0.0
    %2224 = vmatpush1.msra.mxu0 0.0
    %2225 = vmatprep.subr.mxu0 0.0
    %2226 = vmatpush1.msra.mxu0 0.0
    %2227 = vmatprep.subr.mxu0 0.0
    %2228 = vmatpush1.msra.mxu0 0.0
    %2229 = vmatprep.subr.mxu0 0.0
    %2230 = vmatpush1.msra.mxu0 0.0
    %2231 = vmatprep.subr.mxu0 0.0
    %2232 = vmatpush1.msra.mxu0 0.0
    %2233 = vmatprep.subr.mxu0 0.0
    %2234 = vmatpush1.msra.mxu0 0.0
    %2235 = vmatprep.subr.mxu0 0.0
    %2236 = vmatpush1.msra.mxu0 0.0
    %2237 = vmatprep.subr.mxu0 0.0
    %2238 = vmatpush1.msra.mxu0 0.0
    %2239 = vmatprep.subr.mxu0 0.0
    %2240 = vmatpush1.msra.mxu0 0.0
    %2241 = vmatprep.subr.mxu0 0.0
    %2242 = vmatpush1.msra.mxu0 0.0
    %2243 = vmatprep.subr.mxu0 0.0
    %2244 = vmatpush1.msra.mxu0 0.0
    %2245 = vmatprep.subr.mxu0 0.0
    %2246 = vmatpush1.msra.mxu0 0.0
    %2247 = vmatprep.subr.mxu0 0.0
    %2248 = vmatpush1.msra.mxu0 0.0
    %2249 = vmatprep.subr.mxu0 0.0
    %2250 = vmatpush1.msra.mxu0 0.0
    %2251 = vmatprep.subr.mxu0 0.0
    %2252 = vmatpush1.msra.mxu0 0.0
    %2253 = vmatprep.subr.mxu0 0.0
    %2254 = vmatpush1.msra.mxu0 0.0
    %2255 = vmatprep.subr.mxu0 0.0
    %2256 = vmatpush1.msra.mxu0 0.0
    %2257 = vmatprep.subr.mxu0 0.0
    %2258 = vmatpush1.msra.mxu0 0.0
    %2259 = vmatprep.subr.mxu0 0.0
    %2260 = vmatpush1.msra.mxu0 0.0
    %2261 = vmatprep.mubr.f32.mxu0 0.0
    %2262 = vmatmul.mubr.f32.gmra.mrb[0].mxu0 %v2195
    %v2263 = vpop.f32.mrb[0].mxu0
    %v2264 = vadd.f32 0.0, %v2263
    %v2265 = vpop.f32.mrb[0].mxu0
    %2266 = vdwg.mxu0
    %2267 = vrot.lane.b32.xlu0 %v2012, 64
    %v2268 = vpop.permute.xlu0 %2267
    %v2271 = vsel %vm198, %v2190, 0
    %2273 = vmatprep.subr.mxu0 0.0
    %2274 = vmatpush1.msra.mxu0 %v2268
    %2275 = vmatprep.subr.mxu0 0.0
    %2276 = vmatpush1.msra.mxu0 0.0
    %2277 = vmatprep.subr.mxu0 0.0
    %2278 = vmatpush1.msra.mxu0 0.0
    %2279 = vmatprep.subr.mxu0 0.0
    %2280 = vmatpush1.msra.mxu0 0.0
    %2281 = vmatprep.subr.mxu0 0.0
    %2282 = vmatpush1.msra.mxu0 0.0
    %2283 = vmatprep.subr.mxu0 0.0
    %2284 = vmatpush1.msra.mxu0 0.0
    %2285 = vmatprep.subr.mxu0 0.0
    %2286 = vmatpush1.msra.mxu0 0.0
    %2287 = vmatprep.subr.mxu0 0.0
    %2288 = vmatpush1.msra.mxu0 0.0
    %2289 = vmatprep.subr.mxu0 0.0
    %2290 = vmatpush1.msra.mxu0 0.0
    %2291 = vmatprep.subr.mxu0 0.0
    %2292 = vmatpush1.msra.mxu0 0.0
    %2293 = vmatprep.subr.mxu0 0.0
    %2294 = vmatpush1.msra.mxu0 0.0
    %2295 = vmatprep.subr.mxu0 0.0
    %2296 = vmatpush1.msra.mxu0 0.0
    %2297 = vmatprep.subr.mxu0 0.0
    %2298 = vmatpush1.msra.mxu0 0.0
    %2299 = vmatprep.subr.mxu0 0.0
    %2300 = vmatpush1.msra.mxu0 0.0
    %2301 = vmatprep.subr.mxu0 0.0
    %2302 = vmatpush1.msra.mxu0 0.0
    %2303 = vmatprep.subr.mxu0 0.0
    %2304 = vmatpush1.msra.mxu0 0.0
    %2305 = vmatprep.subr.mxu0 0.0
    %2306 = vmatpush1.msra.mxu0 0.0
    %2307 = vmatprep.subr.mxu0 0.0
    %2308 = vmatpush1.msra.mxu0 0.0
    %2309 = vmatprep.subr.mxu0 0.0
    %2310 = vmatpush1.msra.mxu0 0.0
    %2311 = vmatprep.subr.mxu0 0.0
    %2312 = vmatpush1.msra.mxu0 0.0
    %2313 = vmatprep.subr.mxu0 0.0
    %2314 = vmatpush1.msra.mxu0 0.0
    %2315 = vmatprep.subr.mxu0 0.0
    %2316 = vmatpush1.msra.mxu0 0.0
    %2317 = vmatprep.subr.mxu0 0.0
    %2318 = vmatpush1.msra.mxu0 0.0
    %2319 = vmatprep.subr.mxu0 0.0
    %2320 = vmatpush1.msra.mxu0 0.0
    %2321 = vmatprep.subr.mxu0 0.0
    %2322 = vmatpush1.msra.mxu0 0.0
    %2323 = vmatprep.subr.mxu0 0.0
    %2324 = vmatpush1.msra.mxu0 0.0
    %2325 = vmatprep.subr.mxu0 0.0
    %2326 = vmatpush1.msra.mxu0 0.0
    %2327 = vmatprep.subr.mxu0 0.0
    %2328 = vmatpush1.msra.mxu0 0.0
    %2329 = vmatprep.subr.mxu0 0.0
    %2330 = vmatpush1.msra.mxu0 0.0
    %2331 = vmatprep.subr.mxu0 0.0
    %2332 = vmatpush1.msra.mxu0 0.0
    %2333 = vmatprep.subr.mxu0 0.0
    %2334 = vmatpush1.msra.mxu0 0.0
    %2335 = vmatprep.subr.mxu0 0.0
    %2336 = vmatpush1.msra.mxu0 0.0
    %2337 = vmatprep.mubr.f32.mxu0 0.0
    %2338 = vmatmul.mubr.f32.gmra.mrb[0].mxu0 %v2271
    %v2339 = vpop.f32.mrb[0].mxu0
    %v2340 = vadd.f32 0.0, %v2339
    %v2341 = vpop.f32.mrb[0].mxu0
    %2342 = vdwg.mxu0
    %2343 = vrot.lane.b32.xlu0 %v2007, 120
    %v2344 = vpop.permute.xlu0 %2343
    %2345 = vrot.lane.b32.xlu0 %v2007, 88
    %v2346 = vpop.permute.xlu0 %2345
    %v2347 = vsel %vm198, %v2344, 0
    %v2349 = vsel %vm198, %v2346, 0
    %2351 = vmatprep.subr.mxu0 0.0
    %2352 = vmatpush1.xpose.msra.mxu0 %v2349
    %2353 = vmatprep.subr.mxu0 0.0
    %2354 = vmatpush1.xpose.msra.mxu0 0.0
    %2355 = vmatprep.subr.mxu0 0.0
    %2356 = vmatpush1.xpose.msra.mxu0 0.0
    %2357 = vmatprep.subr.mxu0 0.0
    %2358 = vmatpush1.xpose.msra.mxu0 0.0
    %2359 = vmatprep.subr.mxu0 0.0
    %2360 = vmatpush1.xpose.msra.mxu0 0.0
    %2361 = vmatprep.subr.mxu0 0.0
    %2362 = vmatpush1.xpose.msra.mxu0 0.0
    %2363 = vmatprep.subr.mxu0 0.0
    %2364 = vmatpush1.xpose.msra.mxu0 0.0
    %2365 = vmatprep.subr.mxu0 0.0
    %2366 = vmatpush1.xpose.msra.mxu0 0.0
    %2367 = vmatprep.subr.mxu0 0.0
    %2368 = vmatpush1.xpose.msra.mxu0 0.0
    %2369 = vmatprep.subr.mxu0 0.0
    %2370 = vmatpush1.xpose.msra.mxu0 0.0
    %2371 = vmatprep.subr.mxu0 0.0
    %2372 = vmatpush1.xpose.msra.mxu0 0.0
    %2373 = vmatprep.subr.mxu0 0.0
    %2374 = vmatpush1.xpose.msra.mxu0 0.0
    %2375 = vmatprep.subr.mxu0 0.0
    %2376 = vmatpush1.xpose.msra.mxu0 0.0
    %2377 = vmatprep.subr.mxu0 0.0
    %2378 = vmatpush1.xpose.msra.mxu0 0.0
    %2379 = vmatprep.subr.mxu0 0.0
    %2380 = vmatpush1.xpose.msra.mxu0 0.0
    %2381 = vmatprep.subr.mxu0 0.0
    %2382 = vmatpush1.xpose.msra.mxu0 0.0
    %2383 = vmatprep.subr.mxu0 0.0
    %2384 = vmatpush1.xpose.msra.mxu0 0.0
    %2385 = vmatprep.subr.mxu0 0.0
    %2386 = vmatpush1.xpose.msra.mxu0 0.0
    %2387 = vmatprep.subr.mxu0 0.0
    %2388 = vmatpush1.xpose.msra.mxu0 0.0
    %2389 = vmatprep.subr.mxu0 0.0
    %2390 = vmatpush1.xpose.msra.mxu0 0.0
    %2391 = vmatprep.subr.mxu0 0.0
    %2392 = vmatpush1.xpose.msra.mxu0 0.0
    %2393 = vmatprep.subr.mxu0 0.0
    %2394 = vmatpush1.xpose.msra.mxu0 0.0
    %2395 = vmatprep.subr.mxu0 0.0
    %2396 = vmatpush1.xpose.msra.mxu0 0.0
    %2397 = vmatprep.subr.mxu0 0.0
    %2398 = vmatpush1.xpose.msra.mxu0 0.0
    %2399 = vmatprep.subr.mxu0 0.0
    %2400 = vmatpush1.xpose.msra.mxu0 0.0
    %2401 = vmatprep.subr.mxu0 0.0
    %2402 = vmatpush1.xpose.msra.mxu0 0.0
    %2403 = vmatprep.subr.mxu0 0.0
    %2404 = vmatpush1.xpose.msra.mxu0 0.0
    %2405 = vmatprep.subr.mxu0 0.0
    %2406 = vmatpush1.xpose.msra.mxu0 0.0
    %2407 = vmatprep.subr.mxu0 0.0
    %2408 = vmatpush1.xpose.msra.mxu0 0.0
    %2409 = vmatprep.subr.mxu0 0.0
    %2410 = vmatpush1.xpose.msra.mxu0 0.0
    %2411 = vmatprep.subr.mxu0 0.0
    %2412 = vmatpush1.xpose.msra.mxu0 0.0
    %2413 = vmatprep.subr.mxu0 0.0
    %2414 = vmatpush1.xpose.msra.mxu0 0.0
    %2415 = vmatprep.mubr.f32.mxu0 0.0
    %2416 = vmatmul.mubr.f32.gmra.mrb[0].mxu0 %v2347
    %v2417 = vpop.f32.mrb[0].mxu0
    %v2418 = vadd.f32 %v95, %v2417
    %v2419 = vpop.f32.mrb[0].mxu0
    %2420 = vdwg.mxu0
    %2421 = vrot.lane.b32.xlu0 %v2012, 120
    %v2422 = vpop.permute.xlu0 %2421
    %2423 = vrot.lane.b32.xlu0 %v2012, 88
    %v2424 = vpop.permute.xlu0 %2423
    %v2425 = vsel %vm198, %v2422, 0
    %v2427 = vsel %vm198, %v2424, 0
    %2429 = vmatprep.subr.mxu0 0.0
    %2430 = vmatpush1.xpose.msra.mxu0 %v2427
    %2431 = vmatprep.subr.mxu0 0.0
    %2432 = vmatpush1.xpose.msra.mxu0 0.0
    %2433 = vmatprep.subr.mxu0 0.0
    %2434 = vmatpush1.xpose.msra.mxu0 0.0
    %2435 = vmatprep.subr.mxu0 0.0
    %2436 = vmatpush1.xpose.msra.mxu0 0.0
    %2437 = vmatprep.subr.mxu0 0.0
    %2438 = vmatpush1.xpose.msra.mxu0 0.0
    %2439 = vmatprep.subr.mxu0 0.0
    %2440 = vmatpush1.xpose.msra.mxu0 0.0
    %2441 = vmatprep.subr.mxu0 0.0
    %2442 = vmatpush1.xpose.msra.mxu0 0.0
    %2443 = vmatprep.subr.mxu0 0.0
    %2444 = vmatpush1.xpose.msra.mxu0 0.0
    %2445 = vmatprep.subr.mxu0 0.0
    %2446 = vmatpush1.xpose.msra.mxu0 0.0
    %2447 = vmatprep.subr.mxu0 0.0
    %2448 = vmatpush1.xpose.msra.mxu0 0.0
    %2449 = vmatprep.subr.mxu0 0.0
    %2450 = vmatpush1.xpose.msra.mxu0 0.0
    %2451 = vmatprep.subr.mxu0 0.0
    %2452 = vmatpush1.xpose.msra.mxu0 0.0
    %2453 = vmatprep.subr.mxu0 0.0
    %2454 = vmatpush1.xpose.msra.mxu0 0.0
    %2455 = vmatprep.subr.mxu0 0.0
    %2456 = vmatpush1.xpose.msra.mxu0 0.0
    %2457 = vmatprep.subr.mxu0 0.0
    %2458 = vmatpush1.xpose.msra.mxu0 0.0
    %2459 = vmatprep.subr.mxu0 0.0
    %2460 = vmatpush1.xpose.msra.mxu0 0.0
    %2461 = vmatprep.subr.mxu0 0.0
    %2462 = vmatpush1.xpose.msra.mxu0 0.0
    %2463 = vmatprep.subr.mxu0 0.0
    %2464 = vmatpush1.xpose.msra.mxu0 0.0
    %2465 = vmatprep.subr.mxu0 0.0
    %2466 = vmatpush1.xpose.msra.mxu0 0.0
    %2467 = vmatprep.subr.mxu0 0.0
    %2468 = vmatpush1.xpose.msra.mxu0 0.0
    %2469 = vmatprep.subr.mxu0 0.0
    %2470 = vmatpush1.xpose.msra.mxu0 0.0
    %2471 = vmatprep.subr.mxu0 0.0
    %2472 = vmatpush1.xpose.msra.mxu0 0.0
    %2473 = vmatprep.subr.mxu0 0.0
    %2474 = vmatpush1.xpose.msra.mxu0 0.0
    %2475 = vmatprep.subr.mxu0 0.0
    %2476 = vmatpush1.xpose.msra.mxu0 0.0
    %2477 = vmatprep.subr.mxu0 0.0
    %2478 = vmatpush1.xpose.msra.mxu0 0.0
    %2479 = vmatprep.subr.mxu0 0.0
    %2480 = vmatpush1.xpose.msra.mxu0 0.0
    %2481 = vmatprep.subr.mxu0 0.0
    %2482 = vmatpush1.xpose.msra.mxu0 0.0
    %2483 = vmatprep.subr.mxu0 0.0
    %2484 = vmatpush1.xpose.msra.mxu0 0.0
    %2485 = vmatprep.subr.mxu0 0.0
    %2486 = vmatpush1.xpose.msra.mxu0 0.0
    %2487 = vmatprep.subr.mxu0 0.0
    %2488 = vmatpush1.xpose.msra.mxu0 0.0
    %2489 = vmatprep.subr.mxu0 0.0
    %2490 = vmatpush1.xpose.msra.mxu0 0.0
    %2491 = vmatprep.subr.mxu0 0.0
    %2492 = vmatpush1.xpose.msra.mxu0 0.0
    %2493 = vmatprep.mubr.f32.mxu0 0.0
    %2494 = vmatmul.mubr.f32.gmra.mrb[0].mxu0 %v2425
    %v2495 = vpop.f32.mrb[0].mxu0
    %v2496 = vadd.f32 %v99, %v2495
    %v2497 = vpop.f32.mrb[0].mxu0
    %2498 = vdwg.mxu0
    %v2499 = vsel %vm198, %v2418, -inf
    %2500 = vmax.xlane.f32.xlu0 %v2499
    %v2501 = vpop.xlane.xlu0 %2500
    %v2502 = vsel %vm198, %v2496, -inf
    %2503 = vmax.xlane.f32.xlu0 %v2502
    %v2504 = vpop.xlane.xlu0 %2503
    %v2505 = vsub.f32 %v2418, %v2501
    %v2506 = vsub.f32 %v2496, %v2504
    %v2507 = vmul.f32 %v2505, 1.442695
    %v2508 = vpow.pop %v2507
    %v2509 = vmul.f32 %v2506, 1.442695
    %v2510 = vpow.pop %v2509
    %v2511 = vsel %vm198, %v2508, 0.0
    %2512 = vadd.xlane.f32.xlu0 %v2511
    %v2513 = vpop.xlane.xlu0 %2512
    %v2514 = vsel %vm198, %v2510, 0.0
    %2515 = vadd.xlane.f32.xlu0 %v2514
    %v2516 = vpop.xlane.xlu0 %2515
    %v2517 = vrcp.pop %v2513
    %v2518 = vrcp.pop %v2516
    %v2519 = vmul.f32 %v2508, %v2517
    %v2520 = vmul.f32 %v2510, %v2518
    %2521 = vrot.lane.b32.xlu0 %v2007, 56
    %v2522 = vpop.permute.xlu0 %2521
    %v2525 = vsel %vm198, %v2519, 0
    %2527 = vmatprep.subr.mxu0 0.0
    %2528 = vmatpush1.msra.mxu0 %v2522
    %2529 = vmatprep.subr.mxu0 0.0
    %2530 = vmatpush1.msra.mxu0 0.0
    %2531 = vmatprep.subr.mxu0 0.0
    %2532 = vmatpush1.msra.mxu0 0.0
    %2533 = vmatprep.subr.mxu0 0.0
    %2534 = vmatpush1.msra.mxu0 0.0
    %2535 = vmatprep.subr.mxu0 0.0
    %2536 = vmatpush1.msra.mxu0 0.0
    %2537 = vmatprep.subr.mxu0 0.0
    %2538 = vmatpush1.msra.mxu0 0.0
    %2539 = vmatprep.subr.mxu0 0.0
    %2540 = vmatpush1.msra.mxu0 0.0
    %2541 = vmatprep.subr.mxu0 0.0
    %2542 = vmatpush1.msra.mxu0 0.0
    %2543 = vmatprep.subr.mxu0 0.0
    %2544 = vmatpush1.msra.mxu0 0.0
    %2545 = vmatprep.subr.mxu0 0.0
    %2546 = vmatpush1.msra.mxu0 0.0
    %2547 = vmatprep.subr.mxu0 0.0
    %2548 = vmatpush1.msra.mxu0 0.0
    %2549 = vmatprep.subr.mxu0 0.0
    %2550 = vmatpush1.msra.mxu0 0.0
    %2551 = vmatprep.subr.mxu0 0.0
    %2552 = vmatpush1.msra.mxu0 0.0
    %2553 = vmatprep.subr.mxu0 0.0
    %2554 = vmatpush1.msra.mxu0 0.0
    %2555 = vmatprep.subr.mxu0 0.0
    %2556 = vmatpush1.msra.mxu0 0.0
    %2557 = vmatprep.subr.mxu0 0.0
    %2558 = vmatpush1.msra.mxu0 0.0
    %2559 = vmatprep.subr.mxu0 0.0
    %2560 = vmatpush1.msra.mxu0 0.0
    %2561 = vmatprep.subr.mxu0 0.0
    %2562 = vmatpush1.msra.mxu0 0.0
    %2563 = vmatprep.subr.mxu0 0.0
    %2564 = vmatpush1.msra.mxu0 0.0
    %2565 = vmatprep.subr.mxu0 0.0
    %2566 = vmatpush1.msra.mxu0 0.0
    %2567 = vmatprep.subr.mxu0 0.0
    %2568 = vmatpush1.msra.mxu0 0.0
    %2569 = vmatprep.subr.mxu0 0.0
    %2570 = vmatpush1.msra.mxu0 0.0
    %2571 = vmatprep.subr.mxu0 0.0
    %2572 = vmatpush1.msra.mxu0 0.0
    %2573 = vmatprep.subr.mxu0 0.0
    %2574 = vmatpush1.msra.mxu0 0.0
    %2575 = vmatprep.subr.mxu0 0.0
    %2576 = vmatpush1.msra.mxu0 0.0
    %2577 = vmatprep.subr.mxu0 0.0
    %2578 = vmatpush1.msra.mxu0 0.0
    %2579 = vmatprep.subr.mxu0 0.0
    %2580 = vmatpush1.msra.mxu0 0.0
    %2581 = vmatprep.subr.mxu0 0.0
    %2582 = vmatpush1.msra.mxu0 0.0
    %2583 = vmatprep.subr.mxu0 0.0
    %2584 = vmatpush1.msra.mxu0 0.0
    %2585 = vmatprep.subr.mxu0 0.0
    %2586 = vmatpush1.msra.mxu0 0.0
    %2587 = vmatprep.subr.mxu0 0.0
    %2588 = vmatpush1.msra.mxu0 0.0
    %2589 = vmatprep.subr.mxu0 0.0
    %2590 = vmatpush1.msra.mxu0 0.0
    %2591 = vmatprep.mubr.f32.mxu0 0.0
    %2592 = vmatmul.mubr.f32.gmra.mrb[0].mxu0 %v2525
    %v2593 = vpop.f32.mrb[0].mxu0
    %v2594 = vadd.f32 0.0, %v2593
    %v2595 = vpop.f32.mrb[0].mxu0
    %2596 = vdwg.mxu0
    %2597 = vrot.lane.b32.xlu0 %v2012, 56
    %v2598 = vpop.permute.xlu0 %2597
    %v2601 = vsel %vm198, %v2520, 0
    %2603 = vmatprep.subr.mxu0 0.0
    %2604 = vmatpush1.msra.mxu0 %v2598
    %2605 = vmatprep.subr.mxu0 0.0
    %2606 = vmatpush1.msra.mxu0 0.0
    %2607 = vmatprep.subr.mxu0 0.0
    %2608 = vmatpush1.msra.mxu0 0.0
    %2609 = vmatprep.subr.mxu0 0.0
    %2610 = vmatpush1.msra.mxu0 0.0
    %2611 = vmatprep.subr.mxu0 0.0
    %2612 = vmatpush1.msra.mxu0 0.0
    %2613 = vmatprep.subr.mxu0 0.0
    %2614 = vmatpush1.msra.mxu0 0.0
    %2615 = vmatprep.subr.mxu0 0.0
    %2616 = vmatpush1.msra.mxu0 0.0
    %2617 = vmatprep.subr.mxu0 0.0
    %2618 = vmatpush1.msra.mxu0 0.0
    %2619 = vmatprep.subr.mxu0 0.0
    %2620 = vmatpush1.msra.mxu0 0.0
    %2621 = vmatprep.subr.mxu0 0.0
    %2622 = vmatpush1.msra.mxu0 0.0
    %2623 = vmatprep.subr.mxu0 0.0
    %2624 = vmatpush1.msra.mxu0 0.0
    %2625 = vmatprep.subr.mxu0 0.0
    %2626 = vmatpush1.msra.mxu0 0.0
    %2627 = vmatprep.subr.mxu0 0.0
    %2628 = vmatpush1.msra.mxu0 0.0
    %2629 = vmatprep.subr.mxu0 0.0
    %2630 = vmatpush1.msra.mxu0 0.0
    %2631 = vmatprep.subr.mxu0 0.0
    %2632 = vmatpush1.msra.mxu0 0.0
    %2633 = vmatprep.subr.mxu0 0.0
    %2634 = vmatpush1.msra.mxu0 0.0
    %2635 = vmatprep.subr.mxu0 0.0
    %2636 = vmatpush1.msra.mxu0 0.0
    %2637 = vmatprep.subr.mxu0 0.0
    %2638 = vmatpush1.msra.mxu0 0.0
    %2639 = vmatprep.subr.mxu0 0.0
    %2640 = vmatpush1.msra.mxu0 0.0
    %2641 = vmatprep.subr.mxu0 0.0
    %2642 = vmatpush1.msra.mxu0 0.0
    %2643 = vmatprep.subr.mxu0 0.0
    %2644 = vmatpush1.msra.mxu0 0.0
    %2645 = vmatprep.subr.mxu0 0.0
    %2646 = vmatpush1.msra.mxu0 0.0
    %2647 = vmatprep.subr.mxu0 0.0
    %2648 = vmatpush1.msra.mxu0 0.0
    %2649 = vmatprep.subr.mxu0 0.0
    %2650 = vmatpush1.msra.mxu0 0.0
    %2651 = vmatprep.subr.mxu0 0.0
    %2652 = vmatpush1.msra.mxu0 0.0
    %2653 = vmatprep.subr.mxu0 0.0
    %2654 = vmatpush1.msra.mxu0 0.0
    %2655 = vmatprep.subr.mxu0 0.0
    %2656 = vmatpush1.msra.mxu0 0.0
    %2657 = vmatprep.subr.mxu0 0.0
    %2658 = vmatpush1.msra.mxu0 0.0
    %2659 = vmatprep.subr.mxu0 0.0
    %2660 = vmatpush1.msra.mxu0 0.0
    %2661 = vmatprep.subr.mxu0 0.0
    %2662 = vmatpush1.msra.mxu0 0.0
    %2663 = vmatprep.subr.mxu0 0.0
    %2664 = vmatpush1.msra.mxu0 0.0
    %2665 = vmatprep.subr.mxu0 0.0
    %2666 = vmatpush1.msra.mxu0 0.0
    %2667 = vmatprep.mubr.f32.mxu0 0.0
    %2668 = vmatmul.mubr.f32.gmra.mrb[0].mxu0 %v2601
    %v2669 = vpop.f32.mrb[0].mxu0
    %v2670 = vadd.f32 0.0, %v2669
    %v2671 = vpop.f32.mrb[0].mxu0
    %2672 = vdwg.mxu0
    %2673 = vrot.lane.b32.xlu0 %v2007, 112
    %v2674 = vpop.permute.xlu0 %2673
    %2675 = vrot.lane.b32.xlu0 %v2007, 80
    %v2676 = vpop.permute.xlu0 %2675
    %v2677 = vsel %vm198, %v2674, 0
    %v2679 = vsel %vm198, %v2676, 0
    %2681 = vmatprep.subr.mxu0 0.0
    %2682 = vmatpush1.xpose.msra.mxu0 %v2679
    %2683 = vmatprep.subr.mxu0 0.0
    %2684 = vmatpush1.xpose.msra.mxu0 0.0
    %2685 = vmatprep.subr.mxu0 0.0
    %2686 = vmatpush1.xpose.msra.mxu0 0.0
    %2687 = vmatprep.subr.mxu0 0.0
    %2688 = vmatpush1.xpose.msra.mxu0 0.0
    %2689 = vmatprep.subr.mxu0 0.0
    %2690 = vmatpush1.xpose.msra.mxu0 0.0
    %2691 = vmatprep.subr.mxu0 0.0
    %2692 = vmatpush1.xpose.msra.mxu0 0.0
    %2693 = vmatprep.subr.mxu0 0.0
    %2694 = vmatpush1.xpose.msra.mxu0 0.0
    %2695 = vmatprep.subr.mxu0 0.0
    %2696 = vmatpush1.xpose.msra.mxu0 0.0
    %2697 = vmatprep.subr.mxu0 0.0
    %2698 = vmatpush1.xpose.msra.mxu0 0.0
    %2699 = vmatprep.subr.mxu0 0.0
    %2700 = vmatpush1.xpose.msra.mxu0 0.0
    %2701 = vmatprep.subr.mxu0 0.0
    %2702 = vmatpush1.xpose.msra.mxu0 0.0
    %2703 = vmatprep.subr.mxu0 0.0
    %2704 = vmatpush1.xpose.msra.mxu0 0.0
    %2705 = vmatprep.subr.mxu0 0.0
    %2706 = vmatpush1.xpose.msra.mxu0 0.0
    %2707 = vmatprep.subr.mxu0 0.0
    %2708 = vmatpush1.xpose.msra.mxu0 0.0
    %2709 = vmatprep.subr.mxu0 0.0
    %2710 = vmatpush1.xpose.msra.mxu0 0.0
    %2711 = vmatprep.subr.mxu0 0.0
    %2712 = vmatpush1.xpose.msra.mxu0 0.0
    %2713 = vmatprep.subr.mxu0 0.0
    %2714 = vmatpush1.xpose.msra.mxu0 0.0
    %2715 = vmatprep.subr.mxu0 0.0
    %2716 = vmatpush1.xpose.msra.mxu0 0.0
    %2717 = vmatprep.subr.mxu0 0.0
    %2718 = vmatpush1.xpose.msra.mxu0 0.0
    %2719 = vmatprep.subr.mxu0 0.0
    %2720 = vmatpush1.xpose.msra.mxu0 0.0
    %2721 = vmatprep.subr.mxu0 0.0
    %2722 = vmatpush1.xpose.msra.mxu0 0.0
    %2723 = vmatprep.subr.mxu0 0.0
    %2724 = vmatpush1.xpose.msra.mxu0 0.0
    %2725 = vmatprep.subr.mxu0 0.0
    %2726 = vmatpush1.xpose.msra.mxu0 0.0
    %2727 = vmatprep.subr.mxu0 0.0
    %2728 = vmatpush1.xpose.msra.mxu0 0.0
    %2729 = vmatprep.subr.mxu0 0.0
    %2730 = vmatpush1.xpose.msra.mxu0 0.0
    %2731 = vmatprep.subr.mxu0 0.0
    %2732 = vmatpush1.xpose.msra.mxu0 0.0
    %2733 = vmatprep.subr.mxu0 0.0
    %2734 = vmatpush1.xpose.msra.mxu0 0.0
    %2735 = vmatprep.subr.mxu0 0.0
    %2736 = vmatpush1.xpose.msra.mxu0 0.0
    %2737 = vmatprep.subr.mxu0 0.0
    %2738 = vmatpush1.xpose.msra.mxu0 0.0
    %2739 = vmatprep.subr.mxu0 0.0
    %2740 = vmatpush1.xpose.msra.mxu0 0.0
    %2741 = vmatprep.subr.mxu0 0.0
    %2742 = vmatpush1.xpose.msra.mxu0 0.0
    %2743 = vmatprep.subr.mxu0 0.0
    %2744 = vmatpush1.xpose.msra.mxu0 0.0
    %2745 = vmatprep.mubr.f32.mxu0 0.0
    %2746 = vmatmul.mubr.f32.gmra.mrb[0].mxu0 %v2677
    %v2747 = vpop.f32.mrb[0].mxu0
    %v2748 = vadd.f32 %v95, %v2747
    %v2749 = vpop.f32.mrb[0].mxu0
    %2750 = vdwg.mxu0
    %2751 = vrot.lane.b32.xlu0 %v2012, 112
    %v2752 = vpop.permute.xlu0 %2751
    %2753 = vrot.lane.b32.xlu0 %v2012, 80
    %v2754 = vpop.permute.xlu0 %2753
    %v2755 = vsel %vm198, %v2752, 0
    %v2757 = vsel %vm198, %v2754, 0
    %2759 = vmatprep.subr.mxu0 0.0
    %2760 = vmatpush1.xpose.msra.mxu0 %v2757
    %2761 = vmatprep.subr.mxu0 0.0
    %2762 = vmatpush1.xpose.msra.mxu0 0.0
    %2763 = vmatprep.subr.mxu0 0.0
    %2764 = vmatpush1.xpose.msra.mxu0 0.0
    %2765 = vmatprep.subr.mxu0 0.0
    %2766 = vmatpush1.xpose.msra.mxu0 0.0
    %2767 = vmatprep.subr.mxu0 0.0
    %2768 = vmatpush1.xpose.msra.mxu0 0.0
    %2769 = vmatprep.subr.mxu0 0.0
    %2770 = vmatpush1.xpose.msra.mxu0 0.0
    %2771 = vmatprep.subr.mxu0 0.0
    %2772 = vmatpush1.xpose.msra.mxu0 0.0
    %2773 = vmatprep.subr.mxu0 0.0
    %2774 = vmatpush1.xpose.msra.mxu0 0.0
    %2775 = vmatprep.subr.mxu0 0.0
    %2776 = vmatpush1.xpose.msra.mxu0 0.0
    %2777 = vmatprep.subr.mxu0 0.0
    %2778 = vmatpush1.xpose.msra.mxu0 0.0
    %2779 = vmatprep.subr.mxu0 0.0
    %2780 = vmatpush1.xpose.msra.mxu0 0.0
    %2781 = vmatprep.subr.mxu0 0.0
    %2782 = vmatpush1.xpose.msra.mxu0 0.0
    %2783 = vmatprep.subr.mxu0 0.0
    %2784 = vmatpush1.xpose.msra.mxu0 0.0
    %2785 = vmatprep.subr.mxu0 0.0
    %2786 = vmatpush1.xpose.msra.mxu0 0.0
    %2787 = vmatprep.subr.mxu0 0.0
    %2788 = vmatpush1.xpose.msra.mxu0 0.0
    %2789 = vmatprep.subr.mxu0 0.0
    %2790 = vmatpush1.xpose.msra.mxu0 0.0
    %2791 = vmatprep.subr.mxu0 0.0
    %2792 = vmatpush1.xpose.msra.mxu0 0.0
    %2793 = vmatprep.subr.mxu0 0.0
    %2794 = vmatpush1.xpose.msra.mxu0 0.0
    %2795 = vmatprep.subr.mxu0 0.0
    %2796 = vmatpush1.xpose.msra.mxu0 0.0
    %2797 = vmatprep.subr.mxu0 0.0
    %2798 = vmatpush1.xpose.msra.mxu0 0.0
    %2799 = vmatprep.subr.mxu0 0.0
    %2800 = vmatpush1.xpose.msra.mxu0 0.0
    %2801 = vmatprep.subr.mxu0 0.0
    %2802 = vmatpush1.xpose.msra.mxu0 0.0
    %2803 = vmatprep.subr.mxu0 0.0
    %2804 = vmatpush1.xpose.msra.mxu0 0.0
    %2805 = vmatprep.subr.mxu0 0.0
    %2806 = vmatpush1.xpose.msra.mxu0 0.0
    %2807 = vmatprep.subr.mxu0 0.0
    %2808 = vmatpush1.xpose.msra.mxu0 0.0
    %2809 = vmatprep.subr.mxu0 0.0
    %2810 = vmatpush1.xpose.msra.mxu0 0.0
    %2811 = vmatprep.subr.mxu0 0.0
    %2812 = vmatpush1.xpose.msra.mxu0 0.0
    %2813 = vmatprep.subr.mxu0 0.0
    %2814 = vmatpush1.xpose.msra.mxu0 0.0
    %2815 = vmatprep.subr.mxu0 0.0
    %2816 = vmatpush1.xpose.msra.mxu0 0.0
    %2817 = vmatprep.subr.mxu0 0.0
    %2818 = vmatpush1.xpose.msra.mxu0 0.0
    %2819 = vmatprep.subr.mxu0 0.0
    %2820 = vmatpush1.xpose.msra.mxu0 0.0
    %2821 = vmatprep.subr.mxu0 0.0
    %2822 = vmatpush1.xpose.msra.mxu0 0.0
    %2823 = vmatprep.mubr.f32.mxu0 0.0
    %2824 = vmatmul.mubr.f32.gmra.mrb[0].mxu0 %v2755
    %v2825 = vpop.f32.mrb[0].mxu0
    %v2826 = vadd.f32 %v99, %v2825
    %v2827 = vpop.f32.mrb[0].mxu0
    %2828 = vdwg.mxu0
    %v2829 = vsel %vm198, %v2748, -inf
    %2830 = vmax.xlane.f32.xlu0 %v2829
    %v2831 = vpop.xlane.xlu0 %2830
    %v2832 = vsel %vm198, %v2826, -inf
    %2833 = vmax.xlane.f32.xlu0 %v2832
    %v2834 = vpop.xlane.xlu0 %2833
    %v2835 = vsub.f32 %v2748, %v2831
    %v2836 = vsub.f32 %v2826, %v2834
    %v2837 = vmul.f32 %v2835, 1.442695
    %v2838 = vpow.pop %v2837
    %v2839 = vmul.f32 %v2836, 1.442695
    %v2840 = vpow.pop %v2839
    %v2841 = vsel %vm198, %v2838, 0.0
    %2842 = vadd.xlane.f32.xlu0 %v2841
    %v2843 = vpop.xlane.xlu0 %2842
    %v2844 = vsel %vm198, %v2840, 0.0
    %2845 = vadd.xlane.f32.xlu0 %v2844
    %v2846 = vpop.xlane.xlu0 %2845
    %v2847 = vrcp.pop %v2843
    %v2848 = vrcp.pop %v2846
    %v2849 = vmul.f32 %v2838, %v2847
    %v2850 = vmul.f32 %v2840, %v2848
    %2851 = vrot.lane.b32.xlu0 %v2007, 48
    %v2852 = vpop.permute.xlu0 %2851
    %v2855 = vsel %vm198, %v2849, 0
    %2857 = vmatprep.subr.mxu0 0.0
    %2858 = vmatpush1.msra.mxu0 %v2852
    %2859 = vmatprep.subr.mxu0 0.0
    %2860 = vmatpush1.msra.mxu0 0.0
    %2861 = vmatprep.subr.mxu0 0.0
    %2862 = vmatpush1.msra.mxu0 0.0
    %2863 = vmatprep.subr.mxu0 0.0
    %2864 = vmatpush1.msra.mxu0 0.0
    %2865 = vmatprep.subr.mxu0 0.0
    %2866 = vmatpush1.msra.mxu0 0.0
    %2867 = vmatprep.subr.mxu0 0.0
    %2868 = vmatpush1.msra.mxu0 0.0
    %2869 = vmatprep.subr.mxu0 0.0
    %2870 = vmatpush1.msra.mxu0 0.0
    %2871 = vmatprep.subr.mxu0 0.0
    %2872 = vmatpush1.msra.mxu0 0.0
    %2873 = vmatprep.subr.mxu0 0.0
    %2874 = vmatpush1.msra.mxu0 0.0
    %2875 = vmatprep.subr.mxu0 0.0
    %2876 = vmatpush1.msra.mxu0 0.0
    %2877 = vmatprep.subr.mxu0 0.0
    %2878 = vmatpush1.msra.mxu0 0.0
    %2879 = vmatprep.subr.mxu0 0.0
    %2880 = vmatpush1.msra.mxu0 0.0
    %2881 = vmatprep.subr.mxu0 0.0
    %2882 = vmatpush1.msra.mxu0 0.0
    %2883 = vmatprep.subr.mxu0 0.0
    %2884 = vmatpush1.msra.mxu0 0.0
    %2885 = vmatprep.subr.mxu0 0.0
    %2886 = vmatpush1.msra.mxu0 0.0
    %2887 = vmatprep.subr.mxu0 0.0
    %2888 = vmatpush1.msra.mxu0 0.0
    %2889 = vmatprep.subr.mxu0 0.0
    %2890 = vmatpush1.msra.mxu0 0.0
    %2891 = vmatprep.subr.mxu0 0.0
    %2892 = vmatpush1.msra.mxu0 0.0
    %2893 = vmatprep.subr.mxu0 0.0
    %2894 = vmatpush1.msra.mxu0 0.0
    %2895 = vmatprep.subr.mxu0 0.0
    %2896 = vmatpush1.msra.mxu0 0.0
    %2897 = vmatprep.subr.mxu0 0.0
    %2898 = vmatpush1.msra.mxu0 0.0
    %2899 = vmatprep.subr.mxu0 0.0
    %2900 = vmatpush1.msra.mxu0 0.0
    %2901 = vmatprep.subr.mxu0 0.0
    %2902 = vmatpush1.msra.mxu0 0.0
    %2903 = vmatprep.subr.mxu0 0.0
    %2904 = vmatpush1.msra.mxu0 0.0
    %2905 = vmatprep.subr.mxu0 0.0
    %2906 = vmatpush1.msra.mxu0 0.0
    %2907 = vmatprep.subr.mxu0 0.0
    %2908 = vmatpush1.msra.mxu0 0.0
    %2909 = vmatprep.subr.mxu0 0.0
    %2910 = vmatpush1.msra.mxu0 0.0
    %2911 = vmatprep.subr.mxu0 0.0
    %2912 = vmatpush1.msra.mxu0 0.0
    %2913 = vmatprep.subr.mxu0 0.0
    %2914 = vmatpush1.msra.mxu0 0.0
    %2915 = vmatprep.subr.mxu0 0.0
    %2916 = vmatpush1.msra.mxu0 0.0
    %2917 = vmatprep.subr.mxu0 0.0
    %2918 = vmatpush1.msra.mxu0 0.0
    %2919 = vmatprep.subr.mxu0 0.0
    %2920 = vmatpush1.msra.mxu0 0.0
    %2921 = vmatprep.mubr.f32.mxu0 0.0
    %2922 = vmatmul.mubr.f32.gmra.mrb[0].mxu0 %v2855
    %v2923 = vpop.f32.mrb[0].mxu0
    %v2924 = vadd.f32 0.0, %v2923
    %v2925 = vpop.f32.mrb[0].mxu0
    %2926 = vdwg.mxu0
    %2927 = vrot.lane.b32.xlu0 %v2012, 48
    %v2928 = vpop.permute.xlu0 %2927
    %v2931 = vsel %vm198, %v2850, 0
    %2933 = vmatprep.subr.mxu0 0.0
    %2934 = vmatpush1.msra.mxu0 %v2928
    %2935 = vmatprep.subr.mxu0 0.0
    %2936 = vmatpush1.msra.mxu0 0.0
    %2937 = vmatprep.subr.mxu0 0.0
    %2938 = vmatpush1.msra.mxu0 0.0
    %2939 = vmatprep.subr.mxu0 0.0
    %2940 = vmatpush1.msra.mxu0 0.0
    %2941 = vmatprep.subr.mxu0 0.0
    %2942 = vmatpush1.msra.mxu0 0.0
    %2943 = vmatprep.subr.mxu0 0.0
    %2944 = vmatpush1.msra.mxu0 0.0
    %2945 = vmatprep.subr.mxu0 0.0
    %2946 = vmatpush1.msra.mxu0 0.0
    %2947 = vmatprep.subr.mxu0 0.0
    %2948 = vmatpush1.msra.mxu0 0.0
    %2949 = vmatprep.subr.mxu0 0.0
    %2950 = vmatpush1.msra.mxu0 0.0
    %2951 = vmatprep.subr.mxu0 0.0
    %2952 = vmatpush1.msra.mxu0 0.0
    %2953 = vmatprep.subr.mxu0 0.0
    %2954 = vmatpush1.msra.mxu0 0.0
    %2955 = vmatprep.subr.mxu0 0.0
    %2956 = vmatpush1.msra.mxu0 0.0
    %2957 = vmatprep.subr.mxu0 0.0
    %2958 = vmatpush1.msra.mxu0 0.0
    %2959 = vmatprep.subr.mxu0 0.0
    %2960 = vmatpush1.msra.mxu0 0.0
    %2961 = vmatprep.subr.mxu0 0.0
    %2962 = vmatpush1.msra.mxu0 0.0
    %2963 = vmatprep.subr.mxu0 0.0
    %2964 = vmatpush1.msra.mxu0 0.0
    %2965 = vmatprep.subr.mxu0 0.0
    %2966 = vmatpush1.msra.mxu0 0.0
    %2967 = vmatprep.subr.mxu0 0.0
    %2968 = vmatpush1.msra.mxu0 0.0
    %2969 = vmatprep.subr.mxu0 0.0
    %2970 = vmatpush1.msra.mxu0 0.0
    %2971 = vmatprep.subr.mxu0 0.0
    %2972 = vmatpush1.msra.mxu0 0.0
    %2973 = vmatprep.subr.mxu0 0.0
    %2974 = vmatpush1.msra.mxu0 0.0
    %2975 = vmatprep.subr.mxu0 0.0
    %2976 = vmatpush1.msra.mxu0 0.0
    %2977 = vmatprep.subr.mxu0 0.0
    %2978 = vmatpush1.msra.mxu0 0.0
    %2979 = vmatprep.subr.mxu0 0.0
    %2980 = vmatpush1.msra.mxu0 0.0
    %2981 = vmatprep.subr.mxu0 0.0
    %2982 = vmatpush1.msra.mxu0 0.0
    %2983 = vmatprep.subr.mxu0 0.0
    %2984 = vmatpush1.msra.mxu0 0.0
    %2985 = vmatprep.subr.mxu0 0.0
    %2986 = vmatpush1.msra.mxu0 0.0
    %2987 = vmatprep.subr.mxu0 0.0
    %2988 = vmatpush1.msra.mxu0 0.0
    %2989 = vmatprep.subr.mxu0 0.0
    %2990 = vmatpush1.msra.mxu0 0.0
    %2991 = vmatprep.subr.mxu0 0.0
    %2992 = vmatpush1.msra.mxu0 0.0
    %2993 = vmatprep.subr.mxu0 0.0
    %2994 = vmatpush1.msra.mxu0 0.0
    %2995 = vmatprep.subr.mxu0 0.0
    %2996 = vmatpush1.msra.mxu0 0.0
    %2997 = vmatprep.mubr.f32.mxu0 0.0
    %2998 = vmatmul.mubr.f32.gmra.mrb[0].mxu0 %v2931
    %v2999 = vpop.f32.mrb[0].mxu0
    %v3000 = vadd.f32 0.0, %v2999
    %v3001 = vpop.f32.mrb[0].mxu0
    %3002 = vdwg.mxu0
    %3003 = vrot.lane.b32.xlu0 %v2007, 104
    %v3004 = vpop.permute.xlu0 %3003
    %3005 = vrot.lane.b32.xlu0 %v2007, 72
    %v3006 = vpop.permute.xlu0 %3005
    %v3007 = vsel %vm198, %v3004, 0
    %v3009 = vsel %vm198, %v3006, 0
    %3011 = vmatprep.subr.mxu0 0.0
    %3012 = vmatpush1.xpose.msra.mxu0 %v3009
    %3013 = vmatprep.subr.mxu0 0.0
    %3014 = vmatpush1.xpose.msra.mxu0 0.0
    %3015 = vmatprep.subr.mxu0 0.0
    %3016 = vmatpush1.xpose.msra.mxu0 0.0
    %3017 = vmatprep.subr.mxu0 0.0
    %3018 = vmatpush1.xpose.msra.mxu0 0.0
    %3019 = vmatprep.subr.mxu0 0.0
    %3020 = vmatpush1.xpose.msra.mxu0 0.0
    %3021 = vmatprep.subr.mxu0 0.0
    %3022 = vmatpush1.xpose.msra.mxu0 0.0
    %3023 = vmatprep.subr.mxu0 0.0
    %3024 = vmatpush1.xpose.msra.mxu0 0.0
    %3025 = vmatprep.subr.mxu0 0.0
    %3026 = vmatpush1.xpose.msra.mxu0 0.0
    %3027 = vmatprep.subr.mxu0 0.0
    %3028 = vmatpush1.xpose.msra.mxu0 0.0
    %3029 = vmatprep.subr.mxu0 0.0
    %3030 = vmatpush1.xpose.msra.mxu0 0.0
    %3031 = vmatprep.subr.mxu0 0.0
    %3032 = vmatpush1.xpose.msra.mxu0 0.0
    %3033 = vmatprep.subr.mxu0 0.0
    %3034 = vmatpush1.xpose.msra.mxu0 0.0
    %3035 = vmatprep.subr.mxu0 0.0
    %3036 = vmatpush1.xpose.msra.mxu0 0.0
    %3037 = vmatprep.subr.mxu0 0.0
    %3038 = vmatpush1.xpose.msra.mxu0 0.0
    %3039 = vmatprep.subr.mxu0 0.0
    %3040 = vmatpush1.xpose.msra.mxu0 0.0
    %3041 = vmatprep.subr.mxu0 0.0
    %3042 = vmatpush1.xpose.msra.mxu0 0.0
    %3043 = vmatprep.subr.mxu0 0.0
    %3044 = vmatpush1.xpose.msra.mxu0 0.0
    %3045 = vmatprep.subr.mxu0 0.0
    %3046 = vmatpush1.xpose.msra.mxu0 0.0
    %3047 = vmatprep.subr.mxu0 0.0
    %3048 = vmatpush1.xpose.msra.mxu0 0.0
    %3049 = vmatprep.subr.mxu0 0.0
    %3050 = vmatpush1.xpose.msra.mxu0 0.0
    %3051 = vmatprep.subr.mxu0 0.0
    %3052 = vmatpush1.xpose.msra.mxu0 0.0
    %3053 = vmatprep.subr.mxu0 0.0
    %3054 = vmatpush1.xpose.msra.mxu0 0.0
    %3055 = vmatprep.subr.mxu0 0.0
    %3056 = vmatpush1.xpose.msra.mxu0 0.0
    %3057 = vmatprep.subr.mxu0 0.0
    %3058 = vmatpush1.xpose.msra.mxu0 0.0
    %3059 = vmatprep.subr.mxu0 0.0
    %3060 = vmatpush1.xpose.msra.mxu0 0.0
    %3061 = vmatprep.subr.mxu0 0.0
    %3062 = vmatpush1.xpose.msra.mxu0 0.0
    %3063 = vmatprep.subr.mxu0 0.0
    %3064 = vmatpush1.xpose.msra.mxu0 0.0
    %3065 = vmatprep.subr.mxu0 0.0
    %3066 = vmatpush1.xpose.msra.mxu0 0.0
    %3067 = vmatprep.subr.mxu0 0.0
    %3068 = vmatpush1.xpose.msra.mxu0 0.0
    %3069 = vmatprep.subr.mxu0 0.0
    %3070 = vmatpush1.xpose.msra.mxu0 0.0
    %3071 = vmatprep.subr.mxu0 0.0
    %3072 = vmatpush1.xpose.msra.mxu0 0.0
    %3073 = vmatprep.subr.mxu0 0.0
    %3074 = vmatpush1.xpose.msra.mxu0 0.0
    %3075 = vmatprep.mubr.f32.mxu0 0.0
    %3076 = vmatmul.mubr.f32.gmra.mrb[0].mxu0 %v3007
    %v3077 = vpop.f32.mrb[0].mxu0
    %v3078 = vadd.f32 %v95, %v3077
    %v3079 = vpop.f32.mrb[0].mxu0
    %3080 = vdwg.mxu0
    %3081 = vrot.lane.b32.xlu0 %v2012, 104
    %v3082 = vpop.permute.xlu0 %3081
    %3083 = vrot.lane.b32.xlu0 %v2012, 72
    %v3084 = vpop.permute.xlu0 %3083
    %v3085 = vsel %vm198, %v3082, 0
    %v3087 = vsel %vm198, %v3084, 0
    %3089 = vmatprep.subr.mxu0 0.0
    %3090 = vmatpush1.xpose.msra.mxu0 %v3087
    %3091 = vmatprep.subr.mxu0 0.0
    %3092 = vmatpush1.xpose.msra.mxu0 0.0
    %3093 = vmatprep.subr.mxu0 0.0
    %3094 = vmatpush1.xpose.msra.mxu0 0.0
    %3095 = vmatprep.subr.mxu0 0.0
    %3096 = vmatpush1.xpose.msra.mxu0 0.0
    %3097 = vmatprep.subr.mxu0 0.0
    %3098 = vmatpush1.xpose.msra.mxu0 0.0
    %3099 = vmatprep.subr.mxu0 0.0
    %3100 = vmatpush1.xpose.msra.mxu0 0.0
    %3101 = vmatprep.subr.mxu0 0.0
    %3102 = vmatpush1.xpose.msra.mxu0 0.0
    %3103 = vmatprep.subr.mxu0 0.0
    %3104 = vmatpush1.xpose.msra.mxu0 0.0
    %3105 = vmatprep.subr.mxu0 0.0
    %3106 = vmatpush1.xpose.msra.mxu0 0.0
    %3107 = vmatprep.subr.mxu0 0.0
    %3108 = vmatpush1.xpose.msra.mxu0 0.0
    %3109 = vmatprep.subr.mxu0 0.0
    %3110 = vmatpush1.xpose.msra.mxu0 0.0
    %3111 = vmatprep.subr.mxu0 0.0
    %3112 = vmatpush1.xpose.msra.mxu0 0.0
    %3113 = vmatprep.subr.mxu0 0.0
    %3114 = vmatpush1.xpose.msra.mxu0 0.0
    %3115 = vmatprep.subr.mxu0 0.0
    %3116 = vmatpush1.xpose.msra.mxu0 0.0
    %3117 = vmatprep.subr.mxu0 0.0
    %3118 = vmatpush1.xpose.msra.mxu0 0.0
    %3119 = vmatprep.subr.mxu0 0.0
    %3120 = vmatpush1.xpose.msra.mxu0 0.0
    %3121 = vmatprep.subr.mxu0 0.0
    %3122 = vmatpush1.xpose.msra.mxu0 0.0
    %3123 = vmatprep.subr.mxu0 0.0
    %3124 = vmatpush1.xpose.msra.mxu0 0.0
    %3125 = vmatprep.subr.mxu0 0.0
    %3126 = vmatpush1.xpose.msra.mxu0 0.0
    %3127 = vmatprep.subr.mxu0 0.0
    %3128 = vmatpush1.xpose.msra.mxu0 0.0
    %3129 = vmatprep.subr.mxu0 0.0
    %3130 = vmatpush1.xpose.msra.mxu0 0.0
    %3131 = vmatprep.subr.mxu0 0.0
    %3132 = vmatpush1.xpose.msra.mxu0 0.0
    %3133 = vmatprep.subr.mxu0 0.0
    %3134 = vmatpush1.xpose.msra.mxu0 0.0
    %3135 = vmatprep.subr.mxu0 0.0
    %3136 = vmatpush1.xpose.msra.mxu0 0.0
    %3137 = vmatprep.subr.mxu0 0.0
    %3138 = vmatpush1.xpose.msra.mxu0 0.0
    %3139 = vmatprep.subr.mxu0 0.0
    %3140 = vmatpush1.xpose.msra.mxu0 0.0
    %3141 = vmatprep.subr.mxu0 0.0
    %3142 = vmatpush1.xpose.msra.mxu0 0.0
    %3143 = vmatprep.subr.mxu0 0.0
    %3144 = vmatpush1.xpose.msra.mxu0 0.0
    %3145 = vmatprep.subr.mxu0 0.0
    %3146 = vmatpush1.xpose.msra.mxu0 0.0
    %3147 = vmatprep.subr.mxu0 0.0
    %3148 = vmatpush1.xpose.msra.mxu0 0.0
    %3149 = vmatprep.subr.mxu0 0.0
    %3150 = vmatpush1.xpose.msra.mxu0 0.0
    %3151 = vmatprep.subr.mxu0 0.0
    %3152 = vmatpush1.xpose.msra.mxu0 0.0
    %3153 = vmatprep.mubr.f32.mxu0 0.0
    %3154 = vmatmul.mubr.f32.gmra.mrb[0].mxu0 %v3085
    %v3155 = vpop.f32.mrb[0].mxu0
    %v3156 = vadd.f32 %v99, %v3155
    %v3157 = vpop.f32.mrb[0].mxu0
    %3158 = vdwg.mxu0
    %v3159 = vsel %vm198, %v3078, -inf
    %3160 = vmax.xlane.f32.xlu0 %v3159
    %v3161 = vpop.xlane.xlu0 %3160
    %v3162 = vsel %vm198, %v3156, -inf
    %3163 = vmax.xlane.f32.xlu0 %v3162
    %v3164 = vpop.xlane.xlu0 %3163
    %v3165 = vsub.f32 %v3078, %v3161
    %v3166 = vsub.f32 %v3156, %v3164
    %v3167 = vmul.f32 %v3165, 1.442695
    %v3168 = vpow.pop %v3167
    %v3169 = vmul.f32 %v3166, 1.442695
    %v3170 = vpow.pop %v3169
    %v3171 = vsel %vm198, %v3168, 0.0
    %3172 = vadd.xlane.f32.xlu0 %v3171
    %v3173 = vpop.xlane.xlu0 %3172
    %v3174 = vsel %vm198, %v3170, 0.0
    %3175 = vadd.xlane.f32.xlu0 %v3174
    %v3176 = vpop.xlane.xlu0 %3175
    %v3177 = vrcp.pop %v3173
    %v3178 = vrcp.pop %v3176
    %v3179 = vmul.f32 %v3168, %v3177
    %v3180 = vmul.f32 %v3170, %v3178
    %3181 = vrot.lane.b32.xlu0 %v2007, 40
    %v3182 = vpop.permute.xlu0 %3181
    %v3185 = vsel %vm198, %v3179, 0
    %3187 = vmatprep.subr.mxu0 0.0
    %3188 = vmatpush1.msra.mxu0 %v3182
    %3189 = vmatprep.subr.mxu0 0.0
    %3190 = vmatpush1.msra.mxu0 0.0
    %3191 = vmatprep.subr.mxu0 0.0
    %3192 = vmatpush1.msra.mxu0 0.0
    %3193 = vmatprep.subr.mxu0 0.0
    %3194 = vmatpush1.msra.mxu0 0.0
    %3195 = vmatprep.subr.mxu0 0.0
    %3196 = vmatpush1.msra.mxu0 0.0
    %3197 = vmatprep.subr.mxu0 0.0
    %3198 = vmatpush1.msra.mxu0 0.0
    %3199 = vmatprep.subr.mxu0 0.0
    %3200 = vmatpush1.msra.mxu0 0.0
    %3201 = vmatprep.subr.mxu0 0.0
    %3202 = vmatpush1.msra.mxu0 0.0
    %3203 = vmatprep.subr.mxu0 0.0
    %3204 = vmatpush1.msra.mxu0 0.0
    %3205 = vmatprep.subr.mxu0 0.0
    %3206 = vmatpush1.msra.mxu0 0.0
    %3207 = vmatprep.subr.mxu0 0.0
    %3208 = vmatpush1.msra.mxu0 0.0
    %3209 = vmatprep.subr.mxu0 0.0
    %3210 = vmatpush1.msra.mxu0 0.0
    %3211 = vmatprep.subr.mxu0 0.0
    %3212 = vmatpush1.msra.mxu0 0.0
    %3213 = vmatprep.subr.mxu0 0.0
    %3214 = vmatpush1.msra.mxu0 0.0
    %3215 = vmatprep.subr.mxu0 0.0
    %3216 = vmatpush1.msra.mxu0 0.0
    %3217 = vmatprep.subr.mxu0 0.0
    %3218 = vmatpush1.msra.mxu0 0.0
    %3219 = vmatprep.subr.mxu0 0.0
    %3220 = vmatpush1.msra.mxu0 0.0
    %3221 = vmatprep.subr.mxu0 0.0
    %3222 = vmatpush1.msra.mxu0 0.0
    %3223 = vmatprep.subr.mxu0 0.0
    %3224 = vmatpush1.msra.mxu0 0.0
    %3225 = vmatprep.subr.mxu0 0.0
    %3226 = vmatpush1.msra.mxu0 0.0
    %3227 = vmatprep.subr.mxu0 0.0
    %3228 = vmatpush1.msra.mxu0 0.0
    %3229 = vmatprep.subr.mxu0 0.0
    %3230 = vmatpush1.msra.mxu0 0.0
    %3231 = vmatprep.subr.mxu0 0.0
    %3232 = vmatpush1.msra.mxu0 0.0
    %3233 = vmatprep.subr.mxu0 0.0
    %3234 = vmatpush1.msra.mxu0 0.0
    %3235 = vmatprep.subr.mxu0 0.0
    %3236 = vmatpush1.msra.mxu0 0.0
    %3237 = vmatprep.subr.mxu0 0.0
    %3238 = vmatpush1.msra.mxu0 0.0
    %3239 = vmatprep.subr.mxu0 0.0
    %3240 = vmatpush1.msra.mxu0 0.0
    %3241 = vmatprep.subr.mxu0 0.0
    %3242 = vmatpush1.msra.mxu0 0.0
    %3243 = vmatprep.subr.mxu0 0.0
    %3244 = vmatpush1.msra.mxu0 0.0
    %3245 = vmatprep.subr.mxu0 0.0
    %3246 = vmatpush1.msra.mxu0 0.0
    %3247 = vmatprep.subr.mxu0 0.0
    %3248 = vmatpush1.msra.mxu0 0.0
    %3249 = vmatprep.subr.mxu0 0.0
    %3250 = vmatpush1.msra.mxu0 0.0
    %3251 = vmatprep.mubr.f32.mxu0 0.0
    %3252 = vmatmul.mubr.f32.gmra.mrb[0].mxu0 %v3185
    %v3253 = vpop.f32.mrb[0].mxu0
    %v3254 = vadd.f32 0.0, %v3253
    %v3255 = vpop.f32.mrb[0].mxu0
    %3256 = vdwg.mxu0
    %3257 = vrot.lane.b32.xlu0 %v2012, 40
    %v3258 = vpop.permute.xlu0 %3257
    %v3261 = vsel %vm198, %v3180, 0
    %3263 = vmatprep.subr.mxu0 0.0
    %3264 = vmatpush1.msra.mxu0 %v3258
    %3265 = vmatprep.subr.mxu0 0.0
    %3266 = vmatpush1.msra.mxu0 0.0
    %3267 = vmatprep.subr.mxu0 0.0
    %3268 = vmatpush1.msra.mxu0 0.0
    %3269 = vmatprep.subr.mxu0 0.0
    %3270 = vmatpush1.msra.mxu0 0.0
    %3271 = vmatprep.subr.mxu0 0.0
    %3272 = vmatpush1.msra.mxu0 0.0
    %3273 = vmatprep.subr.mxu0 0.0
    %3274 = vmatpush1.msra.mxu0 0.0
    %3275 = vmatprep.subr.mxu0 0.0
    %3276 = vmatpush1.msra.mxu0 0.0
    %3277 = vmatprep.subr.mxu0 0.0
    %3278 = vmatpush1.msra.mxu0 0.0
    %3279 = vmatprep.subr.mxu0 0.0
    %3280 = vmatpush1.msra.mxu0 0.0
    %3281 = vmatprep.subr.mxu0 0.0
    %3282 = vmatpush1.msra.mxu0 0.0
    %3283 = vmatprep.subr.mxu0 0.0
    %3284 = vmatpush1.msra.mxu0 0.0
    %3285 = vmatprep.subr.mxu0 0.0
    %3286 = vmatpush1.msra.mxu0 0.0
    %3287 = vmatprep.subr.mxu0 0.0
    %3288 = vmatpush1.msra.mxu0 0.0
    %3289 = vmatprep.subr.mxu0 0.0
    %3290 = vmatpush1.msra.mxu0 0.0
    %3291 = vmatprep.subr.mxu0 0.0
    %3292 = vmatpush1.msra.mxu0 0.0
    %3293 = vmatprep.subr.mxu0 0.0
    %3294 = vmatpush1.msra.mxu0 0.0
    %3295 = vmatprep.subr.mxu0 0.0
    %3296 = vmatpush1.msra.mxu0 0.0
    %3297 = vmatprep.subr.mxu0 0.0
    %3298 = vmatpush1.msra.mxu0 0.0
    %3299 = vmatprep.subr.mxu0 0.0
    %3300 = vmatpush1.msra.mxu0 0.0
    %3301 = vmatprep.subr.mxu0 0.0
    %3302 = vmatpush1.msra.mxu0 0.0
    %3303 = vmatprep.subr.mxu0 0.0
    %3304 = vmatpush1.msra.mxu0 0.0
    %3305 = vmatprep.subr.mxu0 0.0
    %3306 = vmatpush1.msra.mxu0 0.0
    %3307 = vmatprep.subr.mxu0 0.0
    %3308 = vmatpush1.msra.mxu0 0.0
    %3309 = vmatprep.subr.mxu0 0.0
    %3310 = vmatpush1.msra.mxu0 0.0
    %3311 = vmatprep.subr.mxu0 0.0
    %3312 = vmatpush1.msra.mxu0 0.0
    %3313 = vmatprep.subr.mxu0 0.0
    %3314 = vmatpush1.msra.mxu0 0.0
    %3315 = vmatprep.subr.mxu0 0.0
    %3316 = vmatpush1.msra.mxu0 0.0
    %3317 = vmatprep.subr.mxu0 0.0
    %3318 = vmatpush1.msra.mxu0 0.0
    %3319 = vmatprep.subr.mxu0 0.0
    %3320 = vmatpush1.msra.mxu0 0.0
    %3321 = vmatprep.subr.mxu0 0.0
    %3322 = vmatpush1.msra.mxu0 0.0
    %3323 = vmatprep.subr.mxu0 0.0
    %3324 = vmatpush1.msra.mxu0 0.0
    %3325 = vmatprep.subr.mxu0 0.0
    %3326 = vmatpush1.msra.mxu0 0.0
    %3327 = vmatprep.mubr.f32.mxu0 0.0
    %3328 = vmatmul.mubr.f32.gmra.mrb[0].mxu0 %v3261
    %v3329 = vpop.f32.mrb[0].mxu0
    %v3330 = vadd.f32 0.0, %v3329
    %v3331 = vpop.f32.mrb[0].mxu0
    %3332 = vdwg.mxu0
    %3335 = vrot.lane.b32.xlu0 %v2594, 8
    %v3336 = vpop.permute.xlu0 %3335
    %3337 = vrot.lane.b32.xlu0 %v2670, 8
    %v3338 = vpop.permute.xlu0 %3337
    %3343 = vrot.lane.b32.xlu0 %v2924, 16
    %v3344 = vpop.permute.xlu0 %3343
    %3345 = vrot.lane.b32.xlu0 %v3000, 16
    %v3346 = vpop.permute.xlu0 %3345
    %3351 = vrot.lane.b32.xlu0 %v3254, 24
    %v3352 = vpop.permute.xlu0 %3351
    %3353 = vrot.lane.b32.xlu0 %v3330, 24
    %v3354 = vpop.permute.xlu0 %3353
    %v3357 = vsel %vm198, %v2264, %v3336
    %v3358 = vsel %vm198, %v2340, %v3338
    %v3359 = vsel %vm1540, %v3357, %v3344
    %v3360 = vsel %vm1540, %v3358, %v3346
    %v3361 = vsel %vm1543, %v3359, %v3352
    %v3362 = vsel %vm1543, %v3360, %v3354
    %s3363 = scalar_lea.vmem %s4, 32
    %v3364 = vld [vmem:[%s3363] sm:$0xff]
    %v3365 = vld [vmem:[%s3363 + $0x8] sm:$0xff]
    %v3366 = vld [vmem:[%s3363 + $0x10] sm:$0xff]
    %v3367 = vld [vmem:[%s3363 + $0x18] sm:$0xff]
    %v3368 = vlaneseq
    %v3369 = vshrl.u32 %v3368, 7
    %v3370 = vsub.s32 0, %v3369
    %v3371 = vrot.slane %v1920, %v3370
    %v3373 = vsel %vm48, %v3361, 0
    %v3376 = vsel %vm48, %v3362, 0
    %3378 = vmatprep.subr.mxu0 0.0
    %3379 = vmatpush1.msra.mxu0 %v3364
    %3380 = vmatprep.subr.mxu0 0.0
    %3381 = vmatpush1.msra.mxu0 %v3365
    %3382 = vmatprep.subr.mxu0 0.0
    %3383 = vmatpush1.msra.mxu0 %v3366
    %3384 = vmatprep.subr.mxu0 0.0
    %3385 = vmatpush1.msra.mxu0 %v3367
    %3386 = vmatprep.subr.mxu0 0.0
    %3387 = vmatpush1.msra.mxu0 0.0
    %3388 = vmatprep.subr.mxu0 0.0
    %3389 = vmatpush1.msra.mxu0 0.0
    %3390 = vmatprep.subr.mxu0 0.0
    %3391 = vmatpush1.msra.mxu0 0.0
    %3392 = vmatprep.subr.mxu0 0.0
    %3393 = vmatpush1.msra.mxu0 0.0
    %3394 = vmatprep.subr.mxu0 0.0
    %3395 = vmatpush1.msra.mxu0 0.0
    %3396 = vmatprep.subr.mxu0 0.0
    %3397 = vmatpush1.msra.mxu0 0.0
    %3398 = vmatprep.subr.mxu0 0.0
    %3399 = vmatpush1.msra.mxu0 0.0
    %3400 = vmatprep.subr.mxu0 0.0
    %3401 = vmatpush1.msra.mxu0 0.0
    %3402 = vmatprep.subr.mxu0 0.0
    %3403 = vmatpush1.msra.mxu0 0.0
    %3404 = vmatprep.subr.mxu0 0.0
    %3405 = vmatpush1.msra.mxu0 0.0
    %3406 = vmatprep.subr.mxu0 0.0
    %3407 = vmatpush1.msra.mxu0 0.0
    %3408 = vmatprep.subr.mxu0 0.0
    %3409 = vmatpush1.msra.mxu0 0.0
    %3410 = vmatprep.subr.mxu0 0.0
    %3411 = vmatpush1.msra.mxu0 0.0
    %3412 = vmatprep.subr.mxu0 0.0
    %3413 = vmatpush1.msra.mxu0 0.0
    %3414 = vmatprep.subr.mxu0 0.0
    %3415 = vmatpush1.msra.mxu0 0.0
    %3416 = vmatprep.subr.mxu0 0.0
    %3417 = vmatpush1.msra.mxu0 0.0
    %3418 = vmatprep.subr.mxu0 0.0
    %3419 = vmatpush1.msra.mxu0 0.0
    %3420 = vmatprep.subr.mxu0 0.0
    %3421 = vmatpush1.msra.mxu0 0.0
    %3422 = vmatprep.subr.mxu0 0.0
    %3423 = vmatpush1.msra.mxu0 0.0
    %3424 = vmatprep.subr.mxu0 0.0
    %3425 = vmatpush1.msra.mxu0 0.0
    %3426 = vmatprep.subr.mxu0 0.0
    %3427 = vmatpush1.msra.mxu0 0.0
    %3428 = vmatprep.subr.mxu0 0.0
    %3429 = vmatpush1.msra.mxu0 0.0
    %3430 = vmatprep.subr.mxu0 0.0
    %3431 = vmatpush1.msra.mxu0 0.0
    %3432 = vmatprep.subr.mxu0 0.0
    %3433 = vmatpush1.msra.mxu0 0.0
    %3434 = vmatprep.subr.mxu0 0.0
    %3435 = vmatpush1.msra.mxu0 0.0
    %3436 = vmatprep.subr.mxu0 0.0
    %3437 = vmatpush1.msra.mxu0 0.0
    %3438 = vmatprep.subr.mxu0 0.0
    %3439 = vmatpush1.msra.mxu0 0.0
    %3440 = vmatprep.subr.mxu0 0.0
    %3441 = vmatpush1.msra.mxu0 0.0
    %3442 = vmatprep.mubr.f32.mxu0 0.0
    %3443 = vmatmul.mubr.f32.gmra.mrb[0].mxu0 %v3373
    %v3444 = vpop.f32.mrb[0].mxu0
    %v3445 = vadd.f32 %v3371, %v3444
    %v3446 = vpop.f32.mrb[0].mxu0
    %3447 = vmatprep.mubr.f32.mxu0 0.0
    %3448 = vmatmul.mubr.f32.gmra.mrb[0].mxu0 %v3376
    %v3449 = vpop.f32.mrb[0].mxu0
    %v3450 = vadd.f32 %v3371, %v3449
    %v3451 = vpop.f32.mrb[0].mxu0
    %3452 = vdwg.mxu0
    %v3453 = vadd.f32 %v3445, %v1917
    %v3454 = vadd.f32 %v3450, %v1918
    %v3455 = vsel %vm48, %v3453, 0.0
    %3456 = vadd.xlane.f32.xlu0 %v3455
    %v3457 = vpop.xlane.xlu0 %3456
    %v3458 = vsel %vm48, %v3454, 0.0
    %3459 = vadd.xlane.f32.xlu0 %v3458
    %v3460 = vpop.xlane.xlu0 %3459
    %v3461 = vmul.f32 %v3457, %v55
    %v3462 = vmul.f32 %v3460, %v55
    %v3463 = vsub.f32 %v3453, %v3461
    %v3464 = vsub.f32 %v3454, %v3462
    %v3465 = vmul.f32 %v3463, %v3463
    %v3466 = vmul.f32 %v3464, %v3464
    %v3467 = vsel %vm48, %v3465, 0.0
    %3468 = vadd.xlane.f32.xlu0 %v3467
    %v3469 = vpop.xlane.xlu0 %3468
    %v3470 = vsel %vm48, %v3466, 0.0
    %3471 = vadd.xlane.f32.xlu0 %v3470
    %v3472 = vpop.xlane.xlu0 %3471
    %v3473 = vmul.f32 %v3469, %v55
    %v3474 = vmul.f32 %v3472, %v55
    %v3475 = vadd.f32 %v3473, 1e-05
    %v3476 = vadd.f32 %v3474, 1e-05
    %v3477 = vrsqrt.pop %v3475
    %v3478 = vrsqrt.pop %v3476
    %v3479 = vmul.f32 %v3463, %v3477
    %v3480 = vmul.f32 %v3464, %v3478
    %v3481 = vlaneseq
    %v3482 = vshrl.u32 %v3481, 7
    %v3483 = vsub.s32 1, %v3482
    %v3484 = vrot.slane %v1920, %v3483
    %v3485 = vmul.f32 %v3479, %v3484
    %v3486 = vmul.f32 %v3480, %v3484
    %v3487 = vlaneseq
    %v3488 = vshrl.u32 %v3487, 7
    %v3489 = vsub.s32 2, %v3488
    %v3490 = vrot.slane %v1920, %v3489
    %v3491 = vadd.f32 %v3485, %v3490
    %v3492 = vadd.f32 %v3486, %v3490
    %s3493 = scalar_lea.vmem %s5, 32
    %v3494 = vld [vmem:[%s3493] sm:$0xff]
    %v3495 = vld [vmem:[%s3493 + $0x8] sm:$0xff]
    %v3496 = vld [vmem:[%s3493 + $0x10] sm:$0xff]
    %v3497 = vld [vmem:[%s3493 + $0x18] sm:$0xff]
    %s3498 = scalar_lea.vmem %s6, 1
    %v3499 = vld [vmem:[%s3498] sm:$0x1]
    %v3501 = vlaneseq
    %v3502 = vshrl.u32 %v3501, 7
    %v3503 = vsub.s32 0, %v3502
    %v3504 = vrot.slane %v3499, %v3503
    %v3507 = vsel %vm48, %v3491, 0
    %v3510 = vsel %vm48, %v3492, 0
    %3512 = vmatprep.subr.mxu0 0.0
    %3513 = vmatpush1.msra.mxu0 %v3494
    %3514 = vmatprep.subr.mxu0 0.0
    %3515 = vmatpush1.msra.mxu0 %v3495
    %3516 = vmatprep.subr.mxu0 0.0
    %3517 = vmatpush1.msra.mxu0 %v3496
    %3518 = vmatprep.subr.mxu0 0.0
    %3519 = vmatpush1.msra.mxu0 %v3497
    %3520 = vmatprep.subr.mxu0 0.0
    %3521 = vmatpush1.msra.mxu0 0.0
    %3522 = vmatprep.subr.mxu0 0.0
    %3523 = vmatpush1.msra.mxu0 0.0
    %3524 = vmatprep.subr.mxu0 0.0
    %3525 = vmatpush1.msra.mxu0 0.0
    %3526 = vmatprep.subr.mxu0 0.0
    %3527 = vmatpush1.msra.mxu0 0.0
    %3528 = vmatprep.subr.mxu0 0.0
    %3529 = vmatpush1.msra.mxu0 0.0
    %3530 = vmatprep.subr.mxu0 0.0
    %3531 = vmatpush1.msra.mxu0 0.0
    %3532 = vmatprep.subr.mxu0 0.0
    %3533 = vmatpush1.msra.mxu0 0.0
    %3534 = vmatprep.subr.mxu0 0.0
    %3535 = vmatpush1.msra.mxu0 0.0
    %3536 = vmatprep.subr.mxu0 0.0
    %3537 = vmatpush1.msra.mxu0 0.0
    %3538 = vmatprep.subr.mxu0 0.0
    %3539 = vmatpush1.msra.mxu0 0.0
    %3540 = vmatprep.subr.mxu0 0.0
    %3541 = vmatpush1.msra.mxu0 0.0
    %3542 = vmatprep.subr.mxu0 0.0
    %3543 = vmatpush1.msra.mxu0 0.0
    %3544 = vmatprep.subr.mxu0 0.0
    %3545 = vmatpush1.msra.mxu0 0.0
    %3546 = vmatprep.subr.mxu0 0.0
    %3547 = vmatpush1.msra.mxu0 0.0
    %3548 = vmatprep.subr.mxu0 0.0
    %3549 = vmatpush1.msra.mxu0 0.0
    %3550 = vmatprep.subr.mxu0 0.0
    %3551 = vmatpush1.msra.mxu0 0.0
    %3552 = vmatprep.subr.mxu0 0.0
    %3553 = vmatpush1.msra.mxu0 0.0
    %3554 = vmatprep.subr.mxu0 0.0
    %3555 = vmatpush1.msra.mxu0 0.0
    %3556 = vmatprep.subr.mxu0 0.0
    %3557 = vmatpush1.msra.mxu0 0.0
    %3558 = vmatprep.subr.mxu0 0.0
    %3559 = vmatpush1.msra.mxu0 0.0
    %3560 = vmatprep.subr.mxu0 0.0
    %3561 = vmatpush1.msra.mxu0 0.0
    %3562 = vmatprep.subr.mxu0 0.0
    %3563 = vmatpush1.msra.mxu0 0.0
    %3564 = vmatprep.subr.mxu0 0.0
    %3565 = vmatpush1.msra.mxu0 0.0
    %3566 = vmatprep.subr.mxu0 0.0
    %3567 = vmatpush1.msra.mxu0 0.0
    %3568 = vmatprep.subr.mxu0 0.0
    %3569 = vmatpush1.msra.mxu0 0.0
    %3570 = vmatprep.subr.mxu0 0.0
    %3571 = vmatpush1.msra.mxu0 0.0
    %3572 = vmatprep.subr.mxu0 0.0
    %3573 = vmatpush1.msra.mxu0 0.0
    %3574 = vmatprep.subr.mxu0 0.0
    %3575 = vmatpush1.msra.mxu0 0.0
    %3576 = vmatprep.mubr.f32.mxu0 0.0
    %3577 = vmatmul.mubr.f32.gmra.mrb[0].mxu0 %v3507
    %v3578 = vpop.f32.mrb[0].mxu0
    %v3579 = vadd.f32 %v3504, %v3578
    %v3580 = vpop.f32.mrb[0].mxu0
    %3581 = vmatprep.mubr.f32.mxu0 0.0
    %3582 = vmatmul.mubr.f32.gmra.mrb[0].mxu0 %v3510
    %v3583 = vpop.f32.mrb[0].mxu0
    %v3584 = vadd.f32 %v3504, %v3583
    %v3585 = vpop.f32.mrb[0].mxu0
    %3586 = vdwg.mxu0
    %v3587 = vmul.f32 %v3579, %v3579
    %v3588 = vmul.f32 %v3584, %v3584
    %v3589 = vmul.f32 %v3579, %v3587
    %v3590 = vmul.f32 %v3584, %v3588
    %v3591 = vmul.f32 %v3589, 0.044715
    %v3592 = vmul.f32 %v3590, 0.044715
    %v3593 = vadd.f32 %v3579, %v3591
    %v3594 = vadd.f32 %v3584, %v3592
    %v3595 = vmul.f32 %v3593, 0.7978846
    %v3596 = vmul.f32 %v3594, 0.7978846
    %v3597 = vtanh.pop %v3595
    %v3598 = vtanh.pop %v3596
    %v3599 = vadd.f32 %v3597, 1.0
    %v3600 = vadd.f32 %v3598, 1.0
    %v3601 = vmul.f32 %v3599, 0.5
    %v3602 = vmul.f32 %v3600, 0.5
    %v3603 = vmul.f32 %v3579, %v3601
    %v3604 = vmul.f32 %v3584, %v3602
    %s3605 = scalar_lea.vmem %s7, 64
    %v3606 = vld [vmem:[%s3605] sm:$0xff]
    %v3607 = vld [vmem:[%s3605 + $0x8] sm:$0xff]
    %v3608 = vld [vmem:[%s3605 + $0x10] sm:$0xff]
    %v3609 = vld [vmem:[%s3605 + $0x18] sm:$0xff]
    %v3610 = vld [vmem:[%s3605 + $0x20] sm:$0xff]
    %v3611 = vld [vmem:[%s3605 + $0x28] sm:$0xff]
    %v3612 = vld [vmem:[%s3605 + $0x30] sm:$0xff]
    %v3613 = vld [vmem:[%s3605 + $0x38] sm:$0xff]
    %v3614 = vlaneseq
    %v3615 = vshrl.u32 %v3614, 7
    %v3616 = vsub.s32 3, %v3615
    %v3617 = vrot.slane %v1920, %v3616
    %v3619 = vsel %vm1797, %v3603, 0
    %v3622 = vsel %vm1797, %v3604, 0
    %3624 = vmatprep.subr.mxu0 0.0
    %3625 = vmatpush1.msra.mxu0 %v3606
    %3626 = vmatprep.subr.mxu0 0.0
    %3627 = vmatpush1.msra.mxu0 %v3607
    %3628 = vmatprep.subr.mxu0 0.0
    %3629 = vmatpush1.msra.mxu0 %v3608
    %3630 = vmatprep.subr.mxu0 0.0
    %3631 = vmatpush1.msra.mxu0 %v3609
    %3632 = vmatprep.subr.mxu0 0.0
    %3633 = vmatpush1.msra.mxu0 %v3610
    %3634 = vmatprep.subr.mxu0 0.0
    %3635 = vmatpush1.msra.mxu0 %v3611
    %3636 = vmatprep.subr.mxu0 0.0
    %3637 = vmatpush1.msra.mxu0 %v3612
    %3638 = vmatprep.subr.mxu0 0.0
    %3639 = vmatpush1.msra.mxu0 %v3613
    %3640 = vmatprep.subr.mxu0 0.0
    %3641 = vmatpush1.msra.mxu0 0.0
    %3642 = vmatprep.subr.mxu0 0.0
    %3643 = vmatpush1.msra.mxu0 0.0
    %3644 = vmatprep.subr.mxu0 0.0
    %3645 = vmatpush1.msra.mxu0 0.0
    %3646 = vmatprep.subr.mxu0 0.0
    %3647 = vmatpush1.msra.mxu0 0.0
    %3648 = vmatprep.subr.mxu0 0.0
    %3649 = vmatpush1.msra.mxu0 0.0
    %3650 = vmatprep.subr.mxu0 0.0
    %3651 = vmatpush1.msra.mxu0 0.0
    %3652 = vmatprep.subr.mxu0 0.0
    %3653 = vmatpush1.msra.mxu0 0.0
    %3654 = vmatprep.subr.mxu0 0.0
    %3655 = vmatpush1.msra.mxu0 0.0
    %3656 = vmatprep.subr.mxu0 0.0
    %3657 = vmatpush1.msra.mxu0 0.0
    %3658 = vmatprep.subr.mxu0 0.0
    %3659 = vmatpush1.msra.mxu0 0.0
    %3660 = vmatprep.subr.mxu0 0.0
    %3661 = vmatpush1.msra.mxu0 0.0
    %3662 = vmatprep.subr.mxu0 0.0
    %3663 = vmatpush1.msra.mxu0 0.0
    %3664 = vmatprep.subr.mxu0 0.0
    %3665 = vmatpush1.msra.mxu0 0.0
    %3666 = vmatprep.subr.mxu0 0.0
    %3667 = vmatpush1.msra.mxu0 0.0
    %3668 = vmatprep.subr.mxu0 0.0
    %3669 = vmatpush1.msra.mxu0 0.0
    %3670 = vmatprep.subr.mxu0 0.0
    %3671 = vmatpush1.msra.mxu0 0.0
    %3672 = vmatprep.subr.mxu0 0.0
    %3673 = vmatpush1.msra.mxu0 0.0
    %3674 = vmatprep.subr.mxu0 0.0
    %3675 = vmatpush1.msra.mxu0 0.0
    %3676 = vmatprep.subr.mxu0 0.0
    %3677 = vmatpush1.msra.mxu0 0.0
    %3678 = vmatprep.subr.mxu0 0.0
    %3679 = vmatpush1.msra.mxu0 0.0
    %3680 = vmatprep.subr.mxu0 0.0
    %3681 = vmatpush1.msra.mxu0 0.0
    %3682 = vmatprep.subr.mxu0 0.0
    %3683 = vmatpush1.msra.mxu0 0.0
    %3684 = vmatprep.subr.mxu0 0.0
    %3685 = vmatpush1.msra.mxu0 0.0
    %3686 = vmatprep.subr.mxu0 0.0
    %3687 = vmatpush1.msra.mxu0 0.0
    %3688 = vmatprep.mubr.f32.mxu0 0.0
    %3689 = vmatmul.mubr.f32.gmra.mrb[0].mxu0 %v3619
    %v3690 = vpop.f32.mrb[0].mxu0
    %v3691 = vadd.f32 %v3617, %v3690
    %v3692 = vpop.f32.mrb[0].mxu0
    %3693 = vmatprep.mubr.f32.mxu0 0.0
    %3694 = vmatmul.mubr.f32.gmra.mrb[0].mxu0 %v3622
    %v3695 = vpop.f32.mrb[0].mxu0
    %v3696 = vadd.f32 %v3617, %v3695
    %v3697 = vpop.f32.mrb[0].mxu0
    %3698 = vdwg.mxu0
    %v3699 = vadd.f32 %v3691, %v3491
    %v3700 = vadd.f32 %v3696, %v3492
    %v3701 = vsel %vm48, %v3699, 0.0
    %3702 = vadd.xlane.f32.xlu0 %v3701
    %v3703 = vpop.xlane.xlu0 %3702
    %v3704 = vsel %vm48, %v3700, 0.0
    %3705 = vadd.xlane.f32.xlu0 %v3704
    %v3706 = vpop.xlane.xlu0 %3705
    %v3707 = vmul.f32 %v3703, %v55
    %v3708 = vmul.f32 %v3706, %v55
    %v3709 = vsub.f32 %v3699, %v3707
    %v3710 = vsub.f32 %v3700, %v3708
    %v3711 = vmul.f32 %v3709, %v3709
    %v3712 = vmul.f32 %v3710, %v3710
    %v3713 = vsel %vm48, %v3711, 0.0
    %3714 = vadd.xlane.f32.xlu0 %v3713
    %v3715 = vpop.xlane.xlu0 %3714
    %v3716 = vsel %vm48, %v3712, 0.0
    %3717 = vadd.xlane.f32.xlu0 %v3716
    %v3718 = vpop.xlane.xlu0 %3717
    %v3719 = vmul.f32 %v3715, %v55
    %v3720 = vmul.f32 %v3718, %v55
    %v3721 = vadd.f32 %v3719, 1e-05
    %v3722 = vadd.f32 %v3720, 1e-05
    %v3723 = vrsqrt.pop %v3721
    %v3724 = vrsqrt.pop %v3722
    %v3725 = vmul.f32 %v3709, %v3723
    %v3726 = vmul.f32 %v3710, %v3724
    %v3727 = vlaneseq
    %v3728 = vshrl.u32 %v3727, 7
    %v3729 = vsub.s32 4, %v3728
    %v3730 = vrot.slane %v1920, %v3729
    %v3731 = vmul.f32 %v3725, %v3730
    %v3732 = vmul.f32 %v3726, %v3730
    %v3733 = vlaneseq
    %v3734 = vshrl.u32 %v3733, 7
    %v3735 = vsub.s32 5, %v3734
    %v3736 = vrot.slane %v1920, %v3735
    %v3737 = vadd.f32 %v3731, %v3736
    %v3738 = vadd.f32 %v3732, %v3736
    %v3739 = vld [vmem:[%s9] sm:$0xff]
    %v3740 = vld [vmem:[%s9 + $0x8] sm:$0xff]
    %v3741 = vld [vmem:[%s9 + $0x10] sm:$0xff]
    %v3742 = vld [vmem:[%s9 + $0x18] sm:$0xff]
    %v3743 = vlaneseq
    %v3744 = vshrl.u32 %v3743, 7
    %v3745 = vsub.s32 2, %v3744
    %v3746 = vrot.slane %v45, %v3745
    %v3749 = vrot.slane %v3738, 7
    %vm3750 = vcmask 1041409
    %v3751 = vsel %vm3750, %v3749, %v3737
    %v3752 = vsel %vm48, %v3751, 0
    %3754 = vmatprep.subr.mxu0 0.0
    %3755 = vmatpush1.msra.mxu0 %v3739
    %3756 = vmatprep.subr.mxu0 0.0
    %3757 = vmatpush1.msra.mxu0 %v3740
    %3758 = vmatprep.subr.mxu0 0.0
    %3759 = vmatpush1.msra.mxu0 %v3741
    %3760 = vmatprep.subr.mxu0 0.0
    %3761 = vmatpush1.msra.mxu0 %v3742
    %3762 = vmatprep.subr.mxu0 0.0
    %3763 = vmatpush1.msra.mxu0 0.0
    %3764 = vmatprep.subr.mxu0 0.0
    %3765 = vmatpush1.msra.mxu0 0.0
    %3766 = vmatprep.subr.mxu0 0.0
    %3767 = vmatpush1.msra.mxu0 0.0
    %3768 = vmatprep.subr.mxu0 0.0
    %3769 = vmatpush1.msra.mxu0 0.0
    %3770 = vmatprep.subr.mxu0 0.0
    %3771 = vmatpush1.msra.mxu0 0.0
    %3772 = vmatprep.subr.mxu0 0.0
    %3773 = vmatpush1.msra.mxu0 0.0
    %3774 = vmatprep.subr.mxu0 0.0
    %3775 = vmatpush1.msra.mxu0 0.0
    %3776 = vmatprep.subr.mxu0 0.0
    %3777 = vmatpush1.msra.mxu0 0.0
    %3778 = vmatprep.subr.mxu0 0.0
    %3779 = vmatpush1.msra.mxu0 0.0
    %3780 = vmatprep.subr.mxu0 0.0
    %3781 = vmatpush1.msra.mxu0 0.0
    %3782 = vmatprep.subr.mxu0 0.0
    %3783 = vmatpush1.msra.mxu0 0.0
    %3784 = vmatprep.subr.mxu0 0.0
    %3785 = vmatpush1.msra.mxu0 0.0
    %3786 = vmatprep.subr.mxu0 0.0
    %3787 = vmatpush1.msra.mxu0 0.0
    %3788 = vmatprep.subr.mxu0 0.0
    %3789 = vmatpush1.msra.mxu0 0.0
    %3790 = vmatprep.subr.mxu0 0.0
    %3791 = vmatpush1.msra.mxu0 0.0
    %3792 = vmatprep.subr.mxu0 0.0
    %3793 = vmatpush1.msra.mxu0 0.0
    %3794 = vmatprep.subr.mxu0 0.0
    %3795 = vmatpush1.msra.mxu0 0.0
    %3796 = vmatprep.subr.mxu0 0.0
    %3797 = vmatpush1.msra.mxu0 0.0
    %3798 = vmatprep.subr.mxu0 0.0
    %3799 = vmatpush1.msra.mxu0 0.0
    %3800 = vmatprep.subr.mxu0 0.0
    %3801 = vmatpush1.msra.mxu0 0.0
    %3802 = vmatprep.subr.mxu0 0.0
    %3803 = vmatpush1.msra.mxu0 0.0
    %3804 = vmatprep.subr.mxu0 0.0
    %3805 = vmatpush1.msra.mxu0 0.0
    %3806 = vmatprep.subr.mxu0 0.0
    %3807 = vmatpush1.msra.mxu0 0.0
    %3808 = vmatprep.subr.mxu0 0.0
    %3809 = vmatpush1.msra.mxu0 0.0
    %3810 = vmatprep.subr.mxu0 0.0
    %3811 = vmatpush1.msra.mxu0 0.0
    %3812 = vmatprep.subr.mxu0 0.0
    %3813 = vmatpush1.msra.mxu0 0.0
    %3814 = vmatprep.subr.mxu0 0.0
    %3815 = vmatpush1.msra.mxu0 0.0
    %3816 = vmatprep.subr.mxu0 0.0
    %3817 = vmatpush1.msra.mxu0 0.0
    %3818 = vmatprep.mubr.f32.mxu0 0.0
    %3819 = vmatmul.mubr.f32.gmra.mrb[0].mxu0 %v3752
    %v3820 = vpop.f32.mrb[0].mxu0
    %v3821 = vadd.f32 %v3746, %v3820
    %v3822 = vpop.f32.mrb[0].mxu0
    %3823 = vdwg.mxu0
    %v3824 = vtanh.pop %v3821
    %v3825 = vld [vmem:[%s10] sm:$0xff]
    %v3826 = vld [vmem:[%s10 + $0x8] sm:$0xff]
    %v3827 = vld [vmem:[%s10 + $0x10] sm:$0xff]
    %v3828 = vld [vmem:[%s10 + $0x18] sm:$0xff]
    %v3829 = vlaneseq
    %v3830 = vshrl.u32 %v3829, 7
    %v3831 = vsub.s32 3, %v3830
    %v3832 = vrot.slane %v45, %v3831
    %v3834 = vsel %vm48, %v3824, 0
    %3836 = vmatprep.subr.mxu0 0.0
    %3837 = vmatpush1.msra.mxu0 %v3825
    %3838 = vmatprep.subr.mxu0 0.0
    %3839 = vmatpush1.msra.mxu0 %v3826
    %3840 = vmatprep.subr.mxu0 0.0
    %3841 = vmatpush1.msra.mxu0 %v3827
    %3842 = vmatprep.subr.mxu0 0.0
    %3843 = vmatpush1.msra.mxu0 %v3828
    %3844 = vmatprep.subr.mxu0 0.0
    %3845 = vmatpush1.msra.mxu0 0.0
    %3846 = vmatprep.subr.mxu0 0.0
    %3847 = vmatpush1.msra.mxu0 0.0
    %3848 = vmatprep.subr.mxu0 0.0
    %3849 = vmatpush1.msra.mxu0 0.0
    %3850 = vmatprep.subr.mxu0 0.0
    %3851 = vmatpush1.msra.mxu0 0.0
    %3852 = vmatprep.subr.mxu0 0.0
    %3853 = vmatpush1.msra.mxu0 0.0
    %3854 = vmatprep.subr.mxu0 0.0
    %3855 = vmatpush1.msra.mxu0 0.0
    %3856 = vmatprep.subr.mxu0 0.0
    %3857 = vmatpush1.msra.mxu0 0.0
    %3858 = vmatprep.subr.mxu0 0.0
    %3859 = vmatpush1.msra.mxu0 0.0
    %3860 = vmatprep.subr.mxu0 0.0
    %3861 = vmatpush1.msra.mxu0 0.0
    %3862 = vmatprep.subr.mxu0 0.0
    %3863 = vmatpush1.msra.mxu0 0.0
    %3864 = vmatprep.subr.mxu0 0.0
    %3865 = vmatpush1.msra.mxu0 0.0
    %3866 = vmatprep.subr.mxu0 0.0
    %3867 = vmatpush1.msra.mxu0 0.0
    %3868 = vmatprep.subr.mxu0 0.0
    %3869 = vmatpush1.msra.mxu0 0.0
    %3870 = vmatprep.subr.mxu0 0.0
    %3871 = vmatpush1.msra.mxu0 0.0
    %3872 = vmatprep.subr.mxu0 0.0
    %3873 = vmatpush1.msra.mxu0 0.0
    %3874 = vmatprep.subr.mxu0 0.0
    %3875 = vmatpush1.msra.mxu0 0.0
    %3876 = vmatprep.subr.mxu0 0.0
    %3877 = vmatpush1.msra.mxu0 0.0
    %3878 = vmatprep.subr.mxu0 0.0
    %3879 = vmatpush1.msra.mxu0 0.0
    %3880 = vmatprep.subr.mxu0 0.0
    %3881 = vmatpush1.msra.mxu0 0.0
    %3882 = vmatprep.subr.mxu0 0.0
    %3883 = vmatpush1.msra.mxu0 0.0
    %3884 = vmatprep.subr.mxu0 0.0
    %3885 = vmatpush1.msra.mxu0 0.0
    %3886 = vmatprep.subr.mxu0 0.0
    %3887 = vmatpush1.msra.mxu0 0.0
    %3888 = vmatprep.subr.mxu0 0.0
    %3889 = vmatpush1.msra.mxu0 0.0
    %3890 = vmatprep.subr.mxu0 0.0
    %3891 = vmatpush1.msra.mxu0 0.0
    %3892 = vmatprep.subr.mxu0 0.0
    %3893 = vmatpush1.msra.mxu0 0.0
    %3894 = vmatprep.subr.mxu0 0.0
    %3895 = vmatpush1.msra.mxu0 0.0
    %3896 = vmatprep.subr.mxu0 0.0
    %3897 = vmatpush1.msra.mxu0 0.0
    %3898 = vmatprep.subr.mxu0 0.0
    %3899 = vmatpush1.msra.mxu0 0.0
    %3900 = vmatprep.mubr.f32.mxu0 0.0
    %3901 = vmatmul.mubr.f32.gmra.mrb[0].mxu0 %v3834
    %v3902 = vpop.f32.mrb[0].mxu0
    %v3903 = vadd.f32 %v3832, %v3902
    %v3904 = vpop.f32.mrb[0].mxu0
    %3905 = vdwg.mxu0
    %vm3906 = vcmask 254976
    %3907 = vst.msk [vmem:[#allocation4] sm:$0x3] %vm3906, %v3824
    %vm3908 = vcmask 9216
    %3909 = vst.msk [vmem:[#allocation2] sm:$0x3] %vm3908, %v3903
    // Predicated region
    $region50: #{base_model_forward.1} parent=1 // pred_check
      _
    $region51: #{base_model_forward.1} parent=1 // pred_check_branch
      %3911 = sbr.rel (0) target = $region53
    $region52: #{base_model_forward.1} parent=1 // pred_region
      %s3913 = ssub.s32 32, 32
      %3914 = vsyncadd [#allocation3], %s3913
      %s3916 = sshll.u32 [#allocation2], 4
      %s3917 = int_to_ptr.vmem [resolvable:$true] %s3916
      %3919 = dma.vmem_to_hbm [thread:$0]  %s3917, 32, %s12, [#allocation3]
    $region53: #{base_model_forward.1} parent=1 // pred_fallthru
      _
    // Predicated region
    $region54: #{base_model_forward.1} parent=1 // pred_check
      _
    $region55: #{base_model_forward.1} parent=1 // pred_check_branch
      %3921 = sbr.rel (0) target = $region57
    $region56: #{base_model_forward.1} parent=1 // pred_region
      %s3923 = ssub.s32 32, 32
      %3924 = vsyncadd [#allocation5], %s3923
      %s3926 = sshll.u32 [#allocation4], 4
      %s3927 = int_to_ptr.vmem [resolvable:$true] %s3926
      %3929 = dma.vmem_to_hbm [thread:$0]  %s3927, 32, %s13, [#allocation5]
    $region57: #{base_model_forward.1} parent=1 // pred_fallthru
      _
    // Predicated region
    $region58: #{base_model_forward.1} parent=1 // pred_check
      _
    $region59: #{base_model_forward.1} parent=1 // pred_check_branch
      %3931 = sbr.rel (0) target = $region61
    $region60: #{base_model_forward.1} parent=1 // pred_region
      %3932 = dma.done [#allocation3], 32
    $region61: #{base_model_forward.1} parent=1 // pred_fallthru
      _
    // Predicated region
    $region62: #{base_model_forward.1} parent=1 // pred_check
      _
    $region63: #{base_model_forward.1} parent=1 // pred_check_branch
      %3934 = sbr.rel (0) target = $region65
    $region64: #{base_model_forward.1} parent=1 // pred_region
      %3935 = dma.done [#allocation5], 32
    $region65: #{base_model_forward.1} parent=1 // pred_fallthru
      _
    %3936 = vsyncpa [#allocation3], 1
    %3937 = vsyncpa [#allocation5], 1

</llo_original>
